<compile_context>
chip_gen: v5e
topology: v5e:2x2
jax: 0.10.0
libtpu: 0.0.40
codegen_flags: <defaults>
</compile_context>

<pallas_src>
import functools

import jax
import jax.numpy as jnp
from jax import lax
from jax.experimental import pallas as pl
from jax.experimental.pallas import tpu as pltpu


# ----------------------------------------------------------------------------
# Fused model kernel (everything trace-time unrolled; T / dec_len tiny & static)
# ----------------------------------------------------------------------------
def _velocity_kernel(L, T, dec_len, Bp, H, O, *refs):
    it = iter(refs)
    x_ref = next(it)            # (T*Bp, D)   time-major, row = t*Bp + b
    wi0_ref = next(it)          # (D, 3H)     encoder layer-0 input weights
    bi0_ref = next(it)          # (1, 3H)     encoder layer-0 folded input bias
    w_enc_ref = next(it)        # (L*H, (2L-1)*3H)      fused encoder step weight
    enc_bi = [None] * L
    enc_bhn = [None] * L
    enc_bhn[0] = next(it)
    for l in range(1, L):
        enc_bi[l] = next(it)
        enc_bhn[l] = next(it)
    w_dec_ref = next(it)        # (L*H, (2L-1)*3H + O)  fused decoder step weight (+FC)
    dec_bi = [None] * L
    dec_bhn = [None] * L
    dec_bi[0] = next(it)
    dec_bhn[0] = next(it)
    for l in range(1, L):
        dec_bi[l] = next(it)
        dec_bhn[l] = next(it)
    fc_b_ref = next(it)         # (1, O)
    out_ref = next(it)          # (dec_len*Bp, O)
    gi_scr = next(it)           # (T*Bp, 3H) VMEM scratch for the hoisted projection

    f32 = jnp.float32
    H3 = 3 * H
    ncols_core = (2 * L - 1) * H3

    def run_stack(w_ref, n_steps, gi0_fn, bi_b, bhn_b, h_init, fc_bias=None):
        """Systolic pipeline over the L stacked layers: layer l runs one time step
        behind layer l-1.  Each combined step issues ONE fused matmul producing
        gh_0 | (gi_l, gh_l for l>=1) | (FC columns for the decoder)."""
        w = w_ref[...]                               # weight-stationary across the loop
        h = list(h_init)
        extra = 1 if fc_bias is not None else 0      # FC lags the last layer by 1 step
        for s in range(n_steps + L - 1 + extra):
            hcat = h[0] if L == 1 else jnp.concatenate(h, axis=-1)   # (Bp, L*H)
            G = jnp.dot(hcat, w, preferred_element_type=f32)
            # final Linear, folded into the fused matmul: uses h[L-1] captured before
            # this step's update, i.e. layer L-1's output at time s - L.
            if fc_bias is not None:
                t_fc = s - L
                if 0 <= t_fc < n_steps:
                    y = G[:, ncols_core:ncols_core + O] + fc_bias
                    out_ref[t_fc * Bp:(t_fc + 1) * Bp, :] = y.astype(out_ref.dtype)
            h_new = list(h)
            for l in range(L):
                t = s - l
                if not (0 <= t < n_steps):
                    continue
                if l == 0:
                    gi = gi0_fn(t)                   # biases already folded in
                    gh = G[:, 0:H3]
                else:
                    base = H3 + (l - 1) * 2 * H3
                    gi = G[:, base:base + H3] + bi_b[l]
                    gh = G[:, base + H3:base + 2 * H3]
                # fused r/z sigmoid: one EUP push instead of two
                rz = jax.nn.sigmoid(gi[:, :2 * H] + gh[:, :2 * H])
                r = rz[:, :H]
                z = rz[:, H:]
                # PyTorch GRU: n = tanh(W_in x + b_in + r*(W_hn h + b_hn))
                n = jnp.tanh(gi[:, 2 * H:] + r * (gh[:, 2 * H:] + bhn_b[l]))
                h_new[l] = n + z * (h[l] - n)        # == (1-z)*n + z*h
            h = h_new
        return h

    # ---- encoder (gru1), h0 = 0 --------------------------------------------
    # Layer-0 input projection hoisted off the serial chain (one batched matmul),
    # staged in VMEM so only a (Bp,3H) slice is loaded per recurrence step.
    gi_scr[...] = (jnp.dot(x_ref[...], wi0_ref[...], preferred_element_type=f32)
                   + bi0_ref[...])
    enc_bi_b = [None] + [jnp.broadcast_to(enc_bi[l][...], (Bp, H3)) for l in range(1, L)]
    enc_bhn_b = [jnp.broadcast_to(enc_bhn[l][...], (Bp, H)) for l in range(L)]
    h0 = jnp.zeros((Bp, H), f32)
    h_enc = run_stack(w_enc_ref, T,
                      lambda t: gi_scr[t * Bp:(t + 1) * Bp, :],
                      enc_bi_b, enc_bhn_b, [h0] * L)

    # ---- decoder (gru2) over zero inputs, h0 = encoder final hiddens --------
    dec_gi0_b = jnp.broadcast_to(dec_bi[0][...], (Bp, H3))   # zero input -> gi == bias
    dec_bi_b = [None] + [jnp.broadcast_to(dec_bi[l][...], (Bp, H3)) for l in range(1, L)]
    dec_bhn_b = [jnp.broadcast_to(dec_bhn[l][...], (Bp, H)) for l in range(L)]
    fc_b_b = jnp.broadcast_to(fc_b_ref[...], (Bp, O))
    run_stack(w_dec_ref, dec_len,
              lambda t: dec_gi0_b,
              dec_bi_b, dec_bhn_b, h_enc, fc_bias=fc_b_b)


# ----------------------------------------------------------------------------
# Parameter packing (PyTorch nn.GRU / nn.Linear layouts -> kernel layout)
# ----------------------------------------------------------------------------
def _init_raw_gru(key, input_dim, hidden_dim, num_layers):
    """Per layer: (w_ih (3H,Din), w_hh (3H,H), b_ih (3H,), b_hh (3H,)); uniform(-k,k)."""
    layers = []
    k = 1.0 / (hidden_dim ** 0.5)
    for l in range(num_layers):
        d_in = input_dim if l == 0 else hidden_dim
        key, k1, k2, k3, k4 = jax.random.split(key, 5)
        w_ih = jax.random.uniform(k1, (3 * hidden_dim, d_in), jnp.float32, -k, k)
        w_hh = jax.random.uniform(k2, (3 * hidden_dim, hidden_dim), jnp.float32, -k, k)
        b_ih = jax.random.uniform(k3, (3 * hidden_dim,), jnp.float32, -k, k)
        b_hh = jax.random.uniform(k4, (3 * hidden_dim,), jnp.float32, -k, k)
        layers.append((w_ih, w_hh, b_ih, b_hh))
    return layers, key


def _pack_gru(raw_layers, H):
    """Per layer -> (wi (Din,3H), wh (H,3H), bi_fold (1,3H), bhn (1,H)).
    bi_fold = [b_ir+b_hr | b_iz+b_hz | b_in]; only b_hn stays on the hidden side
    (it must sit inside r * (W_hn h + b_hn)).  Gate order r|z|n preserved."""
    packed = []
    for (w_ih, w_hh, b_ih, b_hh) in raw_layers:
        wi = jnp.transpose(w_ih)
        wh = jnp.transpose(w_hh)
        bi = jnp.concatenate([b_ih[:2 * H] + b_hh[:2 * H],
                              b_ih[2 * H:]]).reshape(1, 3 * H)
        bhn = b_hh[2 * H:].reshape(1, H)
        packed.append((wi, wh, bi, bhn))
    return packed


def _build_fused_step_weight(layers, H, fc_w=None):
    """Block weight for one pipelined combined step:
        [h_0 | ... | h_{L-1}] @ W  ->  gh_0 | (gi_1, gh_1) | ... | (FC columns).
    Row block l carries layer l's hidden; zero blocks keep numerics identical to
    the unfused matmuls."""
    L = len(layers)
    O = 0 if fc_w is None else fc_w.shape[1]
    ncols = (2 * L - 1) * 3 * H + O
    W = jnp.zeros((L * H, ncols), jnp.float32)
    W = W.at[0:H, 0:3 * H].set(layers[0][1])                              # wh_0
    for l in range(1, L):
        base = 3 * H + (l - 1) * 6 * H
        W = W.at[(l - 1) * H:l * H, base:base + 3 * H].set(layers[l][0])          # wi_l
        W = W.at[l * H:(l + 1) * H, base + 3 * H:base + 6 * H].set(layers[l][1])  # wh_l
    if fc_w is not None:
        W = W.at[(L - 1) * H:L * H, (2 * L - 1) * 3 * H:].set(fc_w)       # FC cols
    return W


def pack_params(gru1_raw, gru2_raw, fc_w, fc_b):
    """fc_w: (O, H) PyTorch layout; fc_b: (O,).  Builds fused step weights ONCE."""
    H = gru1_raw[0][1].shape[1]
    enc = _pack_gru(gru1_raw, H)
    dec = _pack_gru(gru2_raw, H)
    fc_w_t = jnp.transpose(fc_w)              # (H, O)
    O = fc_w_t.shape[1]
    return {
        "num_layers": len(enc), "hidden_dim": H, "output_dim": O,
        "wi0_enc": enc[0][0], "bi0_enc": enc[0][2],
        "w_enc": _build_fused_step_weight(enc, H, None),
        "enc_bi": [p[2] for p in enc], "enc_bhn": [p[3] for p in enc],
        "w_dec": _build_fused_step_weight(dec, H, fc_w_t),
        "dec_bi": [p[2] for p in dec], "dec_bhn": [p[3] for p in dec],
        "fc_b": fc_b.reshape(1, O),
    }


# ----------------------------------------------------------------------------
# Wrapper
# ----------------------------------------------------------------------------
def velocity_predictor_forward(x, P, *, dec_len=10):
    """x: (B, T, input_dim), batch_first like the PyTorch module."""
    L, H, O = P["num_layers"], P["hidden_dim"], P["output_dim"]
    B, T, D = x.shape
    Bp = ((B + 7) // 8) * 8                   # pad batch to the 8-sublane tile

    x_tbd = jnp.transpose(x, (1, 0, 2))       # time-major (T, B, D)
    if Bp != B:
        x_tbd = jnp.pad(x_tbd, ((0, 0), (0, Bp - B), (0, 0)))
    x_flat = x_tbd.reshape(T * Bp, D)         # row layout t*Bp + b

    flat = [x_flat, P["wi0_enc"], P["bi0_enc"], P["w_enc"], P["enc_bhn"][0]]
    for l in range(1, L):
        flat += [P["enc_bi"][l], P["enc_bhn"][l]]
    flat += [P["w_dec"], P["dec_bi"][0], P["dec_bhn"][0]]
    for l in range(1, L):
        flat += [P["dec_bi"][l], P["dec_bhn"][l]]
    flat += [P["fc_b"]]

    kernel = functools.partial(_velocity_kernel, L, T, dec_len, Bp, H, O)
    y_flat = pl.pallas_call(
        kernel,
        out_shape=jax.ShapeDtypeStruct((dec_len * Bp, O), jnp.float32),
        grid_spec=pltpu.PrefetchScalarGridSpec(
            num_scalar_prefetch=0,
            grid=(1,),                        # single invocation; everything in VMEM
            in_specs=[pl.BlockSpec(a.shape, lambda i: (0, 0)) for a in flat],
            out_specs=pl.BlockSpec((dec_len * Bp, O), lambda i: (0, 0)),
            scratch_shapes=[pltpu.VMEM((T * Bp, 3 * H), jnp.float32)],
        ),
        compiler_params=pltpu.CompilerParams(dimension_semantics=("arbitrary",)),
    )(*flat)

    y = y_flat.reshape(dec_len, Bp, O)[:, :B, :]
    return jnp.transpose(y, (1, 0, 2))        # (B, dec_len, O)


# ----------------------------------------------------------------------------
# Pure-JAX reference (PyTorch GRU semantics, raw params) for correctness check
# ----------------------------------------------------------------------------
def _gru_layer_ref(x_tbd, h0, layer):
    w_ih, w_hh, b_ih, b_hh = layer
    H = h0.shape[-1]

    def step(h, x_t):
        gi = x_t @ w_ih.T + b_ih
        gh = h @ w_hh.T + b_hh
        r = jax.nn.sigmoid(gi[:, :H] + gh[:, :H])
        z = jax.nn.sigmoid(gi[:, H:2 * H] + gh[:, H:2 * H])
        n = jnp.tanh(gi[:, 2 * H:] + r * gh[:, 2 * H:])
        h_new = (1.0 - z) * n + z * h
        return h_new, h_new

    _, ys = lax.scan(step, h0, x_tbd)
    return ys


def reference_forward(x, raw, hidden_dim, dec_len=10):
    B = x.shape[0]
    h = jnp.transpose(x, (1, 0, 2))
    h_n = []
    for layer in raw["gru1"]:
        h = _gru_layer_ref(h, jnp.zeros((B, hidden_dim), jnp.float32), layer)
        h_n.append(h[-1])
    out = jnp.zeros((dec_len, B, hidden_dim), jnp.float32)
    for i, layer in enumerate(raw["gru2"]):
        out = _gru_layer_ref(out, h_n[i], layer)
    out = jnp.transpose(out, (1, 0, 2))
    return out @ raw["fc_w"].T + raw["fc_b"]


# ----------------------------------------------------------------------------
if __name__ == "__main__":
    input_dim, hidden_dim, output_dim, num_layers = 16, 32, 4, 2
    B, T, dec_len = 2, 8, 10

    key = jax.random.PRNGKey(0)
    key, xkey = jax.random.split(key)

    gru1_raw, key = _init_raw_gru(key, input_dim, hidden_dim, num_layers)
    gru2_raw, key = _init_raw_gru(key, hidden_dim, hidden_dim, num_layers)
    k = 1.0 / (hidden_dim ** 0.5)
    key, k1, k2 = jax.random.split(key, 3)
    fc_w = jax.random.uniform(k1, (output_dim, hidden_dim), jnp.float32, -k, k)
    fc_b = jax.random.uniform(k2, (output_dim,), jnp.float32, -k, k)

    params = pack_params(gru1_raw, gru2_raw, fc_w, fc_b)
    x = jax.random.normal(xkey, (B, T, input_dim), jnp.float32)

    y = velocity_predictor_forward(x, params, dec_len=dec_len)
    y = jax.block_until_ready(y)
    assert y.shape == (B, dec_len, output_dim), y.shape

    raw = {"gru1": gru1_raw, "gru2": gru2_raw, "fc_w": fc_w, "fc_b": fc_b}
    y_ref = reference_forward(x, raw, hidden_dim, dec_len=dec_len)
    assert bool(jnp.allclose(y, y_ref, atol=2e-4, rtol=2e-4)), "mismatch vs reference"

    print("KERNEL_OK")
</pallas_src>

<mosaic_0001>
module attributes {stable_mosaic.version = 11 : i64} {
  func.func @_velocity_kernel(%arg0: i32, %arg1: memref<64x16xf32, #tpu.memory_space<vmem>>, %arg2: memref<16x96xf32, #tpu.memory_space<vmem>>, %arg3: memref<1x96xf32, #tpu.memory_space<vmem>>, %arg4: memref<64x288xf32, #tpu.memory_space<vmem>>, %arg5: memref<1x32xf32, #tpu.memory_space<vmem>>, %arg6: memref<1x96xf32, #tpu.memory_space<vmem>>, %arg7: memref<1x32xf32, #tpu.memory_space<vmem>>, %arg8: memref<64x292xf32, #tpu.memory_space<vmem>>, %arg9: memref<1x96xf32, #tpu.memory_space<vmem>>, %arg10: memref<1x32xf32, #tpu.memory_space<vmem>>, %arg11: memref<1x96xf32, #tpu.memory_space<vmem>>, %arg12: memref<1x32xf32, #tpu.memory_space<vmem>>, %arg13: memref<1x4xf32, #tpu.memory_space<vmem>>, %arg14: memref<80x4xf32, #tpu.memory_space<vmem>>, %arg15: memref<64x96xf32, #tpu.memory_space<vmem>>) attributes {dimension_semantics = [#tpu.dimension_semantics<arbitrary>], iteration_bounds = array<i64: 1>, scalar_prefetch = 0 : i64, scratch_operands = 1 : i64, tpu.core_type = #tpu.core_type<tc>, window_params = [{pipeline_mode = #tpu.pipeline_mode<synchronous>, transform_indices = @transform_0, window_bounds = array<i64: 64, 16>}, {pipeline_mode = #tpu.pipeline_mode<synchronous>, transform_indices = @transform_1, window_bounds = array<i64: 16, 96>}, {pipeline_mode = #tpu.pipeline_mode<synchronous>, transform_indices = @transform_2, window_bounds = array<i64: 1, 96>}, {pipeline_mode = #tpu.pipeline_mode<synchronous>, transform_indices = @transform_3, window_bounds = array<i64: 64, 288>}, {pipeline_mode = #tpu.pipeline_mode<synchronous>, transform_indices = @transform_4, window_bounds = array<i64: 1, 32>}, {pipeline_mode = #tpu.pipeline_mode<synchronous>, transform_indices = @transform_5, window_bounds = array<i64: 1, 96>}, {pipeline_mode = #tpu.pipeline_mode<synchronous>, transform_indices = @transform_6, window_bounds = array<i64: 1, 32>}, {pipeline_mode = #tpu.pipeline_mode<synchronous>, transform_indices = @transform_7, window_bounds = array<i64: 64, 292>}, {pipeline_mode = #tpu.pipeline_mode<synchronous>, transform_indices = @transform_8, window_bounds = array<i64: 1, 96>}, {pipeline_mode = #tpu.pipeline_mode<synchronous>, transform_indices = @transform_9, window_bounds = array<i64: 1, 32>}, {pipeline_mode = #tpu.pipeline_mode<synchronous>, transform_indices = @transform_10, window_bounds = array<i64: 1, 96>}, {pipeline_mode = #tpu.pipeline_mode<synchronous>, transform_indices = @transform_11, window_bounds = array<i64: 1, 32>}, {pipeline_mode = #tpu.pipeline_mode<synchronous>, transform_indices = @transform_12, window_bounds = array<i64: 1, 4>}, {pipeline_mode = #tpu.pipeline_mode<synchronous>, transform_indices = @transform_13, window_bounds = array<i64: 80, 4>}]} {
    %c0 = arith.constant 0 : index
    %c0_0 = arith.constant 0 : index
    %0 = vector.load %arg1[%c0, %c0_0] : memref<64x16xf32, #tpu.memory_space<vmem>>, vector<64x16xf32>
    %c0_1 = arith.constant 0 : index
    %c0_2 = arith.constant 0 : index
    %1 = vector.load %arg2[%c0_1, %c0_2] : memref<16x96xf32, #tpu.memory_space<vmem>>, vector<16x96xf32>
    %cst = arith.constant dense<0.000000e+00> : vector<64x96xf32>
    %2 = tpu.matmul %0, %1, %cst {dimension_numbers = #tpu.dot_dimension_numbers<[1], [0], [0], [1], [0, 0, 1, 1], [], []>} : vector<64x16xf32>, vector<16x96xf32>, vector<64x96xf32> -> vector<64x96xf32>
    %c0_3 = arith.constant 0 : index
    %c0_4 = arith.constant 0 : index
    %3 = vector.load %arg3[%c0_3, %c0_4] : memref<1x96xf32, #tpu.memory_space<vmem>>, vector<1x96xf32>
    %4 = vector.broadcast %3 : vector<1x96xf32> to vector<64x96xf32>
    %5 = arith.addf %2, %4 : vector<64x96xf32>
    %c0_5 = arith.constant 0 : index
    %c0_6 = arith.constant 0 : index
    %6 = vector.load %arg15[%c0_5, %c0_6] : memref<64x96xf32, #tpu.memory_space<vmem>>, vector<64x96xf32>
    tpu.vector_store %arg15[%c0_5, %c0_6], %5 {strides = array<i32>} : memref<64x96xf32, #tpu.memory_space<vmem>>, vector<64x96xf32>,
    %c0_7 = arith.constant 0 : index
    %c0_8 = arith.constant 0 : index
    %7 = vector.load %arg6[%c0_7, %c0_8] : memref<1x96xf32, #tpu.memory_space<vmem>>, vector<1x96xf32>
    %8 = vector.shape_cast %7 : vector<1x96xf32> to vector<1x96xf32>
    %9 = vector.broadcast %8 : vector<1x96xf32> to vector<8x96xf32>
    %c0_9 = arith.constant 0 : index
    %c0_10 = arith.constant 0 : index
    %10 = vector.load %arg5[%c0_9, %c0_10] : memref<1x32xf32, #tpu.memory_space<vmem>>, vector<1x32xf32>
    %11 = vector.shape_cast %10 : vector<1x32xf32> to vector<1x32xf32>
    %12 = vector.broadcast %11 : vector<1x32xf32> to vector<8x32xf32>
    %c0_11 = arith.constant 0 : index
    %c0_12 = arith.constant 0 : index
    %13 = vector.load %arg7[%c0_11, %c0_12] : memref<1x32xf32, #tpu.memory_space<vmem>>, vector<1x32xf32>
    %14 = vector.shape_cast %13 : vector<1x32xf32> to vector<1x32xf32>
    %15 = vector.broadcast %14 : vector<1x32xf32> to vector<8x32xf32>
    %cst_13 = arith.constant 0.000000e+00 : f32
    %16 = vector.broadcast %cst_13 : f32 to vector<8x32xf32>
    %c0_14 = arith.constant 0 : index
    %c0_15 = arith.constant 0 : index
    %17 = vector.load %arg4[%c0_14, %c0_15] : memref<64x288xf32, #tpu.memory_space<vmem>>, vector<64x288xf32>
    %18 = tpu.concatenate %16, %16 in 1 : vector<8x32xf32>, vector<8x32xf32> -> vector<8x64xf32>
    %cst_16 = arith.constant dense<0.000000e+00> : vector<8x288xf32>
    %19 = tpu.matmul %18, %17, %cst_16 {dimension_numbers = #tpu.dot_dimension_numbers<[1], [0], [0], [1], [0, 0, 1, 1], [], []>} : vector<8x64xf32>, vector<64x288xf32>, vector<8x288xf32> -> vector<8x288xf32>
    %c0_17 = arith.constant 0 : index
    %c0_18 = arith.constant 0 : index
    %20 = vector.load %arg15[%c0_17, %c0_18] : memref<64x96xf32, #tpu.memory_space<vmem>>, vector<8x96xf32>
    %21 = vector.extract_strided_slice %19 {offsets = [0, 0], sizes = [8, 96], strides = [1, 1]} : vector<8x288xf32> to vector<8x96xf32>
    %22 = vector.extract_strided_slice %20 {offsets = [0, 0], sizes = [8, 64], strides = [1, 1]} : vector<8x96xf32> to vector<8x64xf32>
    %23 = vector.extract_strided_slice %21 {offsets = [0, 0], sizes = [8, 64], strides = [1, 1]} : vector<8x96xf32> to vector<8x64xf32>
    %24 = arith.addf %22, %23 : vector<8x64xf32>
    %25 = arith.negf %24 : vector<8x64xf32>
    %26 = math.exp %25 : vector<8x64xf32>
    %cst_19 = arith.constant 1.000000e+00 : f32
    %27 = vector.broadcast %cst_19 : f32 to vector<8x64xf32>
    %28 = arith.addf %27, %26 : vector<8x64xf32>
    %29 = arith.divf %27, %28 : vector<8x64xf32>
    %30 = vector.extract_strided_slice %29 {offsets = [0, 0], sizes = [8, 32], strides = [1, 1]} : vector<8x64xf32> to vector<8x32xf32>
    %31 = vector.extract_strided_slice %29 {offsets = [0, 32], sizes = [8, 32], strides = [1, 1]} : vector<8x64xf32> to vector<8x32xf32>
    %32 = vector.extract_strided_slice %20 {offsets = [0, 64], sizes = [8, 32], strides = [1, 1]} : vector<8x96xf32> to vector<8x32xf32>
    %33 = vector.extract_strided_slice %21 {offsets = [0, 64], sizes = [8, 32], strides = [1, 1]} : vector<8x96xf32> to vector<8x32xf32>
    %34 = arith.addf %33, %12 : vector<8x32xf32>
    %35 = arith.mulf %30, %34 : vector<8x32xf32>
    %36 = arith.addf %32, %35 : vector<8x32xf32>
    %37 = math.tanh %36 : vector<8x32xf32>
    %38 = arith.subf %16, %37 : vector<8x32xf32>
    %39 = arith.mulf %31, %38 : vector<8x32xf32>
    %40 = arith.addf %37, %39 : vector<8x32xf32>
    %41 = tpu.concatenate %40, %16 in 1 : vector<8x32xf32>, vector<8x32xf32> -> vector<8x64xf32>
    %cst_20 = arith.constant dense<0.000000e+00> : vector<8x288xf32>
    %42 = tpu.matmul %41, %17, %cst_20 {dimension_numbers = #tpu.dot_dimension_numbers<[1], [0], [0], [1], [0, 0, 1, 1], [], []>} : vector<8x64xf32>, vector<64x288xf32>, vector<8x288xf32> -> vector<8x288xf32>
    %c8 = arith.constant 8 : index
    %c0_21 = arith.constant 0 : index
    %43 = vector.load %arg15[%c8, %c0_21] : memref<64x96xf32, #tpu.memory_space<vmem>>, vector<8x96xf32>
    %44 = vector.extract_strided_slice %42 {offsets = [0, 0], sizes = [8, 96], strides = [1, 1]} : vector<8x288xf32> to vector<8x96xf32>
    %45 = vector.extract_strided_slice %43 {offsets = [0, 0], sizes = [8, 64], strides = [1, 1]} : vector<8x96xf32> to vector<8x64xf32>
    %46 = vector.extract_strided_slice %44 {offsets = [0, 0], sizes = [8, 64], strides = [1, 1]} : vector<8x96xf32> to vector<8x64xf32>
    %47 = arith.addf %45, %46 : vector<8x64xf32>
    %48 = arith.negf %47 : vector<8x64xf32>
    %49 = math.exp %48 : vector<8x64xf32>
    %cst_22 = arith.constant 1.000000e+00 : f32
    %50 = vector.broadcast %cst_22 : f32 to vector<8x64xf32>
    %51 = arith.addf %50, %49 : vector<8x64xf32>
    %52 = arith.divf %50, %51 : vector<8x64xf32>
    %53 = vector.extract_strided_slice %52 {offsets = [0, 0], sizes = [8, 32], strides = [1, 1]} : vector<8x64xf32> to vector<8x32xf32>
    %54 = vector.extract_strided_slice %52 {offsets = [0, 32], sizes = [8, 32], strides = [1, 1]} : vector<8x64xf32> to vector<8x32xf32>
    %55 = vector.extract_strided_slice %43 {offsets = [0, 64], sizes = [8, 32], strides = [1, 1]} : vector<8x96xf32> to vector<8x32xf32>
    %56 = vector.extract_strided_slice %44 {offsets = [0, 64], sizes = [8, 32], strides = [1, 1]} : vector<8x96xf32> to vector<8x32xf32>
    %57 = arith.addf %56, %12 : vector<8x32xf32>
    %58 = arith.mulf %53, %57 : vector<8x32xf32>
    %59 = arith.addf %55, %58 : vector<8x32xf32>
    %60 = math.tanh %59 : vector<8x32xf32>
    %61 = arith.subf %40, %60 : vector<8x32xf32>
    %62 = arith.mulf %54, %61 : vector<8x32xf32>
    %63 = arith.addf %60, %62 : vector<8x32xf32>
    %64 = vector.extract_strided_slice %42 {offsets = [0, 96], sizes = [8, 96], strides = [1, 1]} : vector<8x288xf32> to vector<8x96xf32>
    %65 = arith.addf %64, %9 : vector<8x96xf32>
    %66 = vector.extract_strided_slice %42 {offsets = [0, 192], sizes = [8, 96], strides = [1, 1]} : vector<8x288xf32> to vector<8x96xf32>
    %67 = vector.extract_strided_slice %65 {offsets = [0, 0], sizes = [8, 64], strides = [1, 1]} : vector<8x96xf32> to vector<8x64xf32>
    %68 = vector.extract_strided_slice %66 {offsets = [0, 0], sizes = [8, 64], strides = [1, 1]} : vector<8x96xf32> to vector<8x64xf32>
    %69 = arith.addf %67, %68 : vector<8x64xf32>
    %70 = arith.negf %69 : vector<8x64xf32>
    %71 = math.exp %70 : vector<8x64xf32>
    %cst_23 = arith.constant 1.000000e+00 : f32
    %72 = vector.broadcast %cst_23 : f32 to vector<8x64xf32>
    %73 = arith.addf %72, %71 : vector<8x64xf32>
    %74 = arith.divf %72, %73 : vector<8x64xf32>
    %75 = vector.extract_strided_slice %74 {offsets = [0, 0], sizes = [8, 32], strides = [1, 1]} : vector<8x64xf32> to vector<8x32xf32>
    %76 = vector.extract_strided_slice %74 {offsets = [0, 32], sizes = [8, 32], strides = [1, 1]} : vector<8x64xf32> to vector<8x32xf32>
    %77 = vector.extract_strided_slice %65 {offsets = [0, 64], sizes = [8, 32], strides = [1, 1]} : vector<8x96xf32> to vector<8x32xf32>
    %78 = vector.extract_strided_slice %66 {offsets = [0, 64], sizes = [8, 32], strides = [1, 1]} : vector<8x96xf32> to vector<8x32xf32>
    %79 = arith.addf %78, %15 : vector<8x32xf32>
    %80 = arith.mulf %75, %79 : vector<8x32xf32>
    %81 = arith.addf %77, %80 : vector<8x32xf32>
    %82 = math.tanh %81 : vector<8x32xf32>
    %83 = arith.subf %16, %82 : vector<8x32xf32>
    %84 = arith.mulf %76, %83 : vector<8x32xf32>
    %85 = arith.addf %82, %84 : vector<8x32xf32>
    %86 = tpu.concatenate %63, %85 in 1 : vector<8x32xf32>, vector<8x32xf32> -> vector<8x64xf32>
    %cst_24 = arith.constant dense<0.000000e+00> : vector<8x288xf32>
    %87 = tpu.matmul %86, %17, %cst_24 {dimension_numbers = #tpu.dot_dimension_numbers<[1], [0], [0], [1], [0, 0, 1, 1], [], []>} : vector<8x64xf32>, vector<64x288xf32>, vector<8x288xf32> -> vector<8x288xf32>
    %c16 = arith.constant 16 : index
    %c0_25 = arith.constant 0 : index
    %88 = vector.load %arg15[%c16, %c0_25] : memref<64x96xf32, #tpu.memory_space<vmem>>, vector<8x96xf32>
    %89 = vector.extract_strided_slice %87 {offsets = [0, 0], sizes = [8, 96], strides = [1, 1]} : vector<8x288xf32> to vector<8x96xf32>
    %90 = vector.extract_strided_slice %88 {offsets = [0, 0], sizes = [8, 64], strides = [1, 1]} : vector<8x96xf32> to vector<8x64xf32>
    %91 = vector.extract_strided_slice %89 {offsets = [0, 0], sizes = [8, 64], strides = [1, 1]} : vector<8x96xf32> to vector<8x64xf32>
    %92 = arith.addf %90, %91 : vector<8x64xf32>
    %93 = arith.negf %92 : vector<8x64xf32>
    %94 = math.exp %93 : vector<8x64xf32>
    %cst_26 = arith.constant 1.000000e+00 : f32
    %95 = vector.broadcast %cst_26 : f32 to vector<8x64xf32>
    %96 = arith.addf %95, %94 : vector<8x64xf32>
    %97 = arith.divf %95, %96 : vector<8x64xf32>
    %98 = vector.extract_strided_slice %97 {offsets = [0, 0], sizes = [8, 32], strides = [1, 1]} : vector<8x64xf32> to vector<8x32xf32>
    %99 = vector.extract_strided_slice %97 {offsets = [0, 32], sizes = [8, 32], strides = [1, 1]} : vector<8x64xf32> to vector<8x32xf32>
    %100 = vector.extract_strided_slice %88 {offsets = [0, 64], sizes = [8, 32], strides = [1, 1]} : vector<8x96xf32> to vector<8x32xf32>
    %101 = vector.extract_strided_slice %89 {offsets = [0, 64], sizes = [8, 32], strides = [1, 1]} : vector<8x96xf32> to vector<8x32xf32>
    %102 = arith.addf %101, %12 : vector<8x32xf32>
    %103 = arith.mulf %98, %102 : vector<8x32xf32>
    %104 = arith.addf %100, %103 : vector<8x32xf32>
    %105 = math.tanh %104 : vector<8x32xf32>
    %106 = arith.subf %63, %105 : vector<8x32xf32>
    %107 = arith.mulf %99, %106 : vector<8x32xf32>
    %108 = arith.addf %105, %107 : vector<8x32xf32>
    %109 = vector.extract_strided_slice %87 {offsets = [0, 96], sizes = [8, 96], strides = [1, 1]} : vector<8x288xf32> to vector<8x96xf32>
    %110 = arith.addf %109, %9 : vector<8x96xf32>
    %111 = vector.extract_strided_slice %87 {offsets = [0, 192], sizes = [8, 96], strides = [1, 1]} : vector<8x288xf32> to vector<8x96xf32>
    %112 = vector.extract_strided_slice %110 {offsets = [0, 0], sizes = [8, 64], strides = [1, 1]} : vector<8x96xf32> to vector<8x64xf32>
    %113 = vector.extract_strided_slice %111 {offsets = [0, 0], sizes = [8, 64], strides = [1, 1]} : vector<8x96xf32> to vector<8x64xf32>
    %114 = arith.addf %112, %113 : vector<8x64xf32>
    %115 = arith.negf %114 : vector<8x64xf32>
    %116 = math.exp %115 : vector<8x64xf32>
    %cst_27 = arith.constant 1.000000e+00 : f32
    %117 = vector.broadcast %cst_27 : f32 to vector<8x64xf32>
    %118 = arith.addf %117, %116 : vector<8x64xf32>
    %119 = arith.divf %117, %118 : vector<8x64xf32>
    %120 = vector.extract_strided_slice %119 {offsets = [0, 0], sizes = [8, 32], strides = [1, 1]} : vector<8x64xf32> to vector<8x32xf32>
    %121 = vector.extract_strided_slice %119 {offsets = [0, 32], sizes = [8, 32], strides = [1, 1]} : vector<8x64xf32> to vector<8x32xf32>
    %122 = vector.extract_strided_slice %110 {offsets = [0, 64], sizes = [8, 32], strides = [1, 1]} : vector<8x96xf32> to vector<8x32xf32>
    %123 = vector.extract_strided_slice %111 {offsets = [0, 64], sizes = [8, 32], strides = [1, 1]} : vector<8x96xf32> to vector<8x32xf32>
    %124 = arith.addf %123, %15 : vector<8x32xf32>
    %125 = arith.mulf %120, %124 : vector<8x32xf32>
    %126 = arith.addf %122, %125 : vector<8x32xf32>
    %127 = math.tanh %126 : vector<8x32xf32>
    %128 = arith.subf %85, %127 : vector<8x32xf32>
    %129 = arith.mulf %121, %128 : vector<8x32xf32>
    %130 = arith.addf %127, %129 : vector<8x32xf32>
    %131 = tpu.concatenate %108, %130 in 1 : vector<8x32xf32>, vector<8x32xf32> -> vector<8x64xf32>
    %cst_28 = arith.constant dense<0.000000e+00> : vector<8x288xf32>
    %132 = tpu.matmul %131, %17, %cst_28 {dimension_numbers = #tpu.dot_dimension_numbers<[1], [0], [0], [1], [0, 0, 1, 1], [], []>} : vector<8x64xf32>, vector<64x288xf32>, vector<8x288xf32> -> vector<8x288xf32>
    %c24 = arith.constant 24 : index
    %c0_29 = arith.constant 0 : index
    %133 = vector.load %arg15[%c24, %c0_29] : memref<64x96xf32, #tpu.memory_space<vmem>>, vector<8x96xf32>
    %134 = vector.extract_strided_slice %132 {offsets = [0, 0], sizes = [8, 96], strides = [1, 1]} : vector<8x288xf32> to vector<8x96xf32>
    %135 = vector.extract_strided_slice %133 {offsets = [0, 0], sizes = [8, 64], strides = [1, 1]} : vector<8x96xf32> to vector<8x64xf32>
    %136 = vector.extract_strided_slice %134 {offsets = [0, 0], sizes = [8, 64], strides = [1, 1]} : vector<8x96xf32> to vector<8x64xf32>
    %137 = arith.addf %135, %136 : vector<8x64xf32>
    %138 = arith.negf %137 : vector<8x64xf32>
    %139 = math.exp %138 : vector<8x64xf32>
    %cst_30 = arith.constant 1.000000e+00 : f32
    %140 = vector.broadcast %cst_30 : f32 to vector<8x64xf32>
    %141 = arith.addf %140, %139 : vector<8x64xf32>
    %142 = arith.divf %140, %141 : vector<8x64xf32>
    %143 = vector.extract_strided_slice %142 {offsets = [0, 0], sizes = [8, 32], strides = [1, 1]} : vector<8x64xf32> to vector<8x32xf32>
    %144 = vector.extract_strided_slice %142 {offsets = [0, 32], sizes = [8, 32], strides = [1, 1]} : vector<8x64xf32> to vector<8x32xf32>
    %145 = vector.extract_strided_slice %133 {offsets = [0, 64], sizes = [8, 32], strides = [1, 1]} : vector<8x96xf32> to vector<8x32xf32>
    %146 = vector.extract_strided_slice %134 {offsets = [0, 64], sizes = [8, 32], strides = [1, 1]} : vector<8x96xf32> to vector<8x32xf32>
    %147 = arith.addf %146, %12 : vector<8x32xf32>
    %148 = arith.mulf %143, %147 : vector<8x32xf32>
    %149 = arith.addf %145, %148 : vector<8x32xf32>
    %150 = math.tanh %149 : vector<8x32xf32>
    %151 = arith.subf %108, %150 : vector<8x32xf32>
    %152 = arith.mulf %144, %151 : vector<8x32xf32>
    %153 = arith.addf %150, %152 : vector<8x32xf32>
    %154 = vector.extract_strided_slice %132 {offsets = [0, 96], sizes = [8, 96], strides = [1, 1]} : vector<8x288xf32> to vector<8x96xf32>
    %155 = arith.addf %154, %9 : vector<8x96xf32>
    %156 = vector.extract_strided_slice %132 {offsets = [0, 192], sizes = [8, 96], strides = [1, 1]} : vector<8x288xf32> to vector<8x96xf32>
    %157 = vector.extract_strided_slice %155 {offsets = [0, 0], sizes = [8, 64], strides = [1, 1]} : vector<8x96xf32> to vector<8x64xf32>
    %158 = vector.extract_strided_slice %156 {offsets = [0, 0], sizes = [8, 64], strides = [1, 1]} : vector<8x96xf32> to vector<8x64xf32>
    %159 = arith.addf %157, %158 : vector<8x64xf32>
    %160 = arith.negf %159 : vector<8x64xf32>
    %161 = math.exp %160 : vector<8x64xf32>
    %cst_31 = arith.constant 1.000000e+00 : f32
    %162 = vector.broadcast %cst_31 : f32 to vector<8x64xf32>
    %163 = arith.addf %162, %161 : vector<8x64xf32>
    %164 = arith.divf %162, %163 : vector<8x64xf32>
    %165 = vector.extract_strided_slice %164 {offsets = [0, 0], sizes = [8, 32], strides = [1, 1]} : vector<8x64xf32> to vector<8x32xf32>
    %166 = vector.extract_strided_slice %164 {offsets = [0, 32], sizes = [8, 32], strides = [1, 1]} : vector<8x64xf32> to vector<8x32xf32>
    %167 = vector.extract_strided_slice %155 {offsets = [0, 64], sizes = [8, 32], strides = [1, 1]} : vector<8x96xf32> to vector<8x32xf32>
    %168 = vector.extract_strided_slice %156 {offsets = [0, 64], sizes = [8, 32], strides = [1, 1]} : vector<8x96xf32> to vector<8x32xf32>
    %169 = arith.addf %168, %15 : vector<8x32xf32>
    %170 = arith.mulf %165, %169 : vector<8x32xf32>
    %171 = arith.addf %167, %170 : vector<8x32xf32>
    %172 = math.tanh %171 : vector<8x32xf32>
    %173 = arith.subf %130, %172 : vector<8x32xf32>
    %174 = arith.mulf %166, %173 : vector<8x32xf32>
    %175 = arith.addf %172, %174 : vector<8x32xf32>
    %176 = tpu.concatenate %153, %175 in 1 : vector<8x32xf32>, vector<8x32xf32> -> vector<8x64xf32>
    %cst_32 = arith.constant dense<0.000000e+00> : vector<8x288xf32>
    %177 = tpu.matmul %176, %17, %cst_32 {dimension_numbers = #tpu.dot_dimension_numbers<[1], [0], [0], [1], [0, 0, 1, 1], [], []>} : vector<8x64xf32>, vector<64x288xf32>, vector<8x288xf32> -> vector<8x288xf32>
    %c32 = arith.constant 32 : index
    %c0_33 = arith.constant 0 : index
    %178 = vector.load %arg15[%c32, %c0_33] : memref<64x96xf32, #tpu.memory_space<vmem>>, vector<8x96xf32>
    %179 = vector.extract_strided_slice %177 {offsets = [0, 0], sizes = [8, 96], strides = [1, 1]} : vector<8x288xf32> to vector<8x96xf32>
    %180 = vector.extract_strided_slice %178 {offsets = [0, 0], sizes = [8, 64], strides = [1, 1]} : vector<8x96xf32> to vector<8x64xf32>
    %181 = vector.extract_strided_slice %179 {offsets = [0, 0], sizes = [8, 64], strides = [1, 1]} : vector<8x96xf32> to vector<8x64xf32>
    %182 = arith.addf %180, %181 : vector<8x64xf32>
    %183 = arith.negf %182 : vector<8x64xf32>
    %184 = math.exp %183 : vector<8x64xf32>
    %cst_34 = arith.constant 1.000000e+00 : f32
    %185 = vector.broadcast %cst_34 : f32 to vector<8x64xf32>
    %186 = arith.addf %185, %184 : vector<8x64xf32>
    %187 = arith.divf %185, %186 : vector<8x64xf32>
    %188 = vector.extract_strided_slice %187 {offsets = [0, 0], sizes = [8, 32], strides = [1, 1]} : vector<8x64xf32> to vector<8x32xf32>
    %189 = vector.extract_strided_slice %187 {offsets = [0, 32], sizes = [8, 32], strides = [1, 1]} : vector<8x64xf32> to vector<8x32xf32>
    %190 = vector.extract_strided_slice %178 {offsets = [0, 64], sizes = [8, 32], strides = [1, 1]} : vector<8x96xf32> to vector<8x32xf32>
    %191 = vector.extract_strided_slice %179 {offsets = [0, 64], sizes = [8, 32], strides = [1, 1]} : vector<8x96xf32> to vector<8x32xf32>
    %192 = arith.addf %191, %12 : vector<8x32xf32>
    %193 = arith.mulf %188, %192 : vector<8x32xf32>
    %194 = arith.addf %190, %193 : vector<8x32xf32>
    %195 = math.tanh %194 : vector<8x32xf32>
    %196 = arith.subf %153, %195 : vector<8x32xf32>
    %197 = arith.mulf %189, %196 : vector<8x32xf32>
    %198 = arith.addf %195, %197 : vector<8x32xf32>
    %199 = vector.extract_strided_slice %177 {offsets = [0, 96], sizes = [8, 96], strides = [1, 1]} : vector<8x288xf32> to vector<8x96xf32>
    %200 = arith.addf %199, %9 : vector<8x96xf32>
    %201 = vector.extract_strided_slice %177 {offsets = [0, 192], sizes = [8, 96], strides = [1, 1]} : vector<8x288xf32> to vector<8x96xf32>
    %202 = vector.extract_strided_slice %200 {offsets = [0, 0], sizes = [8, 64], strides = [1, 1]} : vector<8x96xf32> to vector<8x64xf32>
    %203 = vector.extract_strided_slice %201 {offsets = [0, 0], sizes = [8, 64], strides = [1, 1]} : vector<8x96xf32> to vector<8x64xf32>
    %204 = arith.addf %202, %203 : vector<8x64xf32>
    %205 = arith.negf %204 : vector<8x64xf32>
    %206 = math.exp %205 : vector<8x64xf32>
    %cst_35 = arith.constant 1.000000e+00 : f32
    %207 = vector.broadcast %cst_35 : f32 to vector<8x64xf32>
    %208 = arith.addf %207, %206 : vector<8x64xf32>
    %209 = arith.divf %207, %208 : vector<8x64xf32>
    %210 = vector.extract_strided_slice %209 {offsets = [0, 0], sizes = [8, 32], strides = [1, 1]} : vector<8x64xf32> to vector<8x32xf32>
    %211 = vector.extract_strided_slice %209 {offsets = [0, 32], sizes = [8, 32], strides = [1, 1]} : vector<8x64xf32> to vector<8x32xf32>
    %212 = vector.extract_strided_slice %200 {offsets = [0, 64], sizes = [8, 32], strides = [1, 1]} : vector<8x96xf32> to vector<8x32xf32>
    %213 = vector.extract_strided_slice %201 {offsets = [0, 64], sizes = [8, 32], strides = [1, 1]} : vector<8x96xf32> to vector<8x32xf32>
    %214 = arith.addf %213, %15 : vector<8x32xf32>
    %215 = arith.mulf %210, %214 : vector<8x32xf32>
    %216 = arith.addf %212, %215 : vector<8x32xf32>
    %217 = math.tanh %216 : vector<8x32xf32>
    %218 = arith.subf %175, %217 : vector<8x32xf32>
    %219 = arith.mulf %211, %218 : vector<8x32xf32>
    %220 = arith.addf %217, %219 : vector<8x32xf32>
    %221 = tpu.concatenate %198, %220 in 1 : vector<8x32xf32>, vector<8x32xf32> -> vector<8x64xf32>
    %cst_36 = arith.constant dense<0.000000e+00> : vector<8x288xf32>
    %222 = tpu.matmul %221, %17, %cst_36 {dimension_numbers = #tpu.dot_dimension_numbers<[1], [0], [0], [1], [0, 0, 1, 1], [], []>} : vector<8x64xf32>, vector<64x288xf32>, vector<8x288xf32> -> vector<8x288xf32>
    %c40 = arith.constant 40 : index
    %c0_37 = arith.constant 0 : index
    %223 = vector.load %arg15[%c40, %c0_37] : memref<64x96xf32, #tpu.memory_space<vmem>>, vector<8x96xf32>
    %224 = vector.extract_strided_slice %222 {offsets = [0, 0], sizes = [8, 96], strides = [1, 1]} : vector<8x288xf32> to vector<8x96xf32>
    %225 = vector.extract_strided_slice %223 {offsets = [0, 0], sizes = [8, 64], strides = [1, 1]} : vector<8x96xf32> to vector<8x64xf32>
    %226 = vector.extract_strided_slice %224 {offsets = [0, 0], sizes = [8, 64], strides = [1, 1]} : vector<8x96xf32> to vector<8x64xf32>
    %227 = arith.addf %225, %226 : vector<8x64xf32>
    %228 = arith.negf %227 : vector<8x64xf32>
    %229 = math.exp %228 : vector<8x64xf32>
    %cst_38 = arith.constant 1.000000e+00 : f32
    %230 = vector.broadcast %cst_38 : f32 to vector<8x64xf32>
    %231 = arith.addf %230, %229 : vector<8x64xf32>
    %232 = arith.divf %230, %231 : vector<8x64xf32>
    %233 = vector.extract_strided_slice %232 {offsets = [0, 0], sizes = [8, 32], strides = [1, 1]} : vector<8x64xf32> to vector<8x32xf32>
    %234 = vector.extract_strided_slice %232 {offsets = [0, 32], sizes = [8, 32], strides = [1, 1]} : vector<8x64xf32> to vector<8x32xf32>
    %235 = vector.extract_strided_slice %223 {offsets = [0, 64], sizes = [8, 32], strides = [1, 1]} : vector<8x96xf32> to vector<8x32xf32>
    %236 = vector.extract_strided_slice %224 {offsets = [0, 64], sizes = [8, 32], strides = [1, 1]} : vector<8x96xf32> to vector<8x32xf32>
    %237 = arith.addf %236, %12 : vector<8x32xf32>
    %238 = arith.mulf %233, %237 : vector<8x32xf32>
    %239 = arith.addf %235, %238 : vector<8x32xf32>
    %240 = math.tanh %239 : vector<8x32xf32>
    %241 = arith.subf %198, %240 : vector<8x32xf32>
    %242 = arith.mulf %234, %241 : vector<8x32xf32>
    %243 = arith.addf %240, %242 : vector<8x32xf32>
    %244 = vector.extract_strided_slice %222 {offsets = [0, 96], sizes = [8, 96], strides = [1, 1]} : vector<8x288xf32> to vector<8x96xf32>
    %245 = arith.addf %244, %9 : vector<8x96xf32>
    %246 = vector.extract_strided_slice %222 {offsets = [0, 192], sizes = [8, 96], strides = [1, 1]} : vector<8x288xf32> to vector<8x96xf32>
    %247 = vector.extract_strided_slice %245 {offsets = [0, 0], sizes = [8, 64], strides = [1, 1]} : vector<8x96xf32> to vector<8x64xf32>
    %248 = vector.extract_strided_slice %246 {offsets = [0, 0], sizes = [8, 64], strides = [1, 1]} : vector<8x96xf32> to vector<8x64xf32>
    %249 = arith.addf %247, %248 : vector<8x64xf32>
    %250 = arith.negf %249 : vector<8x64xf32>
    %251 = math.exp %250 : vector<8x64xf32>
    %cst_39 = arith.constant 1.000000e+00 : f32
    %252 = vector.broadcast %cst_39 : f32 to vector<8x64xf32>
    %253 = arith.addf %252, %251 : vector<8x64xf32>
    %254 = arith.divf %252, %253 : vector<8x64xf32>
    %255 = vector.extract_strided_slice %254 {offsets = [0, 0], sizes = [8, 32], strides = [1, 1]} : vector<8x64xf32> to vector<8x32xf32>
    %256 = vector.extract_strided_slice %254 {offsets = [0, 32], sizes = [8, 32], strides = [1, 1]} : vector<8x64xf32> to vector<8x32xf32>
    %257 = vector.extract_strided_slice %245 {offsets = [0, 64], sizes = [8, 32], strides = [1, 1]} : vector<8x96xf32> to vector<8x32xf32>
    %258 = vector.extract_strided_slice %246 {offsets = [0, 64], sizes = [8, 32], strides = [1, 1]} : vector<8x96xf32> to vector<8x32xf32>
    %259 = arith.addf %258, %15 : vector<8x32xf32>
    %260 = arith.mulf %255, %259 : vector<8x32xf32>
    %261 = arith.addf %257, %260 : vector<8x32xf32>
    %262 = math.tanh %261 : vector<8x32xf32>
    %263 = arith.subf %220, %262 : vector<8x32xf32>
    %264 = arith.mulf %256, %263 : vector<8x32xf32>
    %265 = arith.addf %262, %264 : vector<8x32xf32>
    %266 = tpu.concatenate %243, %265 in 1 : vector<8x32xf32>, vector<8x32xf32> -> vector<8x64xf32>
    %cst_40 = arith.constant dense<0.000000e+00> : vector<8x288xf32>
    %267 = tpu.matmul %266, %17, %cst_40 {dimension_numbers = #tpu.dot_dimension_numbers<[1], [0], [0], [1], [0, 0, 1, 1], [], []>} : vector<8x64xf32>, vector<64x288xf32>, vector<8x288xf32> -> vector<8x288xf32>
    %c48 = arith.constant 48 : index
    %c0_41 = arith.constant 0 : index
    %268 = vector.load %arg15[%c48, %c0_41] : memref<64x96xf32, #tpu.memory_space<vmem>>, vector<8x96xf32>
    %269 = vector.extract_strided_slice %267 {offsets = [0, 0], sizes = [8, 96], strides = [1, 1]} : vector<8x288xf32> to vector<8x96xf32>
    %270 = vector.extract_strided_slice %268 {offsets = [0, 0], sizes = [8, 64], strides = [1, 1]} : vector<8x96xf32> to vector<8x64xf32>
    %271 = vector.extract_strided_slice %269 {offsets = [0, 0], sizes = [8, 64], strides = [1, 1]} : vector<8x96xf32> to vector<8x64xf32>
    %272 = arith.addf %270, %271 : vector<8x64xf32>
    %273 = arith.negf %272 : vector<8x64xf32>
    %274 = math.exp %273 : vector<8x64xf32>
    %cst_42 = arith.constant 1.000000e+00 : f32
    %275 = vector.broadcast %cst_42 : f32 to vector<8x64xf32>
    %276 = arith.addf %275, %274 : vector<8x64xf32>
    %277 = arith.divf %275, %276 : vector<8x64xf32>
    %278 = vector.extract_strided_slice %277 {offsets = [0, 0], sizes = [8, 32], strides = [1, 1]} : vector<8x64xf32> to vector<8x32xf32>
    %279 = vector.extract_strided_slice %277 {offsets = [0, 32], sizes = [8, 32], strides = [1, 1]} : vector<8x64xf32> to vector<8x32xf32>
    %280 = vector.extract_strided_slice %268 {offsets = [0, 64], sizes = [8, 32], strides = [1, 1]} : vector<8x96xf32> to vector<8x32xf32>
    %281 = vector.extract_strided_slice %269 {offsets = [0, 64], sizes = [8, 32], strides = [1, 1]} : vector<8x96xf32> to vector<8x32xf32>
    %282 = arith.addf %281, %12 : vector<8x32xf32>
    %283 = arith.mulf %278, %282 : vector<8x32xf32>
    %284 = arith.addf %280, %283 : vector<8x32xf32>
    %285 = math.tanh %284 : vector<8x32xf32>
    %286 = arith.subf %243, %285 : vector<8x32xf32>
    %287 = arith.mulf %279, %286 : vector<8x32xf32>
    %288 = arith.addf %285, %287 : vector<8x32xf32>
    %289 = vector.extract_strided_slice %267 {offsets = [0, 96], sizes = [8, 96], strides = [1, 1]} : vector<8x288xf32> to vector<8x96xf32>
    %290 = arith.addf %289, %9 : vector<8x96xf32>
    %291 = vector.extract_strided_slice %267 {offsets = [0, 192], sizes = [8, 96], strides = [1, 1]} : vector<8x288xf32> to vector<8x96xf32>
    %292 = vector.extract_strided_slice %290 {offsets = [0, 0], sizes = [8, 64], strides = [1, 1]} : vector<8x96xf32> to vector<8x64xf32>
    %293 = vector.extract_strided_slice %291 {offsets = [0, 0], sizes = [8, 64], strides = [1, 1]} : vector<8x96xf32> to vector<8x64xf32>
    %294 = arith.addf %292, %293 : vector<8x64xf32>
    %295 = arith.negf %294 : vector<8x64xf32>
    %296 = math.exp %295 : vector<8x64xf32>
    %cst_43 = arith.constant 1.000000e+00 : f32
    %297 = vector.broadcast %cst_43 : f32 to vector<8x64xf32>
    %298 = arith.addf %297, %296 : vector<8x64xf32>
    %299 = arith.divf %297, %298 : vector<8x64xf32>
    %300 = vector.extract_strided_slice %299 {offsets = [0, 0], sizes = [8, 32], strides = [1, 1]} : vector<8x64xf32> to vector<8x32xf32>
    %301 = vector.extract_strided_slice %299 {offsets = [0, 32], sizes = [8, 32], strides = [1, 1]} : vector<8x64xf32> to vector<8x32xf32>
    %302 = vector.extract_strided_slice %290 {offsets = [0, 64], sizes = [8, 32], strides = [1, 1]} : vector<8x96xf32> to vector<8x32xf32>
    %303 = vector.extract_strided_slice %291 {offsets = [0, 64], sizes = [8, 32], strides = [1, 1]} : vector<8x96xf32> to vector<8x32xf32>
    %304 = arith.addf %303, %15 : vector<8x32xf32>
    %305 = arith.mulf %300, %304 : vector<8x32xf32>
    %306 = arith.addf %302, %305 : vector<8x32xf32>
    %307 = math.tanh %306 : vector<8x32xf32>
    %308 = arith.subf %265, %307 : vector<8x32xf32>
    %309 = arith.mulf %301, %308 : vector<8x32xf32>
    %310 = arith.addf %307, %309 : vector<8x32xf32>
    %311 = tpu.concatenate %288, %310 in 1 : vector<8x32xf32>, vector<8x32xf32> -> vector<8x64xf32>
    %cst_44 = arith.constant dense<0.000000e+00> : vector<8x288xf32>
    %312 = tpu.matmul %311, %17, %cst_44 {dimension_numbers = #tpu.dot_dimension_numbers<[1], [0], [0], [1], [0, 0, 1, 1], [], []>} : vector<8x64xf32>, vector<64x288xf32>, vector<8x288xf32> -> vector<8x288xf32>
    %c56 = arith.constant 56 : index
    %c0_45 = arith.constant 0 : index
    %313 = vector.load %arg15[%c56, %c0_45] : memref<64x96xf32, #tpu.memory_space<vmem>>, vector<8x96xf32>
    %314 = vector.extract_strided_slice %312 {offsets = [0, 0], sizes = [8, 96], strides = [1, 1]} : vector<8x288xf32> to vector<8x96xf32>
    %315 = vector.extract_strided_slice %313 {offsets = [0, 0], sizes = [8, 64], strides = [1, 1]} : vector<8x96xf32> to vector<8x64xf32>
    %316 = vector.extract_strided_slice %314 {offsets = [0, 0], sizes = [8, 64], strides = [1, 1]} : vector<8x96xf32> to vector<8x64xf32>
    %317 = arith.addf %315, %316 : vector<8x64xf32>
    %318 = arith.negf %317 : vector<8x64xf32>
    %319 = math.exp %318 : vector<8x64xf32>
    %cst_46 = arith.constant 1.000000e+00 : f32
    %320 = vector.broadcast %cst_46 : f32 to vector<8x64xf32>
    %321 = arith.addf %320, %319 : vector<8x64xf32>
    %322 = arith.divf %320, %321 : vector<8x64xf32>
    %323 = vector.extract_strided_slice %322 {offsets = [0, 0], sizes = [8, 32], strides = [1, 1]} : vector<8x64xf32> to vector<8x32xf32>
    %324 = vector.extract_strided_slice %322 {offsets = [0, 32], sizes = [8, 32], strides = [1, 1]} : vector<8x64xf32> to vector<8x32xf32>
    %325 = vector.extract_strided_slice %313 {offsets = [0, 64], sizes = [8, 32], strides = [1, 1]} : vector<8x96xf32> to vector<8x32xf32>
    %326 = vector.extract_strided_slice %314 {offsets = [0, 64], sizes = [8, 32], strides = [1, 1]} : vector<8x96xf32> to vector<8x32xf32>
    %327 = arith.addf %326, %12 : vector<8x32xf32>
    %328 = arith.mulf %323, %327 : vector<8x32xf32>
    %329 = arith.addf %325, %328 : vector<8x32xf32>
    %330 = math.tanh %329 : vector<8x32xf32>
    %331 = arith.subf %288, %330 : vector<8x32xf32>
    %332 = arith.mulf %324, %331 : vector<8x32xf32>
    %333 = arith.addf %330, %332 : vector<8x32xf32>
    %334 = vector.extract_strided_slice %312 {offsets = [0, 96], sizes = [8, 96], strides = [1, 1]} : vector<8x288xf32> to vector<8x96xf32>
    %335 = arith.addf %334, %9 : vector<8x96xf32>
    %336 = vector.extract_strided_slice %312 {offsets = [0, 192], sizes = [8, 96], strides = [1, 1]} : vector<8x288xf32> to vector<8x96xf32>
    %337 = vector.extract_strided_slice %335 {offsets = [0, 0], sizes = [8, 64], strides = [1, 1]} : vector<8x96xf32> to vector<8x64xf32>
    %338 = vector.extract_strided_slice %336 {offsets = [0, 0], sizes = [8, 64], strides = [1, 1]} : vector<8x96xf32> to vector<8x64xf32>
    %339 = arith.addf %337, %338 : vector<8x64xf32>
    %340 = arith.negf %339 : vector<8x64xf32>
    %341 = math.exp %340 : vector<8x64xf32>
    %cst_47 = arith.constant 1.000000e+00 : f32
    %342 = vector.broadcast %cst_47 : f32 to vector<8x64xf32>
    %343 = arith.addf %342, %341 : vector<8x64xf32>
    %344 = arith.divf %342, %343 : vector<8x64xf32>
    %345 = vector.extract_strided_slice %344 {offsets = [0, 0], sizes = [8, 32], strides = [1, 1]} : vector<8x64xf32> to vector<8x32xf32>
    %346 = vector.extract_strided_slice %344 {offsets = [0, 32], sizes = [8, 32], strides = [1, 1]} : vector<8x64xf32> to vector<8x32xf32>
    %347 = vector.extract_strided_slice %335 {offsets = [0, 64], sizes = [8, 32], strides = [1, 1]} : vector<8x96xf32> to vector<8x32xf32>
    %348 = vector.extract_strided_slice %336 {offsets = [0, 64], sizes = [8, 32], strides = [1, 1]} : vector<8x96xf32> to vector<8x32xf32>
    %349 = arith.addf %348, %15 : vector<8x32xf32>
    %350 = arith.mulf %345, %349 : vector<8x32xf32>
    %351 = arith.addf %347, %350 : vector<8x32xf32>
    %352 = math.tanh %351 : vector<8x32xf32>
    %353 = arith.subf %310, %352 : vector<8x32xf32>
    %354 = arith.mulf %346, %353 : vector<8x32xf32>
    %355 = arith.addf %352, %354 : vector<8x32xf32>
    %356 = tpu.concatenate %333, %355 in 1 : vector<8x32xf32>, vector<8x32xf32> -> vector<8x64xf32>
    %cst_48 = arith.constant dense<0.000000e+00> : vector<8x288xf32>
    %357 = tpu.matmul %356, %17, %cst_48 {dimension_numbers = #tpu.dot_dimension_numbers<[1], [0], [0], [1], [0, 0, 1, 1], [], []>} : vector<8x64xf32>, vector<64x288xf32>, vector<8x288xf32> -> vector<8x288xf32>
    %358 = vector.extract_strided_slice %357 {offsets = [0, 96], sizes = [8, 96], strides = [1, 1]} : vector<8x288xf32> to vector<8x96xf32>
    %359 = arith.addf %358, %9 : vector<8x96xf32>
    %360 = vector.extract_strided_slice %357 {offsets = [0, 192], sizes = [8, 96], strides = [1, 1]} : vector<8x288xf32> to vector<8x96xf32>
    %361 = vector.extract_strided_slice %359 {offsets = [0, 0], sizes = [8, 64], strides = [1, 1]} : vector<8x96xf32> to vector<8x64xf32>
    %362 = vector.extract_strided_slice %360 {offsets = [0, 0], sizes = [8, 64], strides = [1, 1]} : vector<8x96xf32> to vector<8x64xf32>
    %363 = arith.addf %361, %362 : vector<8x64xf32>
    %364 = arith.negf %363 : vector<8x64xf32>
    %365 = math.exp %364 : vector<8x64xf32>
    %cst_49 = arith.constant 1.000000e+00 : f32
    %366 = vector.broadcast %cst_49 : f32 to vector<8x64xf32>
    %367 = arith.addf %366, %365 : vector<8x64xf32>
    %368 = arith.divf %366, %367 : vector<8x64xf32>
    %369 = vector.extract_strided_slice %368 {offsets = [0, 0], sizes = [8, 32], strides = [1, 1]} : vector<8x64xf32> to vector<8x32xf32>
    %370 = vector.extract_strided_slice %368 {offsets = [0, 32], sizes = [8, 32], strides = [1, 1]} : vector<8x64xf32> to vector<8x32xf32>
    %371 = vector.extract_strided_slice %359 {offsets = [0, 64], sizes = [8, 32], strides = [1, 1]} : vector<8x96xf32> to vector<8x32xf32>
    %372 = vector.extract_strided_slice %360 {offsets = [0, 64], sizes = [8, 32], strides = [1, 1]} : vector<8x96xf32> to vector<8x32xf32>
    %373 = arith.addf %372, %15 : vector<8x32xf32>
    %374 = arith.mulf %369, %373 : vector<8x32xf32>
    %375 = arith.addf %371, %374 : vector<8x32xf32>
    %376 = math.tanh %375 : vector<8x32xf32>
    %377 = arith.subf %355, %376 : vector<8x32xf32>
    %378 = arith.mulf %370, %377 : vector<8x32xf32>
    %379 = arith.addf %376, %378 : vector<8x32xf32>
    %c0_50 = arith.constant 0 : index
    %c0_51 = arith.constant 0 : index
    %380 = vector.load %arg9[%c0_50, %c0_51] : memref<1x96xf32, #tpu.memory_space<vmem>>, vector<1x96xf32>
    %381 = vector.shape_cast %380 : vector<1x96xf32> to vector<1x96xf32>
    %382 = vector.broadcast %381 : vector<1x96xf32> to vector<8x96xf32>
    %c0_52 = arith.constant 0 : index
    %c0_53 = arith.constant 0 : index
    %383 = vector.load %arg11[%c0_52, %c0_53] : memref<1x96xf32, #tpu.memory_space<vmem>>, vector<1x96xf32>
    %384 = vector.shape_cast %383 : vector<1x96xf32> to vector<1x96xf32>
    %385 = vector.broadcast %384 : vector<1x96xf32> to vector<8x96xf32>
    %c0_54 = arith.constant 0 : index
    %c0_55 = arith.constant 0 : index
    %386 = vector.load %arg10[%c0_54, %c0_55] : memref<1x32xf32, #tpu.memory_space<vmem>>, vector<1x32xf32>
    %387 = vector.shape_cast %386 : vector<1x32xf32> to vector<1x32xf32>
    %388 = vector.broadcast %387 : vector<1x32xf32> to vector<8x32xf32>
    %c0_56 = arith.constant 0 : index
    %c0_57 = arith.constant 0 : index
    %389 = vector.load %arg12[%c0_56, %c0_57] : memref<1x32xf32, #tpu.memory_space<vmem>>, vector<1x32xf32>
    %390 = vector.shape_cast %389 : vector<1x32xf32> to vector<1x32xf32>
    %391 = vector.broadcast %390 : vector<1x32xf32> to vector<8x32xf32>
    %c0_58 = arith.constant 0 : index
    %c0_59 = arith.constant 0 : index
    %392 = vector.load %arg13[%c0_58, %c0_59] : memref<1x4xf32, #tpu.memory_space<vmem>>, vector<1x4xf32>
    %393 = vector.shape_cast %392 : vector<1x4xf32> to vector<1x4xf32>
    %394 = vector.broadcast %393 : vector<1x4xf32> to vector<8x4xf32>
    %c0_60 = arith.constant 0 : index
    %c0_61 = arith.constant 0 : index
    %395 = vector.load %arg8[%c0_60, %c0_61] : memref<64x292xf32, #tpu.memory_space<vmem>>, vector<64x292xf32>
    %396 = tpu.concatenate %333, %379 in 1 : vector<8x32xf32>, vector<8x32xf32> -> vector<8x64xf32>
    %cst_62 = arith.constant dense<0.000000e+00> : vector<8x292xf32>
    %397 = tpu.matmul %396, %395, %cst_62 {dimension_numbers = #tpu.dot_dimension_numbers<[1], [0], [0], [1], [0, 0, 1, 1], [], []>} : vector<8x64xf32>, vector<64x292xf32>, vector<8x292xf32> -> vector<8x292xf32>
    %398 = vector.extract_strided_slice %397 {offsets = [0, 0], sizes = [8, 96], strides = [1, 1]} : vector<8x292xf32> to vector<8x96xf32>
    %399 = vector.extract_strided_slice %382 {offsets = [0, 0], sizes = [8, 64], strides = [1, 1]} : vector<8x96xf32> to vector<8x64xf32>
    %400 = vector.extract_strided_slice %398 {offsets = [0, 0], sizes = [8, 64], strides = [1, 1]} : vector<8x96xf32> to vector<8x64xf32>
    %401 = arith.addf %399, %400 : vector<8x64xf32>
    %402 = arith.negf %401 : vector<8x64xf32>
    %403 = math.exp %402 : vector<8x64xf32>
    %cst_63 = arith.constant 1.000000e+00 : f32
    %404 = vector.broadcast %cst_63 : f32 to vector<8x64xf32>
    %405 = arith.addf %404, %403 : vector<8x64xf32>
    %406 = arith.divf %404, %405 : vector<8x64xf32>
    %407 = vector.extract_strided_slice %406 {offsets = [0, 0], sizes = [8, 32], strides = [1, 1]} : vector<8x64xf32> to vector<8x32xf32>
    %408 = vector.extract_strided_slice %406 {offsets = [0, 32], sizes = [8, 32], strides = [1, 1]} : vector<8x64xf32> to vector<8x32xf32>
    %409 = vector.extract_strided_slice %382 {offsets = [0, 64], sizes = [8, 32], strides = [1, 1]} : vector<8x96xf32> to vector<8x32xf32>
    %410 = vector.extract_strided_slice %398 {offsets = [0, 64], sizes = [8, 32], strides = [1, 1]} : vector<8x96xf32> to vector<8x32xf32>
    %411 = arith.addf %410, %388 : vector<8x32xf32>
    %412 = arith.mulf %407, %411 : vector<8x32xf32>
    %413 = arith.addf %409, %412 : vector<8x32xf32>
    %414 = math.tanh %413 : vector<8x32xf32>
    %415 = arith.subf %333, %414 : vector<8x32xf32>
    %416 = arith.mulf %408, %415 : vector<8x32xf32>
    %417 = arith.addf %414, %416 : vector<8x32xf32>
    %418 = tpu.concatenate %417, %379 in 1 : vector<8x32xf32>, vector<8x32xf32> -> vector<8x64xf32>
    %cst_64 = arith.constant dense<0.000000e+00> : vector<8x292xf32>
    %419 = tpu.matmul %418, %395, %cst_64 {dimension_numbers = #tpu.dot_dimension_numbers<[1], [0], [0], [1], [0, 0, 1, 1], [], []>} : vector<8x64xf32>, vector<64x292xf32>, vector<8x292xf32> -> vector<8x292xf32>
    %420 = vector.extract_strided_slice %419 {offsets = [0, 0], sizes = [8, 96], strides = [1, 1]} : vector<8x292xf32> to vector<8x96xf32>
    %421 = vector.extract_strided_slice %382 {offsets = [0, 0], sizes = [8, 64], strides = [1, 1]} : vector<8x96xf32> to vector<8x64xf32>
    %422 = vector.extract_strided_slice %420 {offsets = [0, 0], sizes = [8, 64], strides = [1, 1]} : vector<8x96xf32> to vector<8x64xf32>
    %423 = arith.addf %421, %422 : vector<8x64xf32>
    %424 = arith.negf %423 : vector<8x64xf32>
    %425 = math.exp %424 : vector<8x64xf32>
    %cst_65 = arith.constant 1.000000e+00 : f32
    %426 = vector.broadcast %cst_65 : f32 to vector<8x64xf32>
    %427 = arith.addf %426, %425 : vector<8x64xf32>
    %428 = arith.divf %426, %427 : vector<8x64xf32>
    %429 = vector.extract_strided_slice %428 {offsets = [0, 0], sizes = [8, 32], strides = [1, 1]} : vector<8x64xf32> to vector<8x32xf32>
    %430 = vector.extract_strided_slice %428 {offsets = [0, 32], sizes = [8, 32], strides = [1, 1]} : vector<8x64xf32> to vector<8x32xf32>
    %431 = vector.extract_strided_slice %382 {offsets = [0, 64], sizes = [8, 32], strides = [1, 1]} : vector<8x96xf32> to vector<8x32xf32>
    %432 = vector.extract_strided_slice %420 {offsets = [0, 64], sizes = [8, 32], strides = [1, 1]} : vector<8x96xf32> to vector<8x32xf32>
    %433 = arith.addf %432, %388 : vector<8x32xf32>
    %434 = arith.mulf %429, %433 : vector<8x32xf32>
    %435 = arith.addf %431, %434 : vector<8x32xf32>
    %436 = math.tanh %435 : vector<8x32xf32>
    %437 = arith.subf %417, %436 : vector<8x32xf32>
    %438 = arith.mulf %430, %437 : vector<8x32xf32>
    %439 = arith.addf %436, %438 : vector<8x32xf32>
    %440 = vector.extract_strided_slice %419 {offsets = [0, 96], sizes = [8, 96], strides = [1, 1]} : vector<8x292xf32> to vector<8x96xf32>
    %441 = arith.addf %440, %385 : vector<8x96xf32>
    %442 = vector.extract_strided_slice %419 {offsets = [0, 192], sizes = [8, 96], strides = [1, 1]} : vector<8x292xf32> to vector<8x96xf32>
    %443 = vector.extract_strided_slice %441 {offsets = [0, 0], sizes = [8, 64], strides = [1, 1]} : vector<8x96xf32> to vector<8x64xf32>
    %444 = vector.extract_strided_slice %442 {offsets = [0, 0], sizes = [8, 64], strides = [1, 1]} : vector<8x96xf32> to vector<8x64xf32>
    %445 = arith.addf %443, %444 : vector<8x64xf32>
    %446 = arith.negf %445 : vector<8x64xf32>
    %447 = math.exp %446 : vector<8x64xf32>
    %cst_66 = arith.constant 1.000000e+00 : f32
    %448 = vector.broadcast %cst_66 : f32 to vector<8x64xf32>
    %449 = arith.addf %448, %447 : vector<8x64xf32>
    %450 = arith.divf %448, %449 : vector<8x64xf32>
    %451 = vector.extract_strided_slice %450 {offsets = [0, 0], sizes = [8, 32], strides = [1, 1]} : vector<8x64xf32> to vector<8x32xf32>
    %452 = vector.extract_strided_slice %450 {offsets = [0, 32], sizes = [8, 32], strides = [1, 1]} : vector<8x64xf32> to vector<8x32xf32>
    %453 = vector.extract_strided_slice %441 {offsets = [0, 64], sizes = [8, 32], strides = [1, 1]} : vector<8x96xf32> to vector<8x32xf32>
    %454 = vector.extract_strided_slice %442 {offsets = [0, 64], sizes = [8, 32], strides = [1, 1]} : vector<8x96xf32> to vector<8x32xf32>
    %455 = arith.addf %454, %391 : vector<8x32xf32>
    %456 = arith.mulf %451, %455 : vector<8x32xf32>
    %457 = arith.addf %453, %456 : vector<8x32xf32>
    %458 = math.tanh %457 : vector<8x32xf32>
    %459 = arith.subf %379, %458 : vector<8x32xf32>
    %460 = arith.mulf %452, %459 : vector<8x32xf32>
    %461 = arith.addf %458, %460 : vector<8x32xf32>
    %462 = tpu.concatenate %439, %461 in 1 : vector<8x32xf32>, vector<8x32xf32> -> vector<8x64xf32>
    %cst_67 = arith.constant dense<0.000000e+00> : vector<8x292xf32>
    %463 = tpu.matmul %462, %395, %cst_67 {dimension_numbers = #tpu.dot_dimension_numbers<[1], [0], [0], [1], [0, 0, 1, 1], [], []>} : vector<8x64xf32>, vector<64x292xf32>, vector<8x292xf32> -> vector<8x292xf32>
    %464 = vector.extract_strided_slice %463 {offsets = [0, 288], sizes = [8, 4], strides = [1, 1]} : vector<8x292xf32> to vector<8x4xf32>
    %465 = arith.addf %464, %394 : vector<8x4xf32>
    %c0_68 = arith.constant 0 : index
    %c0_69 = arith.constant 0 : index
    %466 = vector.load %arg14[%c0_68, %c0_69] : memref<80x4xf32, #tpu.memory_space<vmem>>, vector<8x4xf32>
    tpu.vector_store %arg14[%c0_68, %c0_69], %465 {strides = array<i32>} : memref<80x4xf32, #tpu.memory_space<vmem>>, vector<8x4xf32>,
    %467 = vector.extract_strided_slice %463 {offsets = [0, 0], sizes = [8, 96], strides = [1, 1]} : vector<8x292xf32> to vector<8x96xf32>
    %468 = vector.extract_strided_slice %382 {offsets = [0, 0], sizes = [8, 64], strides = [1, 1]} : vector<8x96xf32> to vector<8x64xf32>
    %469 = vector.extract_strided_slice %467 {offsets = [0, 0], sizes = [8, 64], strides = [1, 1]} : vector<8x96xf32> to vector<8x64xf32>
    %470 = arith.addf %468, %469 : vector<8x64xf32>
    %471 = arith.negf %470 : vector<8x64xf32>
    %472 = math.exp %471 : vector<8x64xf32>
    %cst_70 = arith.constant 1.000000e+00 : f32
    %473 = vector.broadcast %cst_70 : f32 to vector<8x64xf32>
    %474 = arith.addf %473, %472 : vector<8x64xf32>
    %475 = arith.divf %473, %474 : vector<8x64xf32>
    %476 = vector.extract_strided_slice %475 {offsets = [0, 0], sizes = [8, 32], strides = [1, 1]} : vector<8x64xf32> to vector<8x32xf32>
    %477 = vector.extract_strided_slice %475 {offsets = [0, 32], sizes = [8, 32], strides = [1, 1]} : vector<8x64xf32> to vector<8x32xf32>
    %478 = vector.extract_strided_slice %382 {offsets = [0, 64], sizes = [8, 32], strides = [1, 1]} : vector<8x96xf32> to vector<8x32xf32>
    %479 = vector.extract_strided_slice %467 {offsets = [0, 64], sizes = [8, 32], strides = [1, 1]} : vector<8x96xf32> to vector<8x32xf32>
    %480 = arith.addf %479, %388 : vector<8x32xf32>
    %481 = arith.mulf %476, %480 : vector<8x32xf32>
    %482 = arith.addf %478, %481 : vector<8x32xf32>
    %483 = math.tanh %482 : vector<8x32xf32>
    %484 = arith.subf %439, %483 : vector<8x32xf32>
    %485 = arith.mulf %477, %484 : vector<8x32xf32>
    %486 = arith.addf %483, %485 : vector<8x32xf32>
    %487 = vector.extract_strided_slice %463 {offsets = [0, 96], sizes = [8, 96], strides = [1, 1]} : vector<8x292xf32> to vector<8x96xf32>
    %488 = arith.addf %487, %385 : vector<8x96xf32>
    %489 = vector.extract_strided_slice %463 {offsets = [0, 192], sizes = [8, 96], strides = [1, 1]} : vector<8x292xf32> to vector<8x96xf32>
    %490 = vector.extract_strided_slice %488 {offsets = [0, 0], sizes = [8, 64], strides = [1, 1]} : vector<8x96xf32> to vector<8x64xf32>
    %491 = vector.extract_strided_slice %489 {offsets = [0, 0], sizes = [8, 64], strides = [1, 1]} : vector<8x96xf32> to vector<8x64xf32>
    %492 = arith.addf %490, %491 : vector<8x64xf32>
    %493 = arith.negf %492 : vector<8x64xf32>
    %494 = math.exp %493 : vector<8x64xf32>
    %cst_71 = arith.constant 1.000000e+00 : f32
    %495 = vector.broadcast %cst_71 : f32 to vector<8x64xf32>
    %496 = arith.addf %495, %494 : vector<8x64xf32>
    %497 = arith.divf %495, %496 : vector<8x64xf32>
    %498 = vector.extract_strided_slice %497 {offsets = [0, 0], sizes = [8, 32], strides = [1, 1]} : vector<8x64xf32> to vector<8x32xf32>
    %499 = vector.extract_strided_slice %497 {offsets = [0, 32], sizes = [8, 32], strides = [1, 1]} : vector<8x64xf32> to vector<8x32xf32>
    %500 = vector.extract_strided_slice %488 {offsets = [0, 64], sizes = [8, 32], strides = [1, 1]} : vector<8x96xf32> to vector<8x32xf32>
    %501 = vector.extract_strided_slice %489 {offsets = [0, 64], sizes = [8, 32], strides = [1, 1]} : vector<8x96xf32> to vector<8x32xf32>
    %502 = arith.addf %501, %391 : vector<8x32xf32>
    %503 = arith.mulf %498, %502 : vector<8x32xf32>
    %504 = arith.addf %500, %503 : vector<8x32xf32>
    %505 = math.tanh %504 : vector<8x32xf32>
    %506 = arith.subf %461, %505 : vector<8x32xf32>
    %507 = arith.mulf %499, %506 : vector<8x32xf32>
    %508 = arith.addf %505, %507 : vector<8x32xf32>
    %509 = tpu.concatenate %486, %508 in 1 : vector<8x32xf32>, vector<8x32xf32> -> vector<8x64xf32>
    %cst_72 = arith.constant dense<0.000000e+00> : vector<8x292xf32>
    %510 = tpu.matmul %509, %395, %cst_72 {dimension_numbers = #tpu.dot_dimension_numbers<[1], [0], [0], [1], [0, 0, 1, 1], [], []>} : vector<8x64xf32>, vector<64x292xf32>, vector<8x292xf32> -> vector<8x292xf32>
    %511 = vector.extract_strided_slice %510 {offsets = [0, 288], sizes = [8, 4], strides = [1, 1]} : vector<8x292xf32> to vector<8x4xf32>
    %512 = arith.addf %511, %394 : vector<8x4xf32>
    %c8_73 = arith.constant 8 : index
    %c0_74 = arith.constant 0 : index
    %513 = vector.load %arg14[%c8_73, %c0_74] : memref<80x4xf32, #tpu.memory_space<vmem>>, vector<8x4xf32>
    tpu.vector_store %arg14[%c8_73, %c0_74], %512 {strides = array<i32>} : memref<80x4xf32, #tpu.memory_space<vmem>>, vector<8x4xf32>,
    %514 = vector.extract_strided_slice %510 {offsets = [0, 0], sizes = [8, 96], strides = [1, 1]} : vector<8x292xf32> to vector<8x96xf32>
    %515 = vector.extract_strided_slice %382 {offsets = [0, 0], sizes = [8, 64], strides = [1, 1]} : vector<8x96xf32> to vector<8x64xf32>
    %516 = vector.extract_strided_slice %514 {offsets = [0, 0], sizes = [8, 64], strides = [1, 1]} : vector<8x96xf32> to vector<8x64xf32>
    %517 = arith.addf %515, %516 : vector<8x64xf32>
    %518 = arith.negf %517 : vector<8x64xf32>
    %519 = math.exp %518 : vector<8x64xf32>
    %cst_75 = arith.constant 1.000000e+00 : f32
    %520 = vector.broadcast %cst_75 : f32 to vector<8x64xf32>
    %521 = arith.addf %520, %519 : vector<8x64xf32>
    %522 = arith.divf %520, %521 : vector<8x64xf32>
    %523 = vector.extract_strided_slice %522 {offsets = [0, 0], sizes = [8, 32], strides = [1, 1]} : vector<8x64xf32> to vector<8x32xf32>
    %524 = vector.extract_strided_slice %522 {offsets = [0, 32], sizes = [8, 32], strides = [1, 1]} : vector<8x64xf32> to vector<8x32xf32>
    %525 = vector.extract_strided_slice %382 {offsets = [0, 64], sizes = [8, 32], strides = [1, 1]} : vector<8x96xf32> to vector<8x32xf32>
    %526 = vector.extract_strided_slice %514 {offsets = [0, 64], sizes = [8, 32], strides = [1, 1]} : vector<8x96xf32> to vector<8x32xf32>
    %527 = arith.addf %526, %388 : vector<8x32xf32>
    %528 = arith.mulf %523, %527 : vector<8x32xf32>
    %529 = arith.addf %525, %528 : vector<8x32xf32>
    %530 = math.tanh %529 : vector<8x32xf32>
    %531 = arith.subf %486, %530 : vector<8x32xf32>
    %532 = arith.mulf %524, %531 : vector<8x32xf32>
    %533 = arith.addf %530, %532 : vector<8x32xf32>
    %534 = vector.extract_strided_slice %510 {offsets = [0, 96], sizes = [8, 96], strides = [1, 1]} : vector<8x292xf32> to vector<8x96xf32>
    %535 = arith.addf %534, %385 : vector<8x96xf32>
    %536 = vector.extract_strided_slice %510 {offsets = [0, 192], sizes = [8, 96], strides = [1, 1]} : vector<8x292xf32> to vector<8x96xf32>
    %537 = vector.extract_strided_slice %535 {offsets = [0, 0], sizes = [8, 64], strides = [1, 1]} : vector<8x96xf32> to vector<8x64xf32>
    %538 = vector.extract_strided_slice %536 {offsets = [0, 0], sizes = [8, 64], strides = [1, 1]} : vector<8x96xf32> to vector<8x64xf32>
    %539 = arith.addf %537, %538 : vector<8x64xf32>
    %540 = arith.negf %539 : vector<8x64xf32>
    %541 = math.exp %540 : vector<8x64xf32>
    %cst_76 = arith.constant 1.000000e+00 : f32
    %542 = vector.broadcast %cst_76 : f32 to vector<8x64xf32>
    %543 = arith.addf %542, %541 : vector<8x64xf32>
    %544 = arith.divf %542, %543 : vector<8x64xf32>
    %545 = vector.extract_strided_slice %544 {offsets = [0, 0], sizes = [8, 32], strides = [1, 1]} : vector<8x64xf32> to vector<8x32xf32>
    %546 = vector.extract_strided_slice %544 {offsets = [0, 32], sizes = [8, 32], strides = [1, 1]} : vector<8x64xf32> to vector<8x32xf32>
    %547 = vector.extract_strided_slice %535 {offsets = [0, 64], sizes = [8, 32], strides = [1, 1]} : vector<8x96xf32> to vector<8x32xf32>
    %548 = vector.extract_strided_slice %536 {offsets = [0, 64], sizes = [8, 32], strides = [1, 1]} : vector<8x96xf32> to vector<8x32xf32>
    %549 = arith.addf %548, %391 : vector<8x32xf32>
    %550 = arith.mulf %545, %549 : vector<8x32xf32>
    %551 = arith.addf %547, %550 : vector<8x32xf32>
    %552 = math.tanh %551 : vector<8x32xf32>
    %553 = arith.subf %508, %552 : vector<8x32xf32>
    %554 = arith.mulf %546, %553 : vector<8x32xf32>
    %555 = arith.addf %552, %554 : vector<8x32xf32>
    %556 = tpu.concatenate %533, %555 in 1 : vector<8x32xf32>, vector<8x32xf32> -> vector<8x64xf32>
    %cst_77 = arith.constant dense<0.000000e+00> : vector<8x292xf32>
    %557 = tpu.matmul %556, %395, %cst_77 {dimension_numbers = #tpu.dot_dimension_numbers<[1], [0], [0], [1], [0, 0, 1, 1], [], []>} : vector<8x64xf32>, vector<64x292xf32>, vector<8x292xf32> -> vector<8x292xf32>
    %558 = vector.extract_strided_slice %557 {offsets = [0, 288], sizes = [8, 4], strides = [1, 1]} : vector<8x292xf32> to vector<8x4xf32>
    %559 = arith.addf %558, %394 : vector<8x4xf32>
    %c16_78 = arith.constant 16 : index
    %c0_79 = arith.constant 0 : index
    %560 = vector.load %arg14[%c16_78, %c0_79] : memref<80x4xf32, #tpu.memory_space<vmem>>, vector<8x4xf32>
    tpu.vector_store %arg14[%c16_78, %c0_79], %559 {strides = array<i32>} : memref<80x4xf32, #tpu.memory_space<vmem>>, vector<8x4xf32>,
    %561 = vector.extract_strided_slice %557 {offsets = [0, 0], sizes = [8, 96], strides = [1, 1]} : vector<8x292xf32> to vector<8x96xf32>
    %562 = vector.extract_strided_slice %382 {offsets = [0, 0], sizes = [8, 64], strides = [1, 1]} : vector<8x96xf32> to vector<8x64xf32>
    %563 = vector.extract_strided_slice %561 {offsets = [0, 0], sizes = [8, 64], strides = [1, 1]} : vector<8x96xf32> to vector<8x64xf32>
    %564 = arith.addf %562, %563 : vector<8x64xf32>
    %565 = arith.negf %564 : vector<8x64xf32>
    %566 = math.exp %565 : vector<8x64xf32>
    %cst_80 = arith.constant 1.000000e+00 : f32
    %567 = vector.broadcast %cst_80 : f32 to vector<8x64xf32>
    %568 = arith.addf %567, %566 : vector<8x64xf32>
    %569 = arith.divf %567, %568 : vector<8x64xf32>
    %570 = vector.extract_strided_slice %569 {offsets = [0, 0], sizes = [8, 32], strides = [1, 1]} : vector<8x64xf32> to vector<8x32xf32>
    %571 = vector.extract_strided_slice %569 {offsets = [0, 32], sizes = [8, 32], strides = [1, 1]} : vector<8x64xf32> to vector<8x32xf32>
    %572 = vector.extract_strided_slice %382 {offsets = [0, 64], sizes = [8, 32], strides = [1, 1]} : vector<8x96xf32> to vector<8x32xf32>
    %573 = vector.extract_strided_slice %561 {offsets = [0, 64], sizes = [8, 32], strides = [1, 1]} : vector<8x96xf32> to vector<8x32xf32>
    %574 = arith.addf %573, %388 : vector<8x32xf32>
    %575 = arith.mulf %570, %574 : vector<8x32xf32>
    %576 = arith.addf %572, %575 : vector<8x32xf32>
    %577 = math.tanh %576 : vector<8x32xf32>
    %578 = arith.subf %533, %577 : vector<8x32xf32>
    %579 = arith.mulf %571, %578 : vector<8x32xf32>
    %580 = arith.addf %577, %579 : vector<8x32xf32>
    %581 = vector.extract_strided_slice %557 {offsets = [0, 96], sizes = [8, 96], strides = [1, 1]} : vector<8x292xf32> to vector<8x96xf32>
    %582 = arith.addf %581, %385 : vector<8x96xf32>
    %583 = vector.extract_strided_slice %557 {offsets = [0, 192], sizes = [8, 96], strides = [1, 1]} : vector<8x292xf32> to vector<8x96xf32>
    %584 = vector.extract_strided_slice %582 {offsets = [0, 0], sizes = [8, 64], strides = [1, 1]} : vector<8x96xf32> to vector<8x64xf32>
    %585 = vector.extract_strided_slice %583 {offsets = [0, 0], sizes = [8, 64], strides = [1, 1]} : vector<8x96xf32> to vector<8x64xf32>
    %586 = arith.addf %584, %585 : vector<8x64xf32>
    %587 = arith.negf %586 : vector<8x64xf32>
    %588 = math.exp %587 : vector<8x64xf32>
    %cst_81 = arith.constant 1.000000e+00 : f32
    %589 = vector.broadcast %cst_81 : f32 to vector<8x64xf32>
    %590 = arith.addf %589, %588 : vector<8x64xf32>
    %591 = arith.divf %589, %590 : vector<8x64xf32>
    %592 = vector.extract_strided_slice %591 {offsets = [0, 0], sizes = [8, 32], strides = [1, 1]} : vector<8x64xf32> to vector<8x32xf32>
    %593 = vector.extract_strided_slice %591 {offsets = [0, 32], sizes = [8, 32], strides = [1, 1]} : vector<8x64xf32> to vector<8x32xf32>
    %594 = vector.extract_strided_slice %582 {offsets = [0, 64], sizes = [8, 32], strides = [1, 1]} : vector<8x96xf32> to vector<8x32xf32>
    %595 = vector.extract_strided_slice %583 {offsets = [0, 64], sizes = [8, 32], strides = [1, 1]} : vector<8x96xf32> to vector<8x32xf32>
    %596 = arith.addf %595, %391 : vector<8x32xf32>
    %597 = arith.mulf %592, %596 : vector<8x32xf32>
    %598 = arith.addf %594, %597 : vector<8x32xf32>
    %599 = math.tanh %598 : vector<8x32xf32>
    %600 = arith.subf %555, %599 : vector<8x32xf32>
    %601 = arith.mulf %593, %600 : vector<8x32xf32>
    %602 = arith.addf %599, %601 : vector<8x32xf32>
    %603 = tpu.concatenate %580, %602 in 1 : vector<8x32xf32>, vector<8x32xf32> -> vector<8x64xf32>
    %cst_82 = arith.constant dense<0.000000e+00> : vector<8x292xf32>
    %604 = tpu.matmul %603, %395, %cst_82 {dimension_numbers = #tpu.dot_dimension_numbers<[1], [0], [0], [1], [0, 0, 1, 1], [], []>} : vector<8x64xf32>, vector<64x292xf32>, vector<8x292xf32> -> vector<8x292xf32>
    %605 = vector.extract_strided_slice %604 {offsets = [0, 288], sizes = [8, 4], strides = [1, 1]} : vector<8x292xf32> to vector<8x4xf32>
    %606 = arith.addf %605, %394 : vector<8x4xf32>
    %c24_83 = arith.constant 24 : index
    %c0_84 = arith.constant 0 : index
    %607 = vector.load %arg14[%c24_83, %c0_84] : memref<80x4xf32, #tpu.memory_space<vmem>>, vector<8x4xf32>
    tpu.vector_store %arg14[%c24_83, %c0_84], %606 {strides = array<i32>} : memref<80x4xf32, #tpu.memory_space<vmem>>, vector<8x4xf32>,
    %608 = vector.extract_strided_slice %604 {offsets = [0, 0], sizes = [8, 96], strides = [1, 1]} : vector<8x292xf32> to vector<8x96xf32>
    %609 = vector.extract_strided_slice %382 {offsets = [0, 0], sizes = [8, 64], strides = [1, 1]} : vector<8x96xf32> to vector<8x64xf32>
    %610 = vector.extract_strided_slice %608 {offsets = [0, 0], sizes = [8, 64], strides = [1, 1]} : vector<8x96xf32> to vector<8x64xf32>
    %611 = arith.addf %609, %610 : vector<8x64xf32>
    %612 = arith.negf %611 : vector<8x64xf32>
    %613 = math.exp %612 : vector<8x64xf32>
    %cst_85 = arith.constant 1.000000e+00 : f32
    %614 = vector.broadcast %cst_85 : f32 to vector<8x64xf32>
    %615 = arith.addf %614, %613 : vector<8x64xf32>
    %616 = arith.divf %614, %615 : vector<8x64xf32>
    %617 = vector.extract_strided_slice %616 {offsets = [0, 0], sizes = [8, 32], strides = [1, 1]} : vector<8x64xf32> to vector<8x32xf32>
    %618 = vector.extract_strided_slice %616 {offsets = [0, 32], sizes = [8, 32], strides = [1, 1]} : vector<8x64xf32> to vector<8x32xf32>
    %619 = vector.extract_strided_slice %382 {offsets = [0, 64], sizes = [8, 32], strides = [1, 1]} : vector<8x96xf32> to vector<8x32xf32>
    %620 = vector.extract_strided_slice %608 {offsets = [0, 64], sizes = [8, 32], strides = [1, 1]} : vector<8x96xf32> to vector<8x32xf32>
    %621 = arith.addf %620, %388 : vector<8x32xf32>
    %622 = arith.mulf %617, %621 : vector<8x32xf32>
    %623 = arith.addf %619, %622 : vector<8x32xf32>
    %624 = math.tanh %623 : vector<8x32xf32>
    %625 = arith.subf %580, %624 : vector<8x32xf32>
    %626 = arith.mulf %618, %625 : vector<8x32xf32>
    %627 = arith.addf %624, %626 : vector<8x32xf32>
    %628 = vector.extract_strided_slice %604 {offsets = [0, 96], sizes = [8, 96], strides = [1, 1]} : vector<8x292xf32> to vector<8x96xf32>
    %629 = arith.addf %628, %385 : vector<8x96xf32>
    %630 = vector.extract_strided_slice %604 {offsets = [0, 192], sizes = [8, 96], strides = [1, 1]} : vector<8x292xf32> to vector<8x96xf32>
    %631 = vector.extract_strided_slice %629 {offsets = [0, 0], sizes = [8, 64], strides = [1, 1]} : vector<8x96xf32> to vector<8x64xf32>
    %632 = vector.extract_strided_slice %630 {offsets = [0, 0], sizes = [8, 64], strides = [1, 1]} : vector<8x96xf32> to vector<8x64xf32>
    %633 = arith.addf %631, %632 : vector<8x64xf32>
    %634 = arith.negf %633 : vector<8x64xf32>
    %635 = math.exp %634 : vector<8x64xf32>
    %cst_86 = arith.constant 1.000000e+00 : f32
    %636 = vector.broadcast %cst_86 : f32 to vector<8x64xf32>
    %637 = arith.addf %636, %635 : vector<8x64xf32>
    %638 = arith.divf %636, %637 : vector<8x64xf32>
    %639 = vector.extract_strided_slice %638 {offsets = [0, 0], sizes = [8, 32], strides = [1, 1]} : vector<8x64xf32> to vector<8x32xf32>
    %640 = vector.extract_strided_slice %638 {offsets = [0, 32], sizes = [8, 32], strides = [1, 1]} : vector<8x64xf32> to vector<8x32xf32>
    %641 = vector.extract_strided_slice %629 {offsets = [0, 64], sizes = [8, 32], strides = [1, 1]} : vector<8x96xf32> to vector<8x32xf32>
    %642 = vector.extract_strided_slice %630 {offsets = [0, 64], sizes = [8, 32], strides = [1, 1]} : vector<8x96xf32> to vector<8x32xf32>
    %643 = arith.addf %642, %391 : vector<8x32xf32>
    %644 = arith.mulf %639, %643 : vector<8x32xf32>
    %645 = arith.addf %641, %644 : vector<8x32xf32>
    %646 = math.tanh %645 : vector<8x32xf32>
    %647 = arith.subf %602, %646 : vector<8x32xf32>
    %648 = arith.mulf %640, %647 : vector<8x32xf32>
    %649 = arith.addf %646, %648 : vector<8x32xf32>
    %650 = tpu.concatenate %627, %649 in 1 : vector<8x32xf32>, vector<8x32xf32> -> vector<8x64xf32>
    %cst_87 = arith.constant dense<0.000000e+00> : vector<8x292xf32>
    %651 = tpu.matmul %650, %395, %cst_87 {dimension_numbers = #tpu.dot_dimension_numbers<[1], [0], [0], [1], [0, 0, 1, 1], [], []>} : vector<8x64xf32>, vector<64x292xf32>, vector<8x292xf32> -> vector<8x292xf32>
    %652 = vector.extract_strided_slice %651 {offsets = [0, 288], sizes = [8, 4], strides = [1, 1]} : vector<8x292xf32> to vector<8x4xf32>
    %653 = arith.addf %652, %394 : vector<8x4xf32>
    %c32_88 = arith.constant 32 : index
    %c0_89 = arith.constant 0 : index
    %654 = vector.load %arg14[%c32_88, %c0_89] : memref<80x4xf32, #tpu.memory_space<vmem>>, vector<8x4xf32>
    tpu.vector_store %arg14[%c32_88, %c0_89], %653 {strides = array<i32>} : memref<80x4xf32, #tpu.memory_space<vmem>>, vector<8x4xf32>,
    %655 = vector.extract_strided_slice %651 {offsets = [0, 0], sizes = [8, 96], strides = [1, 1]} : vector<8x292xf32> to vector<8x96xf32>
    %656 = vector.extract_strided_slice %382 {offsets = [0, 0], sizes = [8, 64], strides = [1, 1]} : vector<8x96xf32> to vector<8x64xf32>
    %657 = vector.extract_strided_slice %655 {offsets = [0, 0], sizes = [8, 64], strides = [1, 1]} : vector<8x96xf32> to vector<8x64xf32>
    %658 = arith.addf %656, %657 : vector<8x64xf32>
    %659 = arith.negf %658 : vector<8x64xf32>
    %660 = math.exp %659 : vector<8x64xf32>
    %cst_90 = arith.constant 1.000000e+00 : f32
    %661 = vector.broadcast %cst_90 : f32 to vector<8x64xf32>
    %662 = arith.addf %661, %660 : vector<8x64xf32>
    %663 = arith.divf %661, %662 : vector<8x64xf32>
    %664 = vector.extract_strided_slice %663 {offsets = [0, 0], sizes = [8, 32], strides = [1, 1]} : vector<8x64xf32> to vector<8x32xf32>
    %665 = vector.extract_strided_slice %663 {offsets = [0, 32], sizes = [8, 32], strides = [1, 1]} : vector<8x64xf32> to vector<8x32xf32>
    %666 = vector.extract_strided_slice %382 {offsets = [0, 64], sizes = [8, 32], strides = [1, 1]} : vector<8x96xf32> to vector<8x32xf32>
    %667 = vector.extract_strided_slice %655 {offsets = [0, 64], sizes = [8, 32], strides = [1, 1]} : vector<8x96xf32> to vector<8x32xf32>
    %668 = arith.addf %667, %388 : vector<8x32xf32>
    %669 = arith.mulf %664, %668 : vector<8x32xf32>
    %670 = arith.addf %666, %669 : vector<8x32xf32>
    %671 = math.tanh %670 : vector<8x32xf32>
    %672 = arith.subf %627, %671 : vector<8x32xf32>
    %673 = arith.mulf %665, %672 : vector<8x32xf32>
    %674 = arith.addf %671, %673 : vector<8x32xf32>
    %675 = vector.extract_strided_slice %651 {offsets = [0, 96], sizes = [8, 96], strides = [1, 1]} : vector<8x292xf32> to vector<8x96xf32>
    %676 = arith.addf %675, %385 : vector<8x96xf32>
    %677 = vector.extract_strided_slice %651 {offsets = [0, 192], sizes = [8, 96], strides = [1, 1]} : vector<8x292xf32> to vector<8x96xf32>
    %678 = vector.extract_strided_slice %676 {offsets = [0, 0], sizes = [8, 64], strides = [1, 1]} : vector<8x96xf32> to vector<8x64xf32>
    %679 = vector.extract_strided_slice %677 {offsets = [0, 0], sizes = [8, 64], strides = [1, 1]} : vector<8x96xf32> to vector<8x64xf32>
    %680 = arith.addf %678, %679 : vector<8x64xf32>
    %681 = arith.negf %680 : vector<8x64xf32>
    %682 = math.exp %681 : vector<8x64xf32>
    %cst_91 = arith.constant 1.000000e+00 : f32
    %683 = vector.broadcast %cst_91 : f32 to vector<8x64xf32>
    %684 = arith.addf %683, %682 : vector<8x64xf32>
    %685 = arith.divf %683, %684 : vector<8x64xf32>
    %686 = vector.extract_strided_slice %685 {offsets = [0, 0], sizes = [8, 32], strides = [1, 1]} : vector<8x64xf32> to vector<8x32xf32>
    %687 = vector.extract_strided_slice %685 {offsets = [0, 32], sizes = [8, 32], strides = [1, 1]} : vector<8x64xf32> to vector<8x32xf32>
    %688 = vector.extract_strided_slice %676 {offsets = [0, 64], sizes = [8, 32], strides = [1, 1]} : vector<8x96xf32> to vector<8x32xf32>
    %689 = vector.extract_strided_slice %677 {offsets = [0, 64], sizes = [8, 32], strides = [1, 1]} : vector<8x96xf32> to vector<8x32xf32>
    %690 = arith.addf %689, %391 : vector<8x32xf32>
    %691 = arith.mulf %686, %690 : vector<8x32xf32>
    %692 = arith.addf %688, %691 : vector<8x32xf32>
    %693 = math.tanh %692 : vector<8x32xf32>
    %694 = arith.subf %649, %693 : vector<8x32xf32>
    %695 = arith.mulf %687, %694 : vector<8x32xf32>
    %696 = arith.addf %693, %695 : vector<8x32xf32>
    %697 = tpu.concatenate %674, %696 in 1 : vector<8x32xf32>, vector<8x32xf32> -> vector<8x64xf32>
    %cst_92 = arith.constant dense<0.000000e+00> : vector<8x292xf32>
    %698 = tpu.matmul %697, %395, %cst_92 {dimension_numbers = #tpu.dot_dimension_numbers<[1], [0], [0], [1], [0, 0, 1, 1], [], []>} : vector<8x64xf32>, vector<64x292xf32>, vector<8x292xf32> -> vector<8x292xf32>
    %699 = vector.extract_strided_slice %698 {offsets = [0, 288], sizes = [8, 4], strides = [1, 1]} : vector<8x292xf32> to vector<8x4xf32>
    %700 = arith.addf %699, %394 : vector<8x4xf32>
    %c40_93 = arith.constant 40 : index
    %c0_94 = arith.constant 0 : index
    %701 = vector.load %arg14[%c40_93, %c0_94] : memref<80x4xf32, #tpu.memory_space<vmem>>, vector<8x4xf32>
    tpu.vector_store %arg14[%c40_93, %c0_94], %700 {strides = array<i32>} : memref<80x4xf32, #tpu.memory_space<vmem>>, vector<8x4xf32>,
    %702 = vector.extract_strided_slice %698 {offsets = [0, 0], sizes = [8, 96], strides = [1, 1]} : vector<8x292xf32> to vector<8x96xf32>
    %703 = vector.extract_strided_slice %382 {offsets = [0, 0], sizes = [8, 64], strides = [1, 1]} : vector<8x96xf32> to vector<8x64xf32>
    %704 = vector.extract_strided_slice %702 {offsets = [0, 0], sizes = [8, 64], strides = [1, 1]} : vector<8x96xf32> to vector<8x64xf32>
    %705 = arith.addf %703, %704 : vector<8x64xf32>
    %706 = arith.negf %705 : vector<8x64xf32>
    %707 = math.exp %706 : vector<8x64xf32>
    %cst_95 = arith.constant 1.000000e+00 : f32
    %708 = vector.broadcast %cst_95 : f32 to vector<8x64xf32>
    %709 = arith.addf %708, %707 : vector<8x64xf32>
    %710 = arith.divf %708, %709 : vector<8x64xf32>
    %711 = vector.extract_strided_slice %710 {offsets = [0, 0], sizes = [8, 32], strides = [1, 1]} : vector<8x64xf32> to vector<8x32xf32>
    %712 = vector.extract_strided_slice %710 {offsets = [0, 32], sizes = [8, 32], strides = [1, 1]} : vector<8x64xf32> to vector<8x32xf32>
    %713 = vector.extract_strided_slice %382 {offsets = [0, 64], sizes = [8, 32], strides = [1, 1]} : vector<8x96xf32> to vector<8x32xf32>
    %714 = vector.extract_strided_slice %702 {offsets = [0, 64], sizes = [8, 32], strides = [1, 1]} : vector<8x96xf32> to vector<8x32xf32>
    %715 = arith.addf %714, %388 : vector<8x32xf32>
    %716 = arith.mulf %711, %715 : vector<8x32xf32>
    %717 = arith.addf %713, %716 : vector<8x32xf32>
    %718 = math.tanh %717 : vector<8x32xf32>
    %719 = arith.subf %674, %718 : vector<8x32xf32>
    %720 = arith.mulf %712, %719 : vector<8x32xf32>
    %721 = arith.addf %718, %720 : vector<8x32xf32>
    %722 = vector.extract_strided_slice %698 {offsets = [0, 96], sizes = [8, 96], strides = [1, 1]} : vector<8x292xf32> to vector<8x96xf32>
    %723 = arith.addf %722, %385 : vector<8x96xf32>
    %724 = vector.extract_strided_slice %698 {offsets = [0, 192], sizes = [8, 96], strides = [1, 1]} : vector<8x292xf32> to vector<8x96xf32>
    %725 = vector.extract_strided_slice %723 {offsets = [0, 0], sizes = [8, 64], strides = [1, 1]} : vector<8x96xf32> to vector<8x64xf32>
    %726 = vector.extract_strided_slice %724 {offsets = [0, 0], sizes = [8, 64], strides = [1, 1]} : vector<8x96xf32> to vector<8x64xf32>
    %727 = arith.addf %725, %726 : vector<8x64xf32>
    %728 = arith.negf %727 : vector<8x64xf32>
    %729 = math.exp %728 : vector<8x64xf32>
    %cst_96 = arith.constant 1.000000e+00 : f32
    %730 = vector.broadcast %cst_96 : f32 to vector<8x64xf32>
    %731 = arith.addf %730, %729 : vector<8x64xf32>
    %732 = arith.divf %730, %731 : vector<8x64xf32>
    %733 = vector.extract_strided_slice %732 {offsets = [0, 0], sizes = [8, 32], strides = [1, 1]} : vector<8x64xf32> to vector<8x32xf32>
    %734 = vector.extract_strided_slice %732 {offsets = [0, 32], sizes = [8, 32], strides = [1, 1]} : vector<8x64xf32> to vector<8x32xf32>
    %735 = vector.extract_strided_slice %723 {offsets = [0, 64], sizes = [8, 32], strides = [1, 1]} : vector<8x96xf32> to vector<8x32xf32>
    %736 = vector.extract_strided_slice %724 {offsets = [0, 64], sizes = [8, 32], strides = [1, 1]} : vector<8x96xf32> to vector<8x32xf32>
    %737 = arith.addf %736, %391 : vector<8x32xf32>
    %738 = arith.mulf %733, %737 : vector<8x32xf32>
    %739 = arith.addf %735, %738 : vector<8x32xf32>
    %740 = math.tanh %739 : vector<8x32xf32>
    %741 = arith.subf %696, %740 : vector<8x32xf32>
    %742 = arith.mulf %734, %741 : vector<8x32xf32>
    %743 = arith.addf %740, %742 : vector<8x32xf32>
    %744 = tpu.concatenate %721, %743 in 1 : vector<8x32xf32>, vector<8x32xf32> -> vector<8x64xf32>
    %cst_97 = arith.constant dense<0.000000e+00> : vector<8x292xf32>
    %745 = tpu.matmul %744, %395, %cst_97 {dimension_numbers = #tpu.dot_dimension_numbers<[1], [0], [0], [1], [0, 0, 1, 1], [], []>} : vector<8x64xf32>, vector<64x292xf32>, vector<8x292xf32> -> vector<8x292xf32>
    %746 = vector.extract_strided_slice %745 {offsets = [0, 288], sizes = [8, 4], strides = [1, 1]} : vector<8x292xf32> to vector<8x4xf32>
    %747 = arith.addf %746, %394 : vector<8x4xf32>
    %c48_98 = arith.constant 48 : index
    %c0_99 = arith.constant 0 : index
    %748 = vector.load %arg14[%c48_98, %c0_99] : memref<80x4xf32, #tpu.memory_space<vmem>>, vector<8x4xf32>
    tpu.vector_store %arg14[%c48_98, %c0_99], %747 {strides = array<i32>} : memref<80x4xf32, #tpu.memory_space<vmem>>, vector<8x4xf32>,
    %749 = vector.extract_strided_slice %745 {offsets = [0, 0], sizes = [8, 96], strides = [1, 1]} : vector<8x292xf32> to vector<8x96xf32>
    %750 = vector.extract_strided_slice %382 {offsets = [0, 0], sizes = [8, 64], strides = [1, 1]} : vector<8x96xf32> to vector<8x64xf32>
    %751 = vector.extract_strided_slice %749 {offsets = [0, 0], sizes = [8, 64], strides = [1, 1]} : vector<8x96xf32> to vector<8x64xf32>
    %752 = arith.addf %750, %751 : vector<8x64xf32>
    %753 = arith.negf %752 : vector<8x64xf32>
    %754 = math.exp %753 : vector<8x64xf32>
    %cst_100 = arith.constant 1.000000e+00 : f32
    %755 = vector.broadcast %cst_100 : f32 to vector<8x64xf32>
    %756 = arith.addf %755, %754 : vector<8x64xf32>
    %757 = arith.divf %755, %756 : vector<8x64xf32>
    %758 = vector.extract_strided_slice %757 {offsets = [0, 0], sizes = [8, 32], strides = [1, 1]} : vector<8x64xf32> to vector<8x32xf32>
    %759 = vector.extract_strided_slice %757 {offsets = [0, 32], sizes = [8, 32], strides = [1, 1]} : vector<8x64xf32> to vector<8x32xf32>
    %760 = vector.extract_strided_slice %382 {offsets = [0, 64], sizes = [8, 32], strides = [1, 1]} : vector<8x96xf32> to vector<8x32xf32>
    %761 = vector.extract_strided_slice %749 {offsets = [0, 64], sizes = [8, 32], strides = [1, 1]} : vector<8x96xf32> to vector<8x32xf32>
    %762 = arith.addf %761, %388 : vector<8x32xf32>
    %763 = arith.mulf %758, %762 : vector<8x32xf32>
    %764 = arith.addf %760, %763 : vector<8x32xf32>
    %765 = math.tanh %764 : vector<8x32xf32>
    %766 = arith.subf %721, %765 : vector<8x32xf32>
    %767 = arith.mulf %759, %766 : vector<8x32xf32>
    %768 = arith.addf %765, %767 : vector<8x32xf32>
    %769 = vector.extract_strided_slice %745 {offsets = [0, 96], sizes = [8, 96], strides = [1, 1]} : vector<8x292xf32> to vector<8x96xf32>
    %770 = arith.addf %769, %385 : vector<8x96xf32>
    %771 = vector.extract_strided_slice %745 {offsets = [0, 192], sizes = [8, 96], strides = [1, 1]} : vector<8x292xf32> to vector<8x96xf32>
    %772 = vector.extract_strided_slice %770 {offsets = [0, 0], sizes = [8, 64], strides = [1, 1]} : vector<8x96xf32> to vector<8x64xf32>
    %773 = vector.extract_strided_slice %771 {offsets = [0, 0], sizes = [8, 64], strides = [1, 1]} : vector<8x96xf32> to vector<8x64xf32>
    %774 = arith.addf %772, %773 : vector<8x64xf32>
    %775 = arith.negf %774 : vector<8x64xf32>
    %776 = math.exp %775 : vector<8x64xf32>
    %cst_101 = arith.constant 1.000000e+00 : f32
    %777 = vector.broadcast %cst_101 : f32 to vector<8x64xf32>
    %778 = arith.addf %777, %776 : vector<8x64xf32>
    %779 = arith.divf %777, %778 : vector<8x64xf32>
    %780 = vector.extract_strided_slice %779 {offsets = [0, 0], sizes = [8, 32], strides = [1, 1]} : vector<8x64xf32> to vector<8x32xf32>
    %781 = vector.extract_strided_slice %779 {offsets = [0, 32], sizes = [8, 32], strides = [1, 1]} : vector<8x64xf32> to vector<8x32xf32>
    %782 = vector.extract_strided_slice %770 {offsets = [0, 64], sizes = [8, 32], strides = [1, 1]} : vector<8x96xf32> to vector<8x32xf32>
    %783 = vector.extract_strided_slice %771 {offsets = [0, 64], sizes = [8, 32], strides = [1, 1]} : vector<8x96xf32> to vector<8x32xf32>
    %784 = arith.addf %783, %391 : vector<8x32xf32>
    %785 = arith.mulf %780, %784 : vector<8x32xf32>
    %786 = arith.addf %782, %785 : vector<8x32xf32>
    %787 = math.tanh %786 : vector<8x32xf32>
    %788 = arith.subf %743, %787 : vector<8x32xf32>
    %789 = arith.mulf %781, %788 : vector<8x32xf32>
    %790 = arith.addf %787, %789 : vector<8x32xf32>
    %791 = tpu.concatenate %768, %790 in 1 : vector<8x32xf32>, vector<8x32xf32> -> vector<8x64xf32>
    %cst_102 = arith.constant dense<0.000000e+00> : vector<8x292xf32>
    %792 = tpu.matmul %791, %395, %cst_102 {dimension_numbers = #tpu.dot_dimension_numbers<[1], [0], [0], [1], [0, 0, 1, 1], [], []>} : vector<8x64xf32>, vector<64x292xf32>, vector<8x292xf32> -> vector<8x292xf32>
    %793 = vector.extract_strided_slice %792 {offsets = [0, 288], sizes = [8, 4], strides = [1, 1]} : vector<8x292xf32> to vector<8x4xf32>
    %794 = arith.addf %793, %394 : vector<8x4xf32>
    %c56_103 = arith.constant 56 : index
    %c0_104 = arith.constant 0 : index
    %795 = vector.load %arg14[%c56_103, %c0_104] : memref<80x4xf32, #tpu.memory_space<vmem>>, vector<8x4xf32>
    tpu.vector_store %arg14[%c56_103, %c0_104], %794 {strides = array<i32>} : memref<80x4xf32, #tpu.memory_space<vmem>>, vector<8x4xf32>,
    %796 = vector.extract_strided_slice %792 {offsets = [0, 0], sizes = [8, 96], strides = [1, 1]} : vector<8x292xf32> to vector<8x96xf32>
    %797 = vector.extract_strided_slice %382 {offsets = [0, 0], sizes = [8, 64], strides = [1, 1]} : vector<8x96xf32> to vector<8x64xf32>
    %798 = vector.extract_strided_slice %796 {offsets = [0, 0], sizes = [8, 64], strides = [1, 1]} : vector<8x96xf32> to vector<8x64xf32>
    %799 = arith.addf %797, %798 : vector<8x64xf32>
    %800 = arith.negf %799 : vector<8x64xf32>
    %801 = math.exp %800 : vector<8x64xf32>
    %cst_105 = arith.constant 1.000000e+00 : f32
    %802 = vector.broadcast %cst_105 : f32 to vector<8x64xf32>
    %803 = arith.addf %802, %801 : vector<8x64xf32>
    %804 = arith.divf %802, %803 : vector<8x64xf32>
    %805 = vector.extract_strided_slice %804 {offsets = [0, 0], sizes = [8, 32], strides = [1, 1]} : vector<8x64xf32> to vector<8x32xf32>
    %806 = vector.extract_strided_slice %804 {offsets = [0, 32], sizes = [8, 32], strides = [1, 1]} : vector<8x64xf32> to vector<8x32xf32>
    %807 = vector.extract_strided_slice %382 {offsets = [0, 64], sizes = [8, 32], strides = [1, 1]} : vector<8x96xf32> to vector<8x32xf32>
    %808 = vector.extract_strided_slice %796 {offsets = [0, 64], sizes = [8, 32], strides = [1, 1]} : vector<8x96xf32> to vector<8x32xf32>
    %809 = arith.addf %808, %388 : vector<8x32xf32>
    %810 = arith.mulf %805, %809 : vector<8x32xf32>
    %811 = arith.addf %807, %810 : vector<8x32xf32>
    %812 = math.tanh %811 : vector<8x32xf32>
    %813 = arith.subf %768, %812 : vector<8x32xf32>
    %814 = arith.mulf %806, %813 : vector<8x32xf32>
    %815 = arith.addf %812, %814 : vector<8x32xf32>
    %816 = vector.extract_strided_slice %792 {offsets = [0, 96], sizes = [8, 96], strides = [1, 1]} : vector<8x292xf32> to vector<8x96xf32>
    %817 = arith.addf %816, %385 : vector<8x96xf32>
    %818 = vector.extract_strided_slice %792 {offsets = [0, 192], sizes = [8, 96], strides = [1, 1]} : vector<8x292xf32> to vector<8x96xf32>
    %819 = vector.extract_strided_slice %817 {offsets = [0, 0], sizes = [8, 64], strides = [1, 1]} : vector<8x96xf32> to vector<8x64xf32>
    %820 = vector.extract_strided_slice %818 {offsets = [0, 0], sizes = [8, 64], strides = [1, 1]} : vector<8x96xf32> to vector<8x64xf32>
    %821 = arith.addf %819, %820 : vector<8x64xf32>
    %822 = arith.negf %821 : vector<8x64xf32>
    %823 = math.exp %822 : vector<8x64xf32>
    %cst_106 = arith.constant 1.000000e+00 : f32
    %824 = vector.broadcast %cst_106 : f32 to vector<8x64xf32>
    %825 = arith.addf %824, %823 : vector<8x64xf32>
    %826 = arith.divf %824, %825 : vector<8x64xf32>
    %827 = vector.extract_strided_slice %826 {offsets = [0, 0], sizes = [8, 32], strides = [1, 1]} : vector<8x64xf32> to vector<8x32xf32>
    %828 = vector.extract_strided_slice %826 {offsets = [0, 32], sizes = [8, 32], strides = [1, 1]} : vector<8x64xf32> to vector<8x32xf32>
    %829 = vector.extract_strided_slice %817 {offsets = [0, 64], sizes = [8, 32], strides = [1, 1]} : vector<8x96xf32> to vector<8x32xf32>
    %830 = vector.extract_strided_slice %818 {offsets = [0, 64], sizes = [8, 32], strides = [1, 1]} : vector<8x96xf32> to vector<8x32xf32>
    %831 = arith.addf %830, %391 : vector<8x32xf32>
    %832 = arith.mulf %827, %831 : vector<8x32xf32>
    %833 = arith.addf %829, %832 : vector<8x32xf32>
    %834 = math.tanh %833 : vector<8x32xf32>
    %835 = arith.subf %790, %834 : vector<8x32xf32>
    %836 = arith.mulf %828, %835 : vector<8x32xf32>
    %837 = arith.addf %834, %836 : vector<8x32xf32>
    %838 = tpu.concatenate %815, %837 in 1 : vector<8x32xf32>, vector<8x32xf32> -> vector<8x64xf32>
    %cst_107 = arith.constant dense<0.000000e+00> : vector<8x292xf32>
    %839 = tpu.matmul %838, %395, %cst_107 {dimension_numbers = #tpu.dot_dimension_numbers<[1], [0], [0], [1], [0, 0, 1, 1], [], []>} : vector<8x64xf32>, vector<64x292xf32>, vector<8x292xf32> -> vector<8x292xf32>
    %840 = vector.extract_strided_slice %839 {offsets = [0, 288], sizes = [8, 4], strides = [1, 1]} : vector<8x292xf32> to vector<8x4xf32>
    %841 = arith.addf %840, %394 : vector<8x4xf32>
    %c64 = arith.constant 64 : index
    %c0_108 = arith.constant 0 : index
    %842 = vector.load %arg14[%c64, %c0_108] : memref<80x4xf32, #tpu.memory_space<vmem>>, vector<8x4xf32>
    tpu.vector_store %arg14[%c64, %c0_108], %841 {strides = array<i32>} : memref<80x4xf32, #tpu.memory_space<vmem>>, vector<8x4xf32>,
    %843 = vector.extract_strided_slice %839 {offsets = [0, 96], sizes = [8, 96], strides = [1, 1]} : vector<8x292xf32> to vector<8x96xf32>
    %844 = arith.addf %843, %385 : vector<8x96xf32>
    %845 = vector.extract_strided_slice %839 {offsets = [0, 192], sizes = [8, 96], strides = [1, 1]} : vector<8x292xf32> to vector<8x96xf32>
    %846 = vector.extract_strided_slice %844 {offsets = [0, 0], sizes = [8, 64], strides = [1, 1]} : vector<8x96xf32> to vector<8x64xf32>
    %847 = vector.extract_strided_slice %845 {offsets = [0, 0], sizes = [8, 64], strides = [1, 1]} : vector<8x96xf32> to vector<8x64xf32>
    %848 = arith.addf %846, %847 : vector<8x64xf32>
    %849 = arith.negf %848 : vector<8x64xf32>
    %850 = math.exp %849 : vector<8x64xf32>
    %cst_109 = arith.constant 1.000000e+00 : f32
    %851 = vector.broadcast %cst_109 : f32 to vector<8x64xf32>
    %852 = arith.addf %851, %850 : vector<8x64xf32>
    %853 = arith.divf %851, %852 : vector<8x64xf32>
    %854 = vector.extract_strided_slice %853 {offsets = [0, 0], sizes = [8, 32], strides = [1, 1]} : vector<8x64xf32> to vector<8x32xf32>
    %855 = vector.extract_strided_slice %853 {offsets = [0, 32], sizes = [8, 32], strides = [1, 1]} : vector<8x64xf32> to vector<8x32xf32>
    %856 = vector.extract_strided_slice %844 {offsets = [0, 64], sizes = [8, 32], strides = [1, 1]} : vector<8x96xf32> to vector<8x32xf32>
    %857 = vector.extract_strided_slice %845 {offsets = [0, 64], sizes = [8, 32], strides = [1, 1]} : vector<8x96xf32> to vector<8x32xf32>
    %858 = arith.addf %857, %391 : vector<8x32xf32>
    %859 = arith.mulf %854, %858 : vector<8x32xf32>
    %860 = arith.addf %856, %859 : vector<8x32xf32>
    %861 = math.tanh %860 : vector<8x32xf32>
    %862 = arith.subf %837, %861 : vector<8x32xf32>
    %863 = arith.mulf %855, %862 : vector<8x32xf32>
    %864 = arith.addf %861, %863 : vector<8x32xf32>
    %865 = tpu.concatenate %815, %864 in 1 : vector<8x32xf32>, vector<8x32xf32> -> vector<8x64xf32>
    %cst_110 = arith.constant dense<0.000000e+00> : vector<8x292xf32>
    %866 = tpu.matmul %865, %395, %cst_110 {dimension_numbers = #tpu.dot_dimension_numbers<[1], [0], [0], [1], [0, 0, 1, 1], [], []>} : vector<8x64xf32>, vector<64x292xf32>, vector<8x292xf32> -> vector<8x292xf32>
    %867 = vector.extract_strided_slice %866 {offsets = [0, 288], sizes = [8, 4], strides = [1, 1]} : vector<8x292xf32> to vector<8x4xf32>
    %868 = arith.addf %867, %394 : vector<8x4xf32>
    %c72 = arith.constant 72 : index
    %c0_111 = arith.constant 0 : index
    %869 = vector.load %arg14[%c72, %c0_111] : memref<80x4xf32, #tpu.memory_space<vmem>>, vector<8x4xf32>
    tpu.vector_store %arg14[%c72, %c0_111], %868 {strides = array<i32>} : memref<80x4xf32, #tpu.memory_space<vmem>>, vector<8x4xf32>,
    return
  }
  func.func @transform_0(%arg0: i32) -> (i32, i32) {
    %c0_i32 = arith.constant 0 : i32
    %c0_i32_0 = arith.constant 0 : i32
    %c0_i32_1 = arith.constant 0 : i32
    return %c0_i32, %c0_i32_0 : i32, i32
  }
  func.func @transform_1(%arg0: i32) -> (i32, i32) {
    %c0_i32 = arith.constant 0 : i32
    %c0_i32_0 = arith.constant 0 : i32
    %c0_i32_1 = arith.constant 0 : i32
    return %c0_i32, %c0_i32_0 : i32, i32
  }
  func.func @transform_2(%arg0: i32) -> (i32, i32) {
    %c0_i32 = arith.constant 0 : i32
    %c0_i32_0 = arith.constant 0 : i32
    %c0_i32_1 = arith.constant 0 : i32
    return %c0_i32, %c0_i32_0 : i32, i32
  }
  func.func @transform_3(%arg0: i32) -> (i32, i32) {
    %c0_i32 = arith.constant 0 : i32
    %c0_i32_0 = arith.constant 0 : i32
    %c0_i32_1 = arith.constant 0 : i32
    return %c0_i32, %c0_i32_0 : i32, i32
  }
  func.func @transform_4(%arg0: i32) -> (i32, i32) {
    %c0_i32 = arith.constant 0 : i32
    %c0_i32_0 = arith.constant 0 : i32
    %c0_i32_1 = arith.constant 0 : i32
    return %c0_i32, %c0_i32_0 : i32, i32
  }
  func.func @transform_5(%arg0: i32) -> (i32, i32) {
    %c0_i32 = arith.constant 0 : i32
    %c0_i32_0 = arith.constant 0 : i32
    %c0_i32_1 = arith.constant 0 : i32
    return %c0_i32, %c0_i32_0 : i32, i32
  }
  func.func @transform_6(%arg0: i32) -> (i32, i32) {
    %c0_i32 = arith.constant 0 : i32
    %c0_i32_0 = arith.constant 0 : i32
    %c0_i32_1 = arith.constant 0 : i32
    return %c0_i32, %c0_i32_0 : i32, i32
  }
  func.func @transform_7(%arg0: i32) -> (i32, i32) {
    %c0_i32 = arith.constant 0 : i32
    %c0_i32_0 = arith.constant 0 : i32
    %c0_i32_1 = arith.constant 0 : i32
    return %c0_i32, %c0_i32_0 : i32, i32
  }
  func.func @transform_8(%arg0: i32) -> (i32, i32) {
    %c0_i32 = arith.constant 0 : i32
    %c0_i32_0 = arith.constant 0 : i32
    %c0_i32_1 = arith.constant 0 : i32
    return %c0_i32, %c0_i32_0 : i32, i32
  }
  func.func @transform_9(%arg0: i32) -> (i32, i32) {
    %c0_i32 = arith.constant 0 : i32
    %c0_i32_0 = arith.constant 0 : i32
    %c0_i32_1 = arith.constant 0 : i32
    return %c0_i32, %c0_i32_0 : i32, i32
  }
  func.func @transform_10(%arg0: i32) -> (i32, i32) {
    %c0_i32 = arith.constant 0 : i32
    %c0_i32_0 = arith.constant 0 : i32
    %c0_i32_1 = arith.constant 0 : i32
    return %c0_i32, %c0_i32_0 : i32, i32
  }
  func.func @transform_11(%arg0: i32) -> (i32, i32) {
    %c0_i32 = arith.constant 0 : i32
    %c0_i32_0 = arith.constant 0 : i32
    %c0_i32_1 = arith.constant 0 : i32
    return %c0_i32, %c0_i32_0 : i32, i32
  }
  func.func @transform_12(%arg0: i32) -> (i32, i32) {
    %c0_i32 = arith.constant 0 : i32
    %c0_i32_0 = arith.constant 0 : i32
    %c0_i32_1 = arith.constant 0 : i32
    return %c0_i32, %c0_i32_0 : i32, i32
  }
  func.func @transform_13(%arg0: i32) -> (i32, i32) {
    %c0_i32 = arith.constant 0 : i32
    %c0_i32_0 = arith.constant 0 : i32
    %c0_i32_1 = arith.constant 0 : i32
    return %c0_i32, %c0_i32_0 : i32, i32
  }
}

</mosaic_0001>

<llo_original>
// kernel: tpu_custom_call.1
$region0: #{tpu_custom_call.1}
  #allocation0 [shape = 'u32[]', space=smem, size = 0x4, offset = 0x4, fixed_abs, tag = 'smem constant byte address 0x4 - core index']
  #allocation1 [shape = 'u32[72,128]{1,0:T(1,128)}', space=vmem, size = 0x9000, scoped, tag = 'internal scratch']
  #allocation2 [shape = 'f32[64,96]{1,0:T(8,128)}', space=vmem, size = 0x8000, scoped, tag = 'scratch operand']
  %s0 = inlined_call_operand.vmem [shape: f32[64,16], index: 0, kind: input, shape index: {}]
  %s1 = inlined_call_operand.vmem [shape: f32[16,96], index: 1, kind: input, shape index: {}]
  %s2 = inlined_call_operand.vmem [shape: f32[1,96], index: 2, kind: input, shape index: {}]
  %s3 = inlined_call_operand.hbm [shape: f32[64,288], index: 3, kind: input, shape index: {}]
  %s4 = inlined_call_operand.vmem [shape: f32[1,32], index: 4, kind: input, shape index: {}]
  %s5 = inlined_call_operand.vmem [shape: f32[1,96], index: 5, kind: input, shape index: {}]
  %s6 = inlined_call_operand.vmem [shape: f32[1,32], index: 6, kind: input, shape index: {}]
  %s7 = inlined_call_operand.hbm [shape: f32[64,292], index: 7, kind: input, shape index: {}]
  %s8 = inlined_call_operand.vmem [shape: f32[1,96], index: 8, kind: input, shape index: {}]
  %s9 = inlined_call_operand.vmem [shape: f32[1,32], index: 9, kind: input, shape index: {}]
  %s10 = inlined_call_operand.vmem [shape: f32[1,96], index: 10, kind: input, shape index: {}]
  %s11 = inlined_call_operand.vmem [shape: f32[1,32], index: 11, kind: input, shape index: {}]
  %s12 = inlined_call_operand.vmem [shape: f32[1,4], index: 12, kind: input, shape index: {}]
  %s13 = inlined_call_operand.vmem [shape: f32[80,4], index: 13, kind: output, shape index: {}]
  %s14 = sld [smem:[#allocation0]]
  $region70: #{tpu_custom_call.1} parent=0
    _
  %s16 = ssub.s32 1, %s14
  %s17 = scalar_select 0, %s16, %s14
  $region1: #{tpu_custom_call.1} parent=0
    #allocation3 [shape = 'u8[98304]{0}', space=vmem, size = 0x18000, scoped, tag = 'input window, operand 3, single buffered']
    #allocation4 [shape = 's32[1]{0}', space=sflag, size = 0x4, scoped, tag = 'scoped memory for tpu_custom_call.1']
    #allocation5 [shape = 'u8[98304]{0}', space=vmem, size = 0x18000, scoped, tag = 'input window, operand 7, single buffered']
    #allocation6 [shape = 's32[1]{0}', space=sflag, size = 0x4, scoped, tag = 'scoped memory for tpu_custom_call.1']
    %18 = vsyncpa [#allocation4], 0
    %19 = vsyncpa [#allocation6], 0
    // Predicated region
    $region2: #{tpu_custom_call.1} parent=1 // pred_check
      _
    $region3: #{tpu_custom_call.1} parent=1 // pred_check_branch
      %21 = sbr.rel (0) target = $region5
    $region4: #{tpu_custom_call.1} parent=1 // pred_region
      _
    $region5: #{tpu_custom_call.1} parent=1 // pred_fallthru
      _
    // Predicated region
    $region6: #{tpu_custom_call.1} parent=1 // pred_check
      _
    $region7: #{tpu_custom_call.1} parent=1 // pred_check_branch
      %23 = sbr.rel (0) target = $region9
    $region8: #{tpu_custom_call.1} parent=1 // pred_region
      _
    $region9: #{tpu_custom_call.1} parent=1 // pred_fallthru
      _
    // Predicated region
    $region10: #{tpu_custom_call.1} parent=1 // pred_check
      _
    $region11: #{tpu_custom_call.1} parent=1 // pred_check_branch
      %25 = sbr.rel (0) target = $region13
    $region12: #{tpu_custom_call.1} parent=1 // pred_region
      _
    $region13: #{tpu_custom_call.1} parent=1 // pred_fallthru
      _
    // Predicated region
    $region14: #{tpu_custom_call.1} parent=1 // pred_check
      _
    $region15: #{tpu_custom_call.1} parent=1 // pred_check_branch
      %27 = sbr.rel (0) target = $region17
    $region16: #{tpu_custom_call.1} parent=1 // pred_region
      %29 = vsyncadd [#allocation4], 0
      %s30 = sshll.u32 %s3, 4
      %s31 = int_to_ptr.hbm [resolvable:$true] %s30
      %s32 = sshll.u32 [#allocation3], 4
      %s33 = int_to_ptr.vmem [resolvable:$true] %s32
      %38 = dma.hbm_to_vmem [thread:$0]  %s31, 3072, %s33, [#allocation4], 384, 384, 24
    $region17: #{tpu_custom_call.1} parent=1 // pred_fallthru
      _
    // Predicated region
    $region18: #{tpu_custom_call.1} parent=1 // pred_check
      _
    $region19: #{tpu_custom_call.1} parent=1 // pred_check_branch
      %40 = sbr.rel (0) target = $region21
    $region20: #{tpu_custom_call.1} parent=1 // pred_region
      _
    $region21: #{tpu_custom_call.1} parent=1 // pred_fallthru
      _
    // Predicated region
    $region22: #{tpu_custom_call.1} parent=1 // pred_check
      _
    $region23: #{tpu_custom_call.1} parent=1 // pred_check_branch
      %42 = sbr.rel (0) target = $region25
    $region24: #{tpu_custom_call.1} parent=1 // pred_region
      _
    $region25: #{tpu_custom_call.1} parent=1 // pred_fallthru
      _
    // Predicated region
    $region26: #{tpu_custom_call.1} parent=1 // pred_check
      _
    $region27: #{tpu_custom_call.1} parent=1 // pred_check_branch
      %44 = sbr.rel (0) target = $region29
    $region28: #{tpu_custom_call.1} parent=1 // pred_region
      _
    $region29: #{tpu_custom_call.1} parent=1 // pred_fallthru
      _
    // Predicated region
    $region30: #{tpu_custom_call.1} parent=1 // pred_check
      _
    $region31: #{tpu_custom_call.1} parent=1 // pred_check_branch
      %46 = sbr.rel (0) target = $region33
    $region32: #{tpu_custom_call.1} parent=1 // pred_region
      %48 = vsyncadd [#allocation6], 0
      %s49 = sshll.u32 %s7, 4
      %s50 = int_to_ptr.hbm [resolvable:$true] %s49
      %s51 = sshll.u32 [#allocation5], 4
      %s52 = int_to_ptr.vmem [resolvable:$true] %s51
      %57 = dma.hbm_to_vmem [thread:$0]  %s50, 3072, %s52, [#allocation6], 384, 384, 24
    $region33: #{tpu_custom_call.1} parent=1 // pred_fallthru
      _
    // Predicated region
    $region34: #{tpu_custom_call.1} parent=1 // pred_check
      _
    $region35: #{tpu_custom_call.1} parent=1 // pred_check_branch
      %59 = sbr.rel (0) target = $region37
    $region36: #{tpu_custom_call.1} parent=1 // pred_region
      _
    $region37: #{tpu_custom_call.1} parent=1 // pred_fallthru
      _
    // Predicated region
    $region38: #{tpu_custom_call.1} parent=1 // pred_check
      _
    $region39: #{tpu_custom_call.1} parent=1 // pred_check_branch
      %61 = sbr.rel (0) target = $region41
    $region40: #{tpu_custom_call.1} parent=1 // pred_region
      _
    $region41: #{tpu_custom_call.1} parent=1 // pred_fallthru
      _
    // Predicated region
    $region42: #{tpu_custom_call.1} parent=1 // pred_check
      _
    $region43: #{tpu_custom_call.1} parent=1 // pred_check_branch
      %63 = sbr.rel (0) target = $region45
    $region44: #{tpu_custom_call.1} parent=1 // pred_region
      _
    $region45: #{tpu_custom_call.1} parent=1 // pred_fallthru
      _
    // Predicated region
    $region46: #{tpu_custom_call.1} parent=1 // pred_check
      _
    $region47: #{tpu_custom_call.1} parent=1 // pred_check_branch
      %65 = sbr.rel (0) target = $region49
    $region48: #{tpu_custom_call.1} parent=1 // pred_region
      _
    $region49: #{tpu_custom_call.1} parent=1 // pred_fallthru
      _
    // Predicated region
    $region50: #{tpu_custom_call.1} parent=1 // pred_check
      _
    $region51: #{tpu_custom_call.1} parent=1 // pred_check_branch
      %67 = sbr.rel (0) target = $region53
    $region52: #{tpu_custom_call.1} parent=1 // pred_region
      _
    $region53: #{tpu_custom_call.1} parent=1 // pred_fallthru
      _
    // Predicated region
    $region54: #{tpu_custom_call.1} parent=1 // pred_check
      _
    $region55: #{tpu_custom_call.1} parent=1 // pred_check_branch
      %69 = sbr.rel (0) target = $region57
    $region56: #{tpu_custom_call.1} parent=1 // pred_region
      %71 = dma.done [#allocation4], 3072
    $region57: #{tpu_custom_call.1} parent=1 // pred_fallthru
      _
    // Predicated region
    $region58: #{tpu_custom_call.1} parent=1 // pred_check
      _
    $region59: #{tpu_custom_call.1} parent=1 // pred_check_branch
      %73 = sbr.rel (0) target = $region61
    $region60: #{tpu_custom_call.1} parent=1 // pred_region
      %75 = dma.done [#allocation6], 3072
    $region61: #{tpu_custom_call.1} parent=1 // pred_fallthru
      _
    %v76 = vld [vmem:[%s0] sm:$0xff]
    %v77 = vld [vmem:[%s0 + $0x8] sm:$0xff]
    %v78 = vld [vmem:[%s0 + $0x10] sm:$0xff]
    %v79 = vld [vmem:[%s0 + $0x18] sm:$0xff]
    %v80 = vld [vmem:[%s0 + $0x20] sm:$0xff]
    %v81 = vld [vmem:[%s0 + $0x28] sm:$0xff]
    %v82 = vld [vmem:[%s0 + $0x30] sm:$0xff]
    %v83 = vld [vmem:[%s0 + $0x38] sm:$0xff]
    %v84 = vld [vmem:[%s1] sm:$0xff]
    %v85 = vld [vmem:[%s1 + $0x8] sm:$0xff]
    %v86 = vld [vmem:[%s2] sm:$0x1]
    %v88 = vperm.slane %v86, 0
    %vm90 = vcmask 130048
    %v92 = vsel %vm90, %v76, 0
    %v95 = vsel %vm90, %v77, 0
    %v98 = vsel %vm90, %v78, 0
    %v101 = vsel %vm90, %v79, 0
    %v104 = vsel %vm90, %v80, 0
    %v107 = vsel %vm90, %v81, 0
    %v110 = vsel %vm90, %v82, 0
    %v113 = vsel %vm90, %v83, 0
    %115 = vmatpush.msra.mxu0 0.0
    %116 = vmatpush.msra.mxu0 0.0
    %117 = vmatpush.msra.mxu0 0.0
    %118 = vmatpush.msra.mxu0 0.0
    %119 = vmatpush.msra.mxu0 0.0
    %120 = vmatpush.msra.mxu0 0.0
    %121 = vmatpush.msra.mxu0 0.0
    %122 = vmatpush.msra.mxu0 0.0
    %123 = vmatpush.msra.mxu0 0.0
    %124 = vmatpush.msra.mxu0 0.0
    %125 = vmatpush.msra.mxu0 0.0
    %126 = vmatpush.msra.mxu0 0.0
    %127 = vmatpush.msra.mxu0 0.0
    %128 = vmatpush.msra.mxu0 0.0
    %129 = vmatpush.msra.mxu0 %v85
    %130 = vmatpush.msra.mxu0 %v84
    %131 = vmatmul.f32.gmra.mxu0 %v92
    %v132 = vpop.f32.mrf.mxu0
    %v133 = vadd.f32 %v88, %v132
    %134 = vmatmul.f32.gmra.mxu0 %v95
    %v135 = vpop.f32.mrf.mxu0
    %v136 = vadd.f32 %v88, %v135
    %137 = vmatmul.f32.gmra.mxu0 %v98
    %v138 = vpop.f32.mrf.mxu0
    %v139 = vadd.f32 %v88, %v138
    %140 = vmatmul.f32.gmra.mxu0 %v101
    %v141 = vpop.f32.mrf.mxu0
    %v142 = vadd.f32 %v88, %v141
    %143 = vmatmul.f32.gmra.mxu0 %v104
    %v144 = vpop.f32.mrf.mxu0
    %v145 = vadd.f32 %v88, %v144
    %146 = vmatmul.f32.gmra.mxu0 %v107
    %v147 = vpop.f32.mrf.mxu0
    %v148 = vadd.f32 %v88, %v147
    %149 = vmatmul.f32.gmra.mxu0 %v110
    %v150 = vpop.f32.mrf.mxu0
    %v151 = vadd.f32 %v88, %v150
    %152 = vmatmul.f32.gmra.mxu0 %v113
    %v153 = vpop.f32.mrf.mxu0
    %v154 = vadd.f32 %v88, %v153
    %155 = vdwg.mxu0
    %vm156 = vcmask 785408
    %157 = vst.msk [vmem:[#allocation2] sm:$0xff] %vm156, %v133
    %158 = vst.msk [vmem:[#allocation2 + $0x8] sm:$0xff] %vm156, %v136
    %159 = vst.msk [vmem:[#allocation2 + $0x10] sm:$0xff] %vm156, %v139
    %160 = vst.msk [vmem:[#allocation2 + $0x18] sm:$0xff] %vm156, %v142
    %161 = vst.msk [vmem:[#allocation2 + $0x20] sm:$0xff] %vm156, %v145
    %162 = vst.msk [vmem:[#allocation2 + $0x28] sm:$0xff] %vm156, %v148
    %163 = vst.msk [vmem:[#allocation2 + $0x30] sm:$0xff] %vm156, %v151
    %164 = vst.msk [vmem:[#allocation2 + $0x38] sm:$0xff] %vm156, %v154
    %v165 = vld [vmem:[%s5] sm:$0x1]
    %v167 = vperm.slane %v165, 0
    %v168 = vld [vmem:[%s4] sm:$0x1]
    %v170 = vperm.slane %v168, 0
    %v171 = vld [vmem:[%s6] sm:$0x1]
    %v173 = vperm.slane %v171, 0
    %v175 = vld [vmem:[#allocation3] sm:$0xff]
    %v176 = vld [vmem:[#allocation3 + $0x8] sm:$0xff]
    %v177 = vld [vmem:[#allocation3 + $0x10] sm:$0xff]
    %v178 = vld [vmem:[#allocation3 + $0x18] sm:$0xff]
    %v179 = vld [vmem:[#allocation3 + $0x20] sm:$0xff]
    %v180 = vld [vmem:[#allocation3 + $0x28] sm:$0xff]
    %v181 = vld [vmem:[#allocation3 + $0x30] sm:$0xff]
    %v182 = vld [vmem:[#allocation3 + $0x38] sm:$0xff]
    %v183 = vld [vmem:[#allocation3 + $0x40] sm:$0xff]
    %v184 = vld [vmem:[#allocation3 + $0x48] sm:$0xff]
    %v185 = vld [vmem:[#allocation3 + $0x50] sm:$0xff]
    %v186 = vld [vmem:[#allocation3 + $0x58] sm:$0xff]
    %v187 = vld [vmem:[#allocation3 + $0x60] sm:$0xff]
    %v188 = vld [vmem:[#allocation3 + $0x68] sm:$0xff]
    %v189 = vld [vmem:[#allocation3 + $0x70] sm:$0xff]
    %v190 = vld [vmem:[#allocation3 + $0x78] sm:$0xff]
    %v191 = vld [vmem:[#allocation3 + $0x80] sm:$0xff]
    %v192 = vld [vmem:[#allocation3 + $0x88] sm:$0xff]
    %v193 = vld [vmem:[#allocation3 + $0x90] sm:$0xff]
    %v194 = vld [vmem:[#allocation3 + $0x98] sm:$0xff]
    %v195 = vld [vmem:[#allocation3 + $0xa0] sm:$0xff]
    %v196 = vld [vmem:[#allocation3 + $0xa8] sm:$0xff]
    %v197 = vld [vmem:[#allocation3 + $0xb0] sm:$0xff]
    %v198 = vld [vmem:[#allocation3 + $0xb8] sm:$0xff]
    %vm199 = vcmask 523264
    %v201 = vsel %vm199, 0.0, 0
    %203 = vmatpush.msra.mxu0 0.0
    %204 = vmatpush.msra.mxu0 0.0
    %205 = vmatpush.msra.mxu0 0.0
    %206 = vmatpush.msra.mxu0 0.0
    %207 = vmatpush.msra.mxu0 0.0
    %208 = vmatpush.msra.mxu0 0.0
    %209 = vmatpush.msra.mxu0 0.0
    %210 = vmatpush.msra.mxu0 0.0
    %211 = vmatpush.msra.mxu0 %v196
    %212 = vmatpush.msra.mxu0 %v193
    %213 = vmatpush.msra.mxu0 %v190
    %214 = vmatpush.msra.mxu0 %v187
    %215 = vmatpush.msra.mxu0 %v184
    %216 = vmatpush.msra.mxu0 %v181
    %217 = vmatpush.msra.mxu0 %v178
    %218 = vmatpush.msra.mxu0 %v175
    %219 = vmatmul.f32.gmra.mxu0 %v201
    %v220 = vpop.f32.mrf.mxu0
    %v221 = vadd.f32 0.0, %v220
    %222 = vdwg.mxu0
    %v223 = vld [vmem:[#allocation2] sm:$0xff]
    %v224 = vadd.f32 %v223, %v221
    %v225 = vxor.u32 %v224, 2147483648
    %v226 = vmul.f32 %v225, 1.442695
    %v227 = vpow.pop %v226
    %v228 = vadd.f32 %v227, 1.0
    %v229 = vrcp.pop %v228
    %v230 = vmul.f32 %v228, %v229
    %v231 = vsub.f32 1.0, %v230
    %v232 = vmul.f32 %v229, %v231
    %v233 = vadd.f32 %v229, %v232
    %vm234 = vweird.f32 %v228
    %vm235 = vweird.f32 %v229
    %vm236 = vmor %vm234, %vm235
    %v237 = vsel %vm236, %v229, %v233
    %v238 = vand.u32 2147483647, %v228
    %vm239 = vcmp.eq.f32.partialorder %v238, 8.507059e+37
    %v240 = vand.u32 %v228, 2147483648
    %v241 = vor.u32 1.1754944e-38, %v240
    %v242 = vsel %vm239, %v241, %v237
    %v243 = vmul.f32 1.0, %v242
    %244 = vrot.lane.b32.xlu0 %v170, 64
    %v245 = vpop.permute.xlu0 %244
    %v247 = vadd.f32 %v221, %v245
    %249 = vrot.lane.b32.xlu0 %v247, 64
    %v250 = vpop.permute.xlu0 %249
    %v252 = vmul.f32 %v243, %v250
    %254 = vrot.lane.b32.xlu0 %v252, 64
    %v255 = vpop.permute.xlu0 %254
    %v257 = vadd.f32 %v223, %v255
    %v258 = vtanh.pop %v257
    %v259 = vsub.f32 0.0, %v258
    %261 = vrot.lane.b32.xlu0 %v259, 96
    %v262 = vpop.permute.xlu0 %261
    %v264 = vmul.f32 %v243, %v262
    %266 = vrot.lane.b32.xlu0 %v264, 32
    %v267 = vpop.permute.xlu0 %266
    %v269 = vadd.f32 %v258, %v267
    %271 = vrot.lane.b32.xlu0 %v269, 64
    %v272 = vpop.permute.xlu0 %271
    %vm274 = vcmask 261120
    %v275 = vsel %vm274, %v272, 0.0
    %v277 = vsel %vm199, %v275, 0
    %279 = vmatpush.msra.mxu0 0.0
    %280 = vmatpush.msra.mxu0 0.0
    %281 = vmatpush.msra.mxu0 0.0
    %282 = vmatpush.msra.mxu0 0.0
    %283 = vmatpush.msra.mxu0 0.0
    %284 = vmatpush.msra.mxu0 0.0
    %285 = vmatpush.msra.mxu0 0.0
    %286 = vmatpush.msra.mxu0 0.0
    %287 = vmatpush.msra.mxu0 %v196
    %288 = vmatpush.msra.mxu0 %v193
    %289 = vmatpush.msra.mxu0 %v190
    %290 = vmatpush.msra.mxu0 %v187
    %291 = vmatpush.msra.mxu0 %v184
    %292 = vmatpush.msra.mxu0 %v181
    %293 = vmatpush.msra.mxu0 %v178
    %294 = vmatpush.msra.mxu0 %v175
    %295 = vmatmul.f32.gmra.mxu0 %v277
    %v296 = vpop.f32.mrf.mxu0
    %v297 = vadd.f32 0.0, %v296
    %298 = vdwg.mxu0
    %299 = vmatpush.msra.mxu0 0.0
    %300 = vmatpush.msra.mxu0 0.0
    %301 = vmatpush.msra.mxu0 0.0
    %302 = vmatpush.msra.mxu0 0.0
    %303 = vmatpush.msra.mxu0 0.0
    %304 = vmatpush.msra.mxu0 0.0
    %305 = vmatpush.msra.mxu0 0.0
    %306 = vmatpush.msra.mxu0 0.0
    %307 = vmatpush.msra.mxu0 %v197
    %308 = vmatpush.msra.mxu0 %v194
    %309 = vmatpush.msra.mxu0 %v191
    %310 = vmatpush.msra.mxu0 %v188
    %311 = vmatpush.msra.mxu0 %v185
    %312 = vmatpush.msra.mxu0 %v182
    %313 = vmatpush.msra.mxu0 %v179
    %314 = vmatpush.msra.mxu0 %v176
    %315 = vmatmul.f32.gmra.mxu0 %v277
    %v316 = vpop.f32.mrf.mxu0
    %v317 = vadd.f32 0.0, %v316
    %318 = vdwg.mxu0
    %319 = vmatpush.msra.mxu0 0.0
    %320 = vmatpush.msra.mxu0 0.0
    %321 = vmatpush.msra.mxu0 0.0
    %322 = vmatpush.msra.mxu0 0.0
    %323 = vmatpush.msra.mxu0 0.0
    %324 = vmatpush.msra.mxu0 0.0
    %325 = vmatpush.msra.mxu0 0.0
    %326 = vmatpush.msra.mxu0 0.0
    %327 = vmatpush.msra.mxu0 %v198
    %328 = vmatpush.msra.mxu0 %v195
    %329 = vmatpush.msra.mxu0 %v192
    %330 = vmatpush.msra.mxu0 %v189
    %331 = vmatpush.msra.mxu0 %v186
    %332 = vmatpush.msra.mxu0 %v183
    %333 = vmatpush.msra.mxu0 %v180
    %334 = vmatpush.msra.mxu0 %v177
    %335 = vmatmul.f32.gmra.mxu0 %v277
    %v336 = vpop.f32.mrf.mxu0
    %v337 = vadd.f32 0.0, %v336
    %338 = vdwg.mxu0
    %v339 = vld [vmem:[#allocation2 + $0x8] sm:$0xff]
    %v340 = vadd.f32 %v339, %v297
    %v341 = vxor.u32 %v340, 2147483648
    %v342 = vmul.f32 %v341, 1.442695
    %v343 = vpow.pop %v342
    %v344 = vadd.f32 %v343, 1.0
    %v345 = vrcp.pop %v344
    %v346 = vmul.f32 %v344, %v345
    %v347 = vsub.f32 1.0, %v346
    %v348 = vmul.f32 %v345, %v347
    %v349 = vadd.f32 %v345, %v348
    %vm350 = vweird.f32 %v344
    %vm351 = vweird.f32 %v345
    %vm352 = vmor %vm350, %vm351
    %v353 = vsel %vm352, %v345, %v349
    %v354 = vand.u32 2147483647, %v344
    %vm355 = vcmp.eq.f32.partialorder %v354, 8.507059e+37
    %v356 = vand.u32 %v344, 2147483648
    %v357 = vor.u32 1.1754944e-38, %v356
    %v358 = vsel %vm355, %v357, %v353
    %v359 = vmul.f32 1.0, %v358
    %v360 = vadd.f32 %v297, %v245
    %362 = vrot.lane.b32.xlu0 %v360, 64
    %v363 = vpop.permute.xlu0 %362
    %v365 = vmul.f32 %v359, %v363
    %367 = vrot.lane.b32.xlu0 %v365, 64
    %v368 = vpop.permute.xlu0 %367
    %v370 = vadd.f32 %v339, %v368
    %v371 = vtanh.pop %v370
    %v372 = vsub.f32 %v269, %v371
    %374 = vrot.lane.b32.xlu0 %v372, 96
    %v375 = vpop.permute.xlu0 %374
    %v377 = vmul.f32 %v359, %v375
    %379 = vrot.lane.b32.xlu0 %v377, 32
    %v380 = vpop.permute.xlu0 %379
    %v382 = vadd.f32 %v371, %v380
    %383 = vrot.lane.b32.xlu0 %v167, 96
    %v384 = vpop.permute.xlu0 %383
    %v386 = vadd.f32 %v297, %v384
    %v387 = vadd.f32 %v317, %v384
    %389 = vrot.lane.b32.xlu0 %v317, 32
    %v390 = vpop.permute.xlu0 %389
    %v392 = vadd.f32 %v386, %v390
    %v393 = vadd.f32 %v387, %v390
    %v394 = vxor.u32 %v392, 2147483648
    %v395 = vxor.u32 %v393, 2147483648
    %v396 = vmul.f32 %v394, 1.442695
    %v397 = vpow.pop %v396
    %v398 = vmul.f32 %v395, 1.442695
    %v399 = vpow.pop %v398
    %v400 = vadd.f32 %v397, 1.0
    %v401 = vadd.f32 %v399, 1.0
    %v402 = vrcp.pop %v400
    %v403 = vmul.f32 %v400, %v402
    %v404 = vsub.f32 1.0, %v403
    %v405 = vmul.f32 %v402, %v404
    %v406 = vadd.f32 %v402, %v405
    %vm407 = vweird.f32 %v400
    %vm408 = vweird.f32 %v402
    %vm409 = vmor %vm407, %vm408
    %v410 = vsel %vm409, %v402, %v406
    %v411 = vand.u32 2147483647, %v400
    %vm412 = vcmp.eq.f32.partialorder %v411, 8.507059e+37
    %v413 = vand.u32 %v400, 2147483648
    %v414 = vor.u32 1.1754944e-38, %v413
    %v415 = vsel %vm412, %v414, %v410
    %v416 = vmul.f32 1.0, %v415
    %v417 = vrcp.pop %v401
    %v418 = vmul.f32 %v401, %v417
    %v419 = vsub.f32 1.0, %v418
    %v420 = vmul.f32 %v417, %v419
    %v421 = vadd.f32 %v417, %v420
    %vm422 = vweird.f32 %v401
    %vm423 = vweird.f32 %v417
    %vm424 = vmor %vm422, %vm423
    %v425 = vsel %vm424, %v417, %v421
    %v426 = vand.u32 2147483647, %v401
    %vm427 = vcmp.eq.f32.partialorder %v426, 8.507059e+37
    %v428 = vand.u32 %v401, 2147483648
    %v429 = vor.u32 1.1754944e-38, %v428
    %v430 = vsel %vm427, %v429, %v425
    %v431 = vmul.f32 1.0, %v430
    %v432 = vadd.f32 %v337, %v173
    %434 = vrot.lane.b32.xlu0 %v432, 96
    %v435 = vpop.permute.xlu0 %434
    %v437 = vmul.f32 %v416, %v435
    %439 = vrot.lane.b32.xlu0 %v437, 64
    %v440 = vpop.permute.xlu0 %439
    %v442 = vadd.f32 %v387, %v440
    %v443 = vtanh.pop %v442
    %v444 = vsub.f32 0.0, %v443
    %446 = vrot.lane.b32.xlu0 %v444, 96
    %v447 = vpop.permute.xlu0 %446
    %v449 = vmul.f32 %v431, %v447
    %451 = vrot.lane.b32.xlu0 %v449, 32
    %v452 = vpop.permute.xlu0 %451
    %v454 = vadd.f32 %v443, %v452
    %456 = vrot.lane.b32.xlu0 %v382, 64
    %v457 = vpop.permute.xlu0 %456
    %v459 = vsel %vm274, %v457, %v454
    %v461 = vsel %vm199, %v459, 0
    %463 = vmatpush.msra.mxu0 0.0
    %464 = vmatpush.msra.mxu0 0.0
    %465 = vmatpush.msra.mxu0 0.0
    %466 = vmatpush.msra.mxu0 0.0
    %467 = vmatpush.msra.mxu0 0.0
    %468 = vmatpush.msra.mxu0 0.0
    %469 = vmatpush.msra.mxu0 0.0
    %470 = vmatpush.msra.mxu0 0.0
    %471 = vmatpush.msra.mxu0 %v196
    %472 = vmatpush.msra.mxu0 %v193
    %473 = vmatpush.msra.mxu0 %v190
    %474 = vmatpush.msra.mxu0 %v187
    %475 = vmatpush.msra.mxu0 %v184
    %476 = vmatpush.msra.mxu0 %v181
    %477 = vmatpush.msra.mxu0 %v178
    %478 = vmatpush.msra.mxu0 %v175
    %479 = vmatmul.f32.gmra.mxu0 %v461
    %v480 = vpop.f32.mrf.mxu0
    %v481 = vadd.f32 0.0, %v480
    %482 = vdwg.mxu0
    %483 = vmatpush.msra.mxu0 0.0
    %484 = vmatpush.msra.mxu0 0.0
    %485 = vmatpush.msra.mxu0 0.0
    %486 = vmatpush.msra.mxu0 0.0
    %487 = vmatpush.msra.mxu0 0.0
    %488 = vmatpush.msra.mxu0 0.0
    %489 = vmatpush.msra.mxu0 0.0
    %490 = vmatpush.msra.mxu0 0.0
    %491 = vmatpush.msra.mxu0 %v197
    %492 = vmatpush.msra.mxu0 %v194
    %493 = vmatpush.msra.mxu0 %v191
    %494 = vmatpush.msra.mxu0 %v188
    %495 = vmatpush.msra.mxu0 %v185
    %496 = vmatpush.msra.mxu0 %v182
    %497 = vmatpush.msra.mxu0 %v179
    %498 = vmatpush.msra.mxu0 %v176
    %499 = vmatmul.f32.gmra.mxu0 %v461
    %v500 = vpop.f32.mrf.mxu0
    %v501 = vadd.f32 0.0, %v500
    %502 = vdwg.mxu0
    %503 = vmatpush.msra.mxu0 0.0
    %504 = vmatpush.msra.mxu0 0.0
    %505 = vmatpush.msra.mxu0 0.0
    %506 = vmatpush.msra.mxu0 0.0
    %507 = vmatpush.msra.mxu0 0.0
    %508 = vmatpush.msra.mxu0 0.0
    %509 = vmatpush.msra.mxu0 0.0
    %510 = vmatpush.msra.mxu0 0.0
    %511 = vmatpush.msra.mxu0 %v198
    %512 = vmatpush.msra.mxu0 %v195
    %513 = vmatpush.msra.mxu0 %v192
    %514 = vmatpush.msra.mxu0 %v189
    %515 = vmatpush.msra.mxu0 %v186
    %516 = vmatpush.msra.mxu0 %v183
    %517 = vmatpush.msra.mxu0 %v180
    %518 = vmatpush.msra.mxu0 %v177
    %519 = vmatmul.f32.gmra.mxu0 %v461
    %v520 = vpop.f32.mrf.mxu0
    %v521 = vadd.f32 0.0, %v520
    %522 = vdwg.mxu0
    %v523 = vld [vmem:[#allocation2 + $0x10] sm:$0xff]
    %v524 = vadd.f32 %v523, %v481
    %v525 = vxor.u32 %v524, 2147483648
    %v526 = vmul.f32 %v525, 1.442695
    %v527 = vpow.pop %v526
    %v528 = vadd.f32 %v527, 1.0
    %v529 = vrcp.pop %v528
    %v530 = vmul.f32 %v528, %v529
    %v531 = vsub.f32 1.0, %v530
    %v532 = vmul.f32 %v529, %v531
    %v533 = vadd.f32 %v529, %v532
    %vm534 = vweird.f32 %v528
    %vm535 = vweird.f32 %v529
    %vm536 = vmor %vm534, %vm535
    %v537 = vsel %vm536, %v529, %v533
    %v538 = vand.u32 2147483647, %v528
    %vm539 = vcmp.eq.f32.partialorder %v538, 8.507059e+37
    %v540 = vand.u32 %v528, 2147483648
    %v541 = vor.u32 1.1754944e-38, %v540
    %v542 = vsel %vm539, %v541, %v537
    %v543 = vmul.f32 1.0, %v542
    %v544 = vadd.f32 %v481, %v245
    %546 = vrot.lane.b32.xlu0 %v544, 64
    %v547 = vpop.permute.xlu0 %546
    %v549 = vmul.f32 %v543, %v547
    %551 = vrot.lane.b32.xlu0 %v549, 64
    %v552 = vpop.permute.xlu0 %551
    %v554 = vadd.f32 %v523, %v552
    %v555 = vtanh.pop %v554
    %v556 = vsub.f32 %v382, %v555
    %558 = vrot.lane.b32.xlu0 %v556, 96
    %v559 = vpop.permute.xlu0 %558
    %v561 = vmul.f32 %v543, %v559
    %563 = vrot.lane.b32.xlu0 %v561, 32
    %v564 = vpop.permute.xlu0 %563
    %v566 = vadd.f32 %v555, %v564
    %v567 = vadd.f32 %v481, %v384
    %v568 = vadd.f32 %v501, %v384
    %570 = vrot.lane.b32.xlu0 %v501, 32
    %v571 = vpop.permute.xlu0 %570
    %v573 = vadd.f32 %v567, %v571
    %v574 = vadd.f32 %v568, %v571
    %v575 = vxor.u32 %v573, 2147483648
    %v576 = vxor.u32 %v574, 2147483648
    %v577 = vmul.f32 %v575, 1.442695
    %v578 = vpow.pop %v577
    %v579 = vmul.f32 %v576, 1.442695
    %v580 = vpow.pop %v579
    %v581 = vadd.f32 %v578, 1.0
    %v582 = vadd.f32 %v580, 1.0
    %v583 = vrcp.pop %v581
    %v584 = vmul.f32 %v581, %v583
    %v585 = vsub.f32 1.0, %v584
    %v586 = vmul.f32 %v583, %v585
    %v587 = vadd.f32 %v583, %v586
    %vm588 = vweird.f32 %v581
    %vm589 = vweird.f32 %v583
    %vm590 = vmor %vm588, %vm589
    %v591 = vsel %vm590, %v583, %v587
    %v592 = vand.u32 2147483647, %v581
    %vm593 = vcmp.eq.f32.partialorder %v592, 8.507059e+37
    %v594 = vand.u32 %v581, 2147483648
    %v595 = vor.u32 1.1754944e-38, %v594
    %v596 = vsel %vm593, %v595, %v591
    %v597 = vmul.f32 1.0, %v596
    %v598 = vrcp.pop %v582
    %v599 = vmul.f32 %v582, %v598
    %v600 = vsub.f32 1.0, %v599
    %v601 = vmul.f32 %v598, %v600
    %v602 = vadd.f32 %v598, %v601
    %vm603 = vweird.f32 %v582
    %vm604 = vweird.f32 %v598
    %vm605 = vmor %vm603, %vm604
    %v606 = vsel %vm605, %v598, %v602
    %v607 = vand.u32 2147483647, %v582
    %vm608 = vcmp.eq.f32.partialorder %v607, 8.507059e+37
    %v609 = vand.u32 %v582, 2147483648
    %v610 = vor.u32 1.1754944e-38, %v609
    %v611 = vsel %vm608, %v610, %v606
    %v612 = vmul.f32 1.0, %v611
    %v613 = vadd.f32 %v521, %v173
    %615 = vrot.lane.b32.xlu0 %v613, 96
    %v616 = vpop.permute.xlu0 %615
    %v618 = vmul.f32 %v597, %v616
    %620 = vrot.lane.b32.xlu0 %v618, 64
    %v621 = vpop.permute.xlu0 %620
    %v623 = vadd.f32 %v568, %v621
    %v624 = vtanh.pop %v623
    %v625 = vsub.f32 %v454, %v624
    %627 = vrot.lane.b32.xlu0 %v625, 96
    %v628 = vpop.permute.xlu0 %627
    %v630 = vmul.f32 %v612, %v628
    %632 = vrot.lane.b32.xlu0 %v630, 32
    %v633 = vpop.permute.xlu0 %632
    %v635 = vadd.f32 %v624, %v633
    %637 = vrot.lane.b32.xlu0 %v566, 64
    %v638 = vpop.permute.xlu0 %637
    %v640 = vsel %vm274, %v638, %v635
    %v642 = vsel %vm199, %v640, 0
    %644 = vmatpush.msra.mxu0 0.0
    %645 = vmatpush.msra.mxu0 0.0
    %646 = vmatpush.msra.mxu0 0.0
    %647 = vmatpush.msra.mxu0 0.0
    %648 = vmatpush.msra.mxu0 0.0
    %649 = vmatpush.msra.mxu0 0.0
    %650 = vmatpush.msra.mxu0 0.0
    %651 = vmatpush.msra.mxu0 0.0
    %652 = vmatpush.msra.mxu0 %v196
    %653 = vmatpush.msra.mxu0 %v193
    %654 = vmatpush.msra.mxu0 %v190
    %655 = vmatpush.msra.mxu0 %v187
    %656 = vmatpush.msra.mxu0 %v184
    %657 = vmatpush.msra.mxu0 %v181
    %658 = vmatpush.msra.mxu0 %v178
    %659 = vmatpush.msra.mxu0 %v175
    %660 = vmatmul.f32.gmra.mxu0 %v642
    %v661 = vpop.f32.mrf.mxu0
    %v662 = vadd.f32 0.0, %v661
    %663 = vdwg.mxu0
    %664 = vmatpush.msra.mxu0 0.0
    %665 = vmatpush.msra.mxu0 0.0
    %666 = vmatpush.msra.mxu0 0.0
    %667 = vmatpush.msra.mxu0 0.0
    %668 = vmatpush.msra.mxu0 0.0
    %669 = vmatpush.msra.mxu0 0.0
    %670 = vmatpush.msra.mxu0 0.0
    %671 = vmatpush.msra.mxu0 0.0
    %672 = vmatpush.msra.mxu0 %v197
    %673 = vmatpush.msra.mxu0 %v194
    %674 = vmatpush.msra.mxu0 %v191
    %675 = vmatpush.msra.mxu0 %v188
    %676 = vmatpush.msra.mxu0 %v185
    %677 = vmatpush.msra.mxu0 %v182
    %678 = vmatpush.msra.mxu0 %v179
    %679 = vmatpush.msra.mxu0 %v176
    %680 = vmatmul.f32.gmra.mxu0 %v642
    %v681 = vpop.f32.mrf.mxu0
    %v682 = vadd.f32 0.0, %v681
    %683 = vdwg.mxu0
    %684 = vmatpush.msra.mxu0 0.0
    %685 = vmatpush.msra.mxu0 0.0
    %686 = vmatpush.msra.mxu0 0.0
    %687 = vmatpush.msra.mxu0 0.0
    %688 = vmatpush.msra.mxu0 0.0
    %689 = vmatpush.msra.mxu0 0.0
    %690 = vmatpush.msra.mxu0 0.0
    %691 = vmatpush.msra.mxu0 0.0
    %692 = vmatpush.msra.mxu0 %v198
    %693 = vmatpush.msra.mxu0 %v195
    %694 = vmatpush.msra.mxu0 %v192
    %695 = vmatpush.msra.mxu0 %v189
    %696 = vmatpush.msra.mxu0 %v186
    %697 = vmatpush.msra.mxu0 %v183
    %698 = vmatpush.msra.mxu0 %v180
    %699 = vmatpush.msra.mxu0 %v177
    %700 = vmatmul.f32.gmra.mxu0 %v642
    %v701 = vpop.f32.mrf.mxu0
    %v702 = vadd.f32 0.0, %v701
    %703 = vdwg.mxu0
    %v704 = vld [vmem:[#allocation2 + $0x18] sm:$0xff]
    %v705 = vadd.f32 %v704, %v662
    %v706 = vxor.u32 %v705, 2147483648
    %v707 = vmul.f32 %v706, 1.442695
    %v708 = vpow.pop %v707
    %v709 = vadd.f32 %v708, 1.0
    %v710 = vrcp.pop %v709
    %v711 = vmul.f32 %v709, %v710
    %v712 = vsub.f32 1.0, %v711
    %v713 = vmul.f32 %v710, %v712
    %v714 = vadd.f32 %v710, %v713
    %vm715 = vweird.f32 %v709
    %vm716 = vweird.f32 %v710
    %vm717 = vmor %vm715, %vm716
    %v718 = vsel %vm717, %v710, %v714
    %v719 = vand.u32 2147483647, %v709
    %vm720 = vcmp.eq.f32.partialorder %v719, 8.507059e+37
    %v721 = vand.u32 %v709, 2147483648
    %v722 = vor.u32 1.1754944e-38, %v721
    %v723 = vsel %vm720, %v722, %v718
    %v724 = vmul.f32 1.0, %v723
    %v725 = vadd.f32 %v662, %v245
    %727 = vrot.lane.b32.xlu0 %v725, 64
    %v728 = vpop.permute.xlu0 %727
    %v730 = vmul.f32 %v724, %v728
    %732 = vrot.lane.b32.xlu0 %v730, 64
    %v733 = vpop.permute.xlu0 %732
    %v735 = vadd.f32 %v704, %v733
    %v736 = vtanh.pop %v735
    %v737 = vsub.f32 %v566, %v736
    %739 = vrot.lane.b32.xlu0 %v737, 96
    %v740 = vpop.permute.xlu0 %739
    %v742 = vmul.f32 %v724, %v740
    %744 = vrot.lane.b32.xlu0 %v742, 32
    %v745 = vpop.permute.xlu0 %744
    %v747 = vadd.f32 %v736, %v745
    %v748 = vadd.f32 %v662, %v384
    %v749 = vadd.f32 %v682, %v384
    %751 = vrot.lane.b32.xlu0 %v682, 32
    %v752 = vpop.permute.xlu0 %751
    %v754 = vadd.f32 %v748, %v752
    %v755 = vadd.f32 %v749, %v752
    %v756 = vxor.u32 %v754, 2147483648
    %v757 = vxor.u32 %v755, 2147483648
    %v758 = vmul.f32 %v756, 1.442695
    %v759 = vpow.pop %v758
    %v760 = vmul.f32 %v757, 1.442695
    %v761 = vpow.pop %v760
    %v762 = vadd.f32 %v759, 1.0
    %v763 = vadd.f32 %v761, 1.0
    %v764 = vrcp.pop %v762
    %v765 = vmul.f32 %v762, %v764
    %v766 = vsub.f32 1.0, %v765
    %v767 = vmul.f32 %v764, %v766
    %v768 = vadd.f32 %v764, %v767
    %vm769 = vweird.f32 %v762
    %vm770 = vweird.f32 %v764
    %vm771 = vmor %vm769, %vm770
    %v772 = vsel %vm771, %v764, %v768
    %v773 = vand.u32 2147483647, %v762
    %vm774 = vcmp.eq.f32.partialorder %v773, 8.507059e+37
    %v775 = vand.u32 %v762, 2147483648
    %v776 = vor.u32 1.1754944e-38, %v775
    %v777 = vsel %vm774, %v776, %v772
    %v778 = vmul.f32 1.0, %v777
    %v779 = vrcp.pop %v763
    %v780 = vmul.f32 %v763, %v779
    %v781 = vsub.f32 1.0, %v780
    %v782 = vmul.f32 %v779, %v781
    %v783 = vadd.f32 %v779, %v782
    %vm784 = vweird.f32 %v763
    %vm785 = vweird.f32 %v779
    %vm786 = vmor %vm784, %vm785
    %v787 = vsel %vm786, %v779, %v783
    %v788 = vand.u32 2147483647, %v763
    %vm789 = vcmp.eq.f32.partialorder %v788, 8.507059e+37
    %v790 = vand.u32 %v763, 2147483648
    %v791 = vor.u32 1.1754944e-38, %v790
    %v792 = vsel %vm789, %v791, %v787
    %v793 = vmul.f32 1.0, %v792
    %v794 = vadd.f32 %v702, %v173
    %796 = vrot.lane.b32.xlu0 %v794, 96
    %v797 = vpop.permute.xlu0 %796
    %v799 = vmul.f32 %v778, %v797
    %801 = vrot.lane.b32.xlu0 %v799, 64
    %v802 = vpop.permute.xlu0 %801
    %v804 = vadd.f32 %v749, %v802
    %v805 = vtanh.pop %v804
    %v806 = vsub.f32 %v635, %v805
    %808 = vrot.lane.b32.xlu0 %v806, 96
    %v809 = vpop.permute.xlu0 %808
    %v811 = vmul.f32 %v793, %v809
    %813 = vrot.lane.b32.xlu0 %v811, 32
    %v814 = vpop.permute.xlu0 %813
    %v816 = vadd.f32 %v805, %v814
    %818 = vrot.lane.b32.xlu0 %v747, 64
    %v819 = vpop.permute.xlu0 %818
    %v821 = vsel %vm274, %v819, %v816
    %v823 = vsel %vm199, %v821, 0
    %825 = vmatpush.msra.mxu0 0.0
    %826 = vmatpush.msra.mxu0 0.0
    %827 = vmatpush.msra.mxu0 0.0
    %828 = vmatpush.msra.mxu0 0.0
    %829 = vmatpush.msra.mxu0 0.0
    %830 = vmatpush.msra.mxu0 0.0
    %831 = vmatpush.msra.mxu0 0.0
    %832 = vmatpush.msra.mxu0 0.0
    %833 = vmatpush.msra.mxu0 %v196
    %834 = vmatpush.msra.mxu0 %v193
    %835 = vmatpush.msra.mxu0 %v190
    %836 = vmatpush.msra.mxu0 %v187
    %837 = vmatpush.msra.mxu0 %v184
    %838 = vmatpush.msra.mxu0 %v181
    %839 = vmatpush.msra.mxu0 %v178
    %840 = vmatpush.msra.mxu0 %v175
    %841 = vmatmul.f32.gmra.mxu0 %v823
    %v842 = vpop.f32.mrf.mxu0
    %v843 = vadd.f32 0.0, %v842
    %844 = vdwg.mxu0
    %845 = vmatpush.msra.mxu0 0.0
    %846 = vmatpush.msra.mxu0 0.0
    %847 = vmatpush.msra.mxu0 0.0
    %848 = vmatpush.msra.mxu0 0.0
    %849 = vmatpush.msra.mxu0 0.0
    %850 = vmatpush.msra.mxu0 0.0
    %851 = vmatpush.msra.mxu0 0.0
    %852 = vmatpush.msra.mxu0 0.0
    %853 = vmatpush.msra.mxu0 %v197
    %854 = vmatpush.msra.mxu0 %v194
    %855 = vmatpush.msra.mxu0 %v191
    %856 = vmatpush.msra.mxu0 %v188
    %857 = vmatpush.msra.mxu0 %v185
    %858 = vmatpush.msra.mxu0 %v182
    %859 = vmatpush.msra.mxu0 %v179
    %860 = vmatpush.msra.mxu0 %v176
    %861 = vmatmul.f32.gmra.mxu0 %v823
    %v862 = vpop.f32.mrf.mxu0
    %v863 = vadd.f32 0.0, %v862
    %864 = vdwg.mxu0
    %865 = vmatpush.msra.mxu0 0.0
    %866 = vmatpush.msra.mxu0 0.0
    %867 = vmatpush.msra.mxu0 0.0
    %868 = vmatpush.msra.mxu0 0.0
    %869 = vmatpush.msra.mxu0 0.0
    %870 = vmatpush.msra.mxu0 0.0
    %871 = vmatpush.msra.mxu0 0.0
    %872 = vmatpush.msra.mxu0 0.0
    %873 = vmatpush.msra.mxu0 %v198
    %874 = vmatpush.msra.mxu0 %v195
    %875 = vmatpush.msra.mxu0 %v192
    %876 = vmatpush.msra.mxu0 %v189
    %877 = vmatpush.msra.mxu0 %v186
    %878 = vmatpush.msra.mxu0 %v183
    %879 = vmatpush.msra.mxu0 %v180
    %880 = vmatpush.msra.mxu0 %v177
    %881 = vmatmul.f32.gmra.mxu0 %v823
    %v882 = vpop.f32.mrf.mxu0
    %v883 = vadd.f32 0.0, %v882
    %884 = vdwg.mxu0
    %v885 = vld [vmem:[#allocation2 + $0x20] sm:$0xff]
    %v886 = vadd.f32 %v885, %v843
    %v887 = vxor.u32 %v886, 2147483648
    %v888 = vmul.f32 %v887, 1.442695
    %v889 = vpow.pop %v888
    %v890 = vadd.f32 %v889, 1.0
    %v891 = vrcp.pop %v890
    %v892 = vmul.f32 %v890, %v891
    %v893 = vsub.f32 1.0, %v892
    %v894 = vmul.f32 %v891, %v893
    %v895 = vadd.f32 %v891, %v894
    %vm896 = vweird.f32 %v890
    %vm897 = vweird.f32 %v891
    %vm898 = vmor %vm896, %vm897
    %v899 = vsel %vm898, %v891, %v895
    %v900 = vand.u32 2147483647, %v890
    %vm901 = vcmp.eq.f32.partialorder %v900, 8.507059e+37
    %v902 = vand.u32 %v890, 2147483648
    %v903 = vor.u32 1.1754944e-38, %v902
    %v904 = vsel %vm901, %v903, %v899
    %v905 = vmul.f32 1.0, %v904
    %v906 = vadd.f32 %v843, %v245
    %908 = vrot.lane.b32.xlu0 %v906, 64
    %v909 = vpop.permute.xlu0 %908
    %v911 = vmul.f32 %v905, %v909
    %913 = vrot.lane.b32.xlu0 %v911, 64
    %v914 = vpop.permute.xlu0 %913
    %v916 = vadd.f32 %v885, %v914
    %v917 = vtanh.pop %v916
    %v918 = vsub.f32 %v747, %v917
    %920 = vrot.lane.b32.xlu0 %v918, 96
    %v921 = vpop.permute.xlu0 %920
    %v923 = vmul.f32 %v905, %v921
    %925 = vrot.lane.b32.xlu0 %v923, 32
    %v926 = vpop.permute.xlu0 %925
    %v928 = vadd.f32 %v917, %v926
    %v929 = vadd.f32 %v843, %v384
    %v930 = vadd.f32 %v863, %v384
    %932 = vrot.lane.b32.xlu0 %v863, 32
    %v933 = vpop.permute.xlu0 %932
    %v935 = vadd.f32 %v929, %v933
    %v936 = vadd.f32 %v930, %v933
    %v937 = vxor.u32 %v935, 2147483648
    %v938 = vxor.u32 %v936, 2147483648
    %v939 = vmul.f32 %v937, 1.442695
    %v940 = vpow.pop %v939
    %v941 = vmul.f32 %v938, 1.442695
    %v942 = vpow.pop %v941
    %v943 = vadd.f32 %v940, 1.0
    %v944 = vadd.f32 %v942, 1.0
    %v945 = vrcp.pop %v943
    %v946 = vmul.f32 %v943, %v945
    %v947 = vsub.f32 1.0, %v946
    %v948 = vmul.f32 %v945, %v947
    %v949 = vadd.f32 %v945, %v948
    %vm950 = vweird.f32 %v943
    %vm951 = vweird.f32 %v945
    %vm952 = vmor %vm950, %vm951
    %v953 = vsel %vm952, %v945, %v949
    %v954 = vand.u32 2147483647, %v943
    %vm955 = vcmp.eq.f32.partialorder %v954, 8.507059e+37
    %v956 = vand.u32 %v943, 2147483648
    %v957 = vor.u32 1.1754944e-38, %v956
    %v958 = vsel %vm955, %v957, %v953
    %v959 = vmul.f32 1.0, %v958
    %v960 = vrcp.pop %v944
    %v961 = vmul.f32 %v944, %v960
    %v962 = vsub.f32 1.0, %v961
    %v963 = vmul.f32 %v960, %v962
    %v964 = vadd.f32 %v960, %v963
    %vm965 = vweird.f32 %v944
    %vm966 = vweird.f32 %v960
    %vm967 = vmor %vm965, %vm966
    %v968 = vsel %vm967, %v960, %v964
    %v969 = vand.u32 2147483647, %v944
    %vm970 = vcmp.eq.f32.partialorder %v969, 8.507059e+37
    %v971 = vand.u32 %v944, 2147483648
    %v972 = vor.u32 1.1754944e-38, %v971
    %v973 = vsel %vm970, %v972, %v968
    %v974 = vmul.f32 1.0, %v973
    %v975 = vadd.f32 %v883, %v173
    %977 = vrot.lane.b32.xlu0 %v975, 96
    %v978 = vpop.permute.xlu0 %977
    %v980 = vmul.f32 %v959, %v978
    %982 = vrot.lane.b32.xlu0 %v980, 64
    %v983 = vpop.permute.xlu0 %982
    %v985 = vadd.f32 %v930, %v983
    %v986 = vtanh.pop %v985
    %v987 = vsub.f32 %v816, %v986
    %989 = vrot.lane.b32.xlu0 %v987, 96
    %v990 = vpop.permute.xlu0 %989
    %v992 = vmul.f32 %v974, %v990
    %994 = vrot.lane.b32.xlu0 %v992, 32
    %v995 = vpop.permute.xlu0 %994
    %v997 = vadd.f32 %v986, %v995
    %999 = vrot.lane.b32.xlu0 %v928, 64
    %v1000 = vpop.permute.xlu0 %999
    %v1002 = vsel %vm274, %v1000, %v997
    %v1004 = vsel %vm199, %v1002, 0
    %1006 = vmatpush.msra.mxu0 0.0
    %1007 = vmatpush.msra.mxu0 0.0
    %1008 = vmatpush.msra.mxu0 0.0
    %1009 = vmatpush.msra.mxu0 0.0
    %1010 = vmatpush.msra.mxu0 0.0
    %1011 = vmatpush.msra.mxu0 0.0
    %1012 = vmatpush.msra.mxu0 0.0
    %1013 = vmatpush.msra.mxu0 0.0
    %1014 = vmatpush.msra.mxu0 %v196
    %1015 = vmatpush.msra.mxu0 %v193
    %1016 = vmatpush.msra.mxu0 %v190
    %1017 = vmatpush.msra.mxu0 %v187
    %1018 = vmatpush.msra.mxu0 %v184
    %1019 = vmatpush.msra.mxu0 %v181
    %1020 = vmatpush.msra.mxu0 %v178
    %1021 = vmatpush.msra.mxu0 %v175
    %1022 = vmatmul.f32.gmra.mxu0 %v1004
    %v1023 = vpop.f32.mrf.mxu0
    %v1024 = vadd.f32 0.0, %v1023
    %1025 = vdwg.mxu0
    %1026 = vmatpush.msra.mxu0 0.0
    %1027 = vmatpush.msra.mxu0 0.0
    %1028 = vmatpush.msra.mxu0 0.0
    %1029 = vmatpush.msra.mxu0 0.0
    %1030 = vmatpush.msra.mxu0 0.0
    %1031 = vmatpush.msra.mxu0 0.0
    %1032 = vmatpush.msra.mxu0 0.0
    %1033 = vmatpush.msra.mxu0 0.0
    %1034 = vmatpush.msra.mxu0 %v197
    %1035 = vmatpush.msra.mxu0 %v194
    %1036 = vmatpush.msra.mxu0 %v191
    %1037 = vmatpush.msra.mxu0 %v188
    %1038 = vmatpush.msra.mxu0 %v185
    %1039 = vmatpush.msra.mxu0 %v182
    %1040 = vmatpush.msra.mxu0 %v179
    %1041 = vmatpush.msra.mxu0 %v176
    %1042 = vmatmul.f32.gmra.mxu0 %v1004
    %v1043 = vpop.f32.mrf.mxu0
    %v1044 = vadd.f32 0.0, %v1043
    %1045 = vdwg.mxu0
    %1046 = vmatpush.msra.mxu0 0.0
    %1047 = vmatpush.msra.mxu0 0.0
    %1048 = vmatpush.msra.mxu0 0.0
    %1049 = vmatpush.msra.mxu0 0.0
    %1050 = vmatpush.msra.mxu0 0.0
    %1051 = vmatpush.msra.mxu0 0.0
    %1052 = vmatpush.msra.mxu0 0.0
    %1053 = vmatpush.msra.mxu0 0.0
    %1054 = vmatpush.msra.mxu0 %v198
    %1055 = vmatpush.msra.mxu0 %v195
    %1056 = vmatpush.msra.mxu0 %v192
    %1057 = vmatpush.msra.mxu0 %v189
    %1058 = vmatpush.msra.mxu0 %v186
    %1059 = vmatpush.msra.mxu0 %v183
    %1060 = vmatpush.msra.mxu0 %v180
    %1061 = vmatpush.msra.mxu0 %v177
    %1062 = vmatmul.f32.gmra.mxu0 %v1004
    %v1063 = vpop.f32.mrf.mxu0
    %v1064 = vadd.f32 0.0, %v1063
    %1065 = vdwg.mxu0
    %v1066 = vld [vmem:[#allocation2 + $0x28] sm:$0xff]
    %v1067 = vadd.f32 %v1066, %v1024
    %v1068 = vxor.u32 %v1067, 2147483648
    %v1069 = vmul.f32 %v1068, 1.442695
    %v1070 = vpow.pop %v1069
    %v1071 = vadd.f32 %v1070, 1.0
    %v1072 = vrcp.pop %v1071
    %v1073 = vmul.f32 %v1071, %v1072
    %v1074 = vsub.f32 1.0, %v1073
    %v1075 = vmul.f32 %v1072, %v1074
    %v1076 = vadd.f32 %v1072, %v1075
    %vm1077 = vweird.f32 %v1071
    %vm1078 = vweird.f32 %v1072
    %vm1079 = vmor %vm1077, %vm1078
    %v1080 = vsel %vm1079, %v1072, %v1076
    %v1081 = vand.u32 2147483647, %v1071
    %vm1082 = vcmp.eq.f32.partialorder %v1081, 8.507059e+37
    %v1083 = vand.u32 %v1071, 2147483648
    %v1084 = vor.u32 1.1754944e-38, %v1083
    %v1085 = vsel %vm1082, %v1084, %v1080
    %v1086 = vmul.f32 1.0, %v1085
    %v1087 = vadd.f32 %v1024, %v245
    %1089 = vrot.lane.b32.xlu0 %v1087, 64
    %v1090 = vpop.permute.xlu0 %1089
    %v1092 = vmul.f32 %v1086, %v1090
    %1094 = vrot.lane.b32.xlu0 %v1092, 64
    %v1095 = vpop.permute.xlu0 %1094
    %v1097 = vadd.f32 %v1066, %v1095
    %v1098 = vtanh.pop %v1097
    %v1099 = vsub.f32 %v928, %v1098
    %1101 = vrot.lane.b32.xlu0 %v1099, 96
    %v1102 = vpop.permute.xlu0 %1101
    %v1104 = vmul.f32 %v1086, %v1102
    %1106 = vrot.lane.b32.xlu0 %v1104, 32
    %v1107 = vpop.permute.xlu0 %1106
    %v1109 = vadd.f32 %v1098, %v1107
    %v1110 = vadd.f32 %v1024, %v384
    %v1111 = vadd.f32 %v1044, %v384
    %1113 = vrot.lane.b32.xlu0 %v1044, 32
    %v1114 = vpop.permute.xlu0 %1113
    %v1116 = vadd.f32 %v1110, %v1114
    %v1117 = vadd.f32 %v1111, %v1114
    %v1118 = vxor.u32 %v1116, 2147483648
    %v1119 = vxor.u32 %v1117, 2147483648
    %v1120 = vmul.f32 %v1118, 1.442695
    %v1121 = vpow.pop %v1120
    %v1122 = vmul.f32 %v1119, 1.442695
    %v1123 = vpow.pop %v1122
    %v1124 = vadd.f32 %v1121, 1.0
    %v1125 = vadd.f32 %v1123, 1.0
    %v1126 = vrcp.pop %v1124
    %v1127 = vmul.f32 %v1124, %v1126
    %v1128 = vsub.f32 1.0, %v1127
    %v1129 = vmul.f32 %v1126, %v1128
    %v1130 = vadd.f32 %v1126, %v1129
    %vm1131 = vweird.f32 %v1124
    %vm1132 = vweird.f32 %v1126
    %vm1133 = vmor %vm1131, %vm1132
    %v1134 = vsel %vm1133, %v1126, %v1130
    %v1135 = vand.u32 2147483647, %v1124
    %vm1136 = vcmp.eq.f32.partialorder %v1135, 8.507059e+37
    %v1137 = vand.u32 %v1124, 2147483648
    %v1138 = vor.u32 1.1754944e-38, %v1137
    %v1139 = vsel %vm1136, %v1138, %v1134
    %v1140 = vmul.f32 1.0, %v1139
    %v1141 = vrcp.pop %v1125
    %v1142 = vmul.f32 %v1125, %v1141
    %v1143 = vsub.f32 1.0, %v1142
    %v1144 = vmul.f32 %v1141, %v1143
    %v1145 = vadd.f32 %v1141, %v1144
    %vm1146 = vweird.f32 %v1125
    %vm1147 = vweird.f32 %v1141
    %vm1148 = vmor %vm1146, %vm1147
    %v1149 = vsel %vm1148, %v1141, %v1145
    %v1150 = vand.u32 2147483647, %v1125
    %vm1151 = vcmp.eq.f32.partialorder %v1150, 8.507059e+37
    %v1152 = vand.u32 %v1125, 2147483648
    %v1153 = vor.u32 1.1754944e-38, %v1152
    %v1154 = vsel %vm1151, %v1153, %v1149
    %v1155 = vmul.f32 1.0, %v1154
    %v1156 = vadd.f32 %v1064, %v173
    %1158 = vrot.lane.b32.xlu0 %v1156, 96
    %v1159 = vpop.permute.xlu0 %1158
    %v1161 = vmul.f32 %v1140, %v1159
    %1163 = vrot.lane.b32.xlu0 %v1161, 64
    %v1164 = vpop.permute.xlu0 %1163
    %v1166 = vadd.f32 %v1111, %v1164
    %v1167 = vtanh.pop %v1166
    %v1168 = vsub.f32 %v997, %v1167
    %1170 = vrot.lane.b32.xlu0 %v1168, 96
    %v1171 = vpop.permute.xlu0 %1170
    %v1173 = vmul.f32 %v1155, %v1171
    %1175 = vrot.lane.b32.xlu0 %v1173, 32
    %v1176 = vpop.permute.xlu0 %1175
    %v1178 = vadd.f32 %v1167, %v1176
    %1180 = vrot.lane.b32.xlu0 %v1109, 64
    %v1181 = vpop.permute.xlu0 %1180
    %v1183 = vsel %vm274, %v1181, %v1178
    %v1185 = vsel %vm199, %v1183, 0
    %1187 = vmatpush.msra.mxu0 0.0
    %1188 = vmatpush.msra.mxu0 0.0
    %1189 = vmatpush.msra.mxu0 0.0
    %1190 = vmatpush.msra.mxu0 0.0
    %1191 = vmatpush.msra.mxu0 0.0
    %1192 = vmatpush.msra.mxu0 0.0
    %1193 = vmatpush.msra.mxu0 0.0
    %1194 = vmatpush.msra.mxu0 0.0
    %1195 = vmatpush.msra.mxu0 %v196
    %1196 = vmatpush.msra.mxu0 %v193
    %1197 = vmatpush.msra.mxu0 %v190
    %1198 = vmatpush.msra.mxu0 %v187
    %1199 = vmatpush.msra.mxu0 %v184
    %1200 = vmatpush.msra.mxu0 %v181
    %1201 = vmatpush.msra.mxu0 %v178
    %1202 = vmatpush.msra.mxu0 %v175
    %1203 = vmatmul.f32.gmra.mxu0 %v1185
    %v1204 = vpop.f32.mrf.mxu0
    %v1205 = vadd.f32 0.0, %v1204
    %1206 = vdwg.mxu0
    %1207 = vmatpush.msra.mxu0 0.0
    %1208 = vmatpush.msra.mxu0 0.0
    %1209 = vmatpush.msra.mxu0 0.0
    %1210 = vmatpush.msra.mxu0 0.0
    %1211 = vmatpush.msra.mxu0 0.0
    %1212 = vmatpush.msra.mxu0 0.0
    %1213 = vmatpush.msra.mxu0 0.0
    %1214 = vmatpush.msra.mxu0 0.0
    %1215 = vmatpush.msra.mxu0 %v197
    %1216 = vmatpush.msra.mxu0 %v194
    %1217 = vmatpush.msra.mxu0 %v191
    %1218 = vmatpush.msra.mxu0 %v188
    %1219 = vmatpush.msra.mxu0 %v185
    %1220 = vmatpush.msra.mxu0 %v182
    %1221 = vmatpush.msra.mxu0 %v179
    %1222 = vmatpush.msra.mxu0 %v176
    %1223 = vmatmul.f32.gmra.mxu0 %v1185
    %v1224 = vpop.f32.mrf.mxu0
    %v1225 = vadd.f32 0.0, %v1224
    %1226 = vdwg.mxu0
    %1227 = vmatpush.msra.mxu0 0.0
    %1228 = vmatpush.msra.mxu0 0.0
    %1229 = vmatpush.msra.mxu0 0.0
    %1230 = vmatpush.msra.mxu0 0.0
    %1231 = vmatpush.msra.mxu0 0.0
    %1232 = vmatpush.msra.mxu0 0.0
    %1233 = vmatpush.msra.mxu0 0.0
    %1234 = vmatpush.msra.mxu0 0.0
    %1235 = vmatpush.msra.mxu0 %v198
    %1236 = vmatpush.msra.mxu0 %v195
    %1237 = vmatpush.msra.mxu0 %v192
    %1238 = vmatpush.msra.mxu0 %v189
    %1239 = vmatpush.msra.mxu0 %v186
    %1240 = vmatpush.msra.mxu0 %v183
    %1241 = vmatpush.msra.mxu0 %v180
    %1242 = vmatpush.msra.mxu0 %v177
    %1243 = vmatmul.f32.gmra.mxu0 %v1185
    %v1244 = vpop.f32.mrf.mxu0
    %v1245 = vadd.f32 0.0, %v1244
    %1246 = vdwg.mxu0
    %v1247 = vld [vmem:[#allocation2 + $0x30] sm:$0xff]
    %v1248 = vadd.f32 %v1247, %v1205
    %v1249 = vxor.u32 %v1248, 2147483648
    %v1250 = vmul.f32 %v1249, 1.442695
    %v1251 = vpow.pop %v1250
    %v1252 = vadd.f32 %v1251, 1.0
    %v1253 = vrcp.pop %v1252
    %v1254 = vmul.f32 %v1252, %v1253
    %v1255 = vsub.f32 1.0, %v1254
    %v1256 = vmul.f32 %v1253, %v1255
    %v1257 = vadd.f32 %v1253, %v1256
    %vm1258 = vweird.f32 %v1252
    %vm1259 = vweird.f32 %v1253
    %vm1260 = vmor %vm1258, %vm1259
    %v1261 = vsel %vm1260, %v1253, %v1257
    %v1262 = vand.u32 2147483647, %v1252
    %vm1263 = vcmp.eq.f32.partialorder %v1262, 8.507059e+37
    %v1264 = vand.u32 %v1252, 2147483648
    %v1265 = vor.u32 1.1754944e-38, %v1264
    %v1266 = vsel %vm1263, %v1265, %v1261
    %v1267 = vmul.f32 1.0, %v1266
    %v1268 = vadd.f32 %v1205, %v245
    %1270 = vrot.lane.b32.xlu0 %v1268, 64
    %v1271 = vpop.permute.xlu0 %1270
    %v1273 = vmul.f32 %v1267, %v1271
    %1275 = vrot.lane.b32.xlu0 %v1273, 64
    %v1276 = vpop.permute.xlu0 %1275
    %v1278 = vadd.f32 %v1247, %v1276
    %v1279 = vtanh.pop %v1278
    %v1280 = vsub.f32 %v1109, %v1279
    %1282 = vrot.lane.b32.xlu0 %v1280, 96
    %v1283 = vpop.permute.xlu0 %1282
    %v1285 = vmul.f32 %v1267, %v1283
    %1287 = vrot.lane.b32.xlu0 %v1285, 32
    %v1288 = vpop.permute.xlu0 %1287
    %v1290 = vadd.f32 %v1279, %v1288
    %v1291 = vadd.f32 %v1205, %v384
    %v1292 = vadd.f32 %v1225, %v384
    %1294 = vrot.lane.b32.xlu0 %v1225, 32
    %v1295 = vpop.permute.xlu0 %1294
    %v1297 = vadd.f32 %v1291, %v1295
    %v1298 = vadd.f32 %v1292, %v1295
    %v1299 = vxor.u32 %v1297, 2147483648
    %v1300 = vxor.u32 %v1298, 2147483648
    %v1301 = vmul.f32 %v1299, 1.442695
    %v1302 = vpow.pop %v1301
    %v1303 = vmul.f32 %v1300, 1.442695
    %v1304 = vpow.pop %v1303
    %v1305 = vadd.f32 %v1302, 1.0
    %v1306 = vadd.f32 %v1304, 1.0
    %v1307 = vrcp.pop %v1305
    %v1308 = vmul.f32 %v1305, %v1307
    %v1309 = vsub.f32 1.0, %v1308
    %v1310 = vmul.f32 %v1307, %v1309
    %v1311 = vadd.f32 %v1307, %v1310
    %vm1312 = vweird.f32 %v1305
    %vm1313 = vweird.f32 %v1307
    %vm1314 = vmor %vm1312, %vm1313
    %v1315 = vsel %vm1314, %v1307, %v1311
    %v1316 = vand.u32 2147483647, %v1305
    %vm1317 = vcmp.eq.f32.partialorder %v1316, 8.507059e+37
    %v1318 = vand.u32 %v1305, 2147483648
    %v1319 = vor.u32 1.1754944e-38, %v1318
    %v1320 = vsel %vm1317, %v1319, %v1315
    %v1321 = vmul.f32 1.0, %v1320
    %v1322 = vrcp.pop %v1306
    %v1323 = vmul.f32 %v1306, %v1322
    %v1324 = vsub.f32 1.0, %v1323
    %v1325 = vmul.f32 %v1322, %v1324
    %v1326 = vadd.f32 %v1322, %v1325
    %vm1327 = vweird.f32 %v1306
    %vm1328 = vweird.f32 %v1322
    %vm1329 = vmor %vm1327, %vm1328
    %v1330 = vsel %vm1329, %v1322, %v1326
    %v1331 = vand.u32 2147483647, %v1306
    %vm1332 = vcmp.eq.f32.partialorder %v1331, 8.507059e+37
    %v1333 = vand.u32 %v1306, 2147483648
    %v1334 = vor.u32 1.1754944e-38, %v1333
    %v1335 = vsel %vm1332, %v1334, %v1330
    %v1336 = vmul.f32 1.0, %v1335
    %v1337 = vadd.f32 %v1245, %v173
    %1339 = vrot.lane.b32.xlu0 %v1337, 96
    %v1340 = vpop.permute.xlu0 %1339
    %v1342 = vmul.f32 %v1321, %v1340
    %1344 = vrot.lane.b32.xlu0 %v1342, 64
    %v1345 = vpop.permute.xlu0 %1344
    %v1347 = vadd.f32 %v1292, %v1345
    %v1348 = vtanh.pop %v1347
    %v1349 = vsub.f32 %v1178, %v1348
    %1351 = vrot.lane.b32.xlu0 %v1349, 96
    %v1352 = vpop.permute.xlu0 %1351
    %v1354 = vmul.f32 %v1336, %v1352
    %1356 = vrot.lane.b32.xlu0 %v1354, 32
    %v1357 = vpop.permute.xlu0 %1356
    %v1359 = vadd.f32 %v1348, %v1357
    %1361 = vrot.lane.b32.xlu0 %v1290, 64
    %v1362 = vpop.permute.xlu0 %1361
    %v1364 = vsel %vm274, %v1362, %v1359
    %v1366 = vsel %vm199, %v1364, 0
    %1368 = vmatpush.msra.mxu0 0.0
    %1369 = vmatpush.msra.mxu0 0.0
    %1370 = vmatpush.msra.mxu0 0.0
    %1371 = vmatpush.msra.mxu0 0.0
    %1372 = vmatpush.msra.mxu0 0.0
    %1373 = vmatpush.msra.mxu0 0.0
    %1374 = vmatpush.msra.mxu0 0.0
    %1375 = vmatpush.msra.mxu0 0.0
    %1376 = vmatpush.msra.mxu0 %v196
    %1377 = vmatpush.msra.mxu0 %v193
    %1378 = vmatpush.msra.mxu0 %v190
    %1379 = vmatpush.msra.mxu0 %v187
    %1380 = vmatpush.msra.mxu0 %v184
    %1381 = vmatpush.msra.mxu0 %v181
    %1382 = vmatpush.msra.mxu0 %v178
    %1383 = vmatpush.msra.mxu0 %v175
    %1384 = vmatmul.f32.gmra.mxu0 %v1366
    %v1385 = vpop.f32.mrf.mxu0
    %v1386 = vadd.f32 0.0, %v1385
    %1387 = vdwg.mxu0
    %1388 = vmatpush.msra.mxu0 0.0
    %1389 = vmatpush.msra.mxu0 0.0
    %1390 = vmatpush.msra.mxu0 0.0
    %1391 = vmatpush.msra.mxu0 0.0
    %1392 = vmatpush.msra.mxu0 0.0
    %1393 = vmatpush.msra.mxu0 0.0
    %1394 = vmatpush.msra.mxu0 0.0
    %1395 = vmatpush.msra.mxu0 0.0
    %1396 = vmatpush.msra.mxu0 %v197
    %1397 = vmatpush.msra.mxu0 %v194
    %1398 = vmatpush.msra.mxu0 %v191
    %1399 = vmatpush.msra.mxu0 %v188
    %1400 = vmatpush.msra.mxu0 %v185
    %1401 = vmatpush.msra.mxu0 %v182
    %1402 = vmatpush.msra.mxu0 %v179
    %1403 = vmatpush.msra.mxu0 %v176
    %1404 = vmatmul.f32.gmra.mxu0 %v1366
    %v1405 = vpop.f32.mrf.mxu0
    %v1406 = vadd.f32 0.0, %v1405
    %1407 = vdwg.mxu0
    %1408 = vmatpush.msra.mxu0 0.0
    %1409 = vmatpush.msra.mxu0 0.0
    %1410 = vmatpush.msra.mxu0 0.0
    %1411 = vmatpush.msra.mxu0 0.0
    %1412 = vmatpush.msra.mxu0 0.0
    %1413 = vmatpush.msra.mxu0 0.0
    %1414 = vmatpush.msra.mxu0 0.0
    %1415 = vmatpush.msra.mxu0 0.0
    %1416 = vmatpush.msra.mxu0 %v198
    %1417 = vmatpush.msra.mxu0 %v195
    %1418 = vmatpush.msra.mxu0 %v192
    %1419 = vmatpush.msra.mxu0 %v189
    %1420 = vmatpush.msra.mxu0 %v186
    %1421 = vmatpush.msra.mxu0 %v183
    %1422 = vmatpush.msra.mxu0 %v180
    %1423 = vmatpush.msra.mxu0 %v177
    %1424 = vmatmul.f32.gmra.mxu0 %v1366
    %v1425 = vpop.f32.mrf.mxu0
    %v1426 = vadd.f32 0.0, %v1425
    %1427 = vdwg.mxu0
    %v1428 = vld [vmem:[#allocation2 + $0x38] sm:$0xff]
    %v1429 = vadd.f32 %v1428, %v1386
    %v1430 = vxor.u32 %v1429, 2147483648
    %v1431 = vmul.f32 %v1430, 1.442695
    %v1432 = vpow.pop %v1431
    %v1433 = vadd.f32 %v1432, 1.0
    %v1434 = vrcp.pop %v1433
    %v1435 = vmul.f32 %v1433, %v1434
    %v1436 = vsub.f32 1.0, %v1435
    %v1437 = vmul.f32 %v1434, %v1436
    %v1438 = vadd.f32 %v1434, %v1437
    %vm1439 = vweird.f32 %v1433
    %vm1440 = vweird.f32 %v1434
    %vm1441 = vmor %vm1439, %vm1440
    %v1442 = vsel %vm1441, %v1434, %v1438
    %v1443 = vand.u32 2147483647, %v1433
    %vm1444 = vcmp.eq.f32.partialorder %v1443, 8.507059e+37
    %v1445 = vand.u32 %v1433, 2147483648
    %v1446 = vor.u32 1.1754944e-38, %v1445
    %v1447 = vsel %vm1444, %v1446, %v1442
    %v1448 = vmul.f32 1.0, %v1447
    %v1449 = vadd.f32 %v1386, %v245
    %1451 = vrot.lane.b32.xlu0 %v1449, 64
    %v1452 = vpop.permute.xlu0 %1451
    %v1454 = vmul.f32 %v1448, %v1452
    %1456 = vrot.lane.b32.xlu0 %v1454, 64
    %v1457 = vpop.permute.xlu0 %1456
    %v1459 = vadd.f32 %v1428, %v1457
    %v1460 = vtanh.pop %v1459
    %v1461 = vsub.f32 %v1290, %v1460
    %1463 = vrot.lane.b32.xlu0 %v1461, 96
    %v1464 = vpop.permute.xlu0 %1463
    %v1466 = vmul.f32 %v1448, %v1464
    %1468 = vrot.lane.b32.xlu0 %v1466, 32
    %v1469 = vpop.permute.xlu0 %1468
    %v1471 = vadd.f32 %v1460, %v1469
    %v1472 = vadd.f32 %v1386, %v384
    %v1473 = vadd.f32 %v1406, %v384
    %1475 = vrot.lane.b32.xlu0 %v1406, 32
    %v1476 = vpop.permute.xlu0 %1475
    %v1478 = vadd.f32 %v1472, %v1476
    %v1479 = vadd.f32 %v1473, %v1476
    %v1480 = vxor.u32 %v1478, 2147483648
    %v1481 = vxor.u32 %v1479, 2147483648
    %v1482 = vmul.f32 %v1480, 1.442695
    %v1483 = vpow.pop %v1482
    %v1484 = vmul.f32 %v1481, 1.442695
    %v1485 = vpow.pop %v1484
    %v1486 = vadd.f32 %v1483, 1.0
    %v1487 = vadd.f32 %v1485, 1.0
    %v1488 = vrcp.pop %v1486
    %v1489 = vmul.f32 %v1486, %v1488
    %v1490 = vsub.f32 1.0, %v1489
    %v1491 = vmul.f32 %v1488, %v1490
    %v1492 = vadd.f32 %v1488, %v1491
    %vm1493 = vweird.f32 %v1486
    %vm1494 = vweird.f32 %v1488
    %vm1495 = vmor %vm1493, %vm1494
    %v1496 = vsel %vm1495, %v1488, %v1492
    %v1497 = vand.u32 2147483647, %v1486
    %vm1498 = vcmp.eq.f32.partialorder %v1497, 8.507059e+37
    %v1499 = vand.u32 %v1486, 2147483648
    %v1500 = vor.u32 1.1754944e-38, %v1499
    %v1501 = vsel %vm1498, %v1500, %v1496
    %v1502 = vmul.f32 1.0, %v1501
    %v1503 = vrcp.pop %v1487
    %v1504 = vmul.f32 %v1487, %v1503
    %v1505 = vsub.f32 1.0, %v1504
    %v1506 = vmul.f32 %v1503, %v1505
    %v1507 = vadd.f32 %v1503, %v1506
    %vm1508 = vweird.f32 %v1487
    %vm1509 = vweird.f32 %v1503
    %vm1510 = vmor %vm1508, %vm1509
    %v1511 = vsel %vm1510, %v1503, %v1507
    %v1512 = vand.u32 2147483647, %v1487
    %vm1513 = vcmp.eq.f32.partialorder %v1512, 8.507059e+37
    %v1514 = vand.u32 %v1487, 2147483648
    %v1515 = vor.u32 1.1754944e-38, %v1514
    %v1516 = vsel %vm1513, %v1515, %v1511
    %v1517 = vmul.f32 1.0, %v1516
    %v1518 = vadd.f32 %v1426, %v173
    %1520 = vrot.lane.b32.xlu0 %v1518, 96
    %v1521 = vpop.permute.xlu0 %1520
    %v1523 = vmul.f32 %v1502, %v1521
    %1525 = vrot.lane.b32.xlu0 %v1523, 64
    %v1526 = vpop.permute.xlu0 %1525
    %v1528 = vadd.f32 %v1473, %v1526
    %v1529 = vtanh.pop %v1528
    %v1530 = vsub.f32 %v1359, %v1529
    %1532 = vrot.lane.b32.xlu0 %v1530, 96
    %v1533 = vpop.permute.xlu0 %1532
    %v1535 = vmul.f32 %v1517, %v1533
    %1537 = vrot.lane.b32.xlu0 %v1535, 32
    %v1538 = vpop.permute.xlu0 %1537
    %v1540 = vadd.f32 %v1529, %v1538
    %1542 = vrot.lane.b32.xlu0 %v1471, 64
    %v1543 = vpop.permute.xlu0 %1542
    %v1545 = vsel %vm274, %v1543, %v1540
    %v1547 = vsel %vm199, %v1545, 0
    %1549 = vmatpush.msra.mxu0 0.0
    %1550 = vmatpush.msra.mxu0 0.0
    %1551 = vmatpush.msra.mxu0 0.0
    %1552 = vmatpush.msra.mxu0 0.0
    %1553 = vmatpush.msra.mxu0 0.0
    %1554 = vmatpush.msra.mxu0 0.0
    %1555 = vmatpush.msra.mxu0 0.0
    %1556 = vmatpush.msra.mxu0 0.0
    %1557 = vmatpush.msra.mxu0 %v196
    %1558 = vmatpush.msra.mxu0 %v193
    %1559 = vmatpush.msra.mxu0 %v190
    %1560 = vmatpush.msra.mxu0 %v187
    %1561 = vmatpush.msra.mxu0 %v184
    %1562 = vmatpush.msra.mxu0 %v181
    %1563 = vmatpush.msra.mxu0 %v178
    %1564 = vmatpush.msra.mxu0 %v175
    %1565 = vmatmul.f32.gmra.mxu0 %v1547
    %v1566 = vpop.f32.mrf.mxu0
    %v1567 = vadd.f32 0.0, %v1566
    %1568 = vdwg.mxu0
    %1569 = vmatpush.msra.mxu0 0.0
    %1570 = vmatpush.msra.mxu0 0.0
    %1571 = vmatpush.msra.mxu0 0.0
    %1572 = vmatpush.msra.mxu0 0.0
    %1573 = vmatpush.msra.mxu0 0.0
    %1574 = vmatpush.msra.mxu0 0.0
    %1575 = vmatpush.msra.mxu0 0.0
    %1576 = vmatpush.msra.mxu0 0.0
    %1577 = vmatpush.msra.mxu0 %v197
    %1578 = vmatpush.msra.mxu0 %v194
    %1579 = vmatpush.msra.mxu0 %v191
    %1580 = vmatpush.msra.mxu0 %v188
    %1581 = vmatpush.msra.mxu0 %v185
    %1582 = vmatpush.msra.mxu0 %v182
    %1583 = vmatpush.msra.mxu0 %v179
    %1584 = vmatpush.msra.mxu0 %v176
    %1585 = vmatmul.f32.gmra.mxu0 %v1547
    %v1586 = vpop.f32.mrf.mxu0
    %v1587 = vadd.f32 0.0, %v1586
    %1588 = vdwg.mxu0
    %1589 = vmatpush.msra.mxu0 0.0
    %1590 = vmatpush.msra.mxu0 0.0
    %1591 = vmatpush.msra.mxu0 0.0
    %1592 = vmatpush.msra.mxu0 0.0
    %1593 = vmatpush.msra.mxu0 0.0
    %1594 = vmatpush.msra.mxu0 0.0
    %1595 = vmatpush.msra.mxu0 0.0
    %1596 = vmatpush.msra.mxu0 0.0
    %1597 = vmatpush.msra.mxu0 %v198
    %1598 = vmatpush.msra.mxu0 %v195
    %1599 = vmatpush.msra.mxu0 %v192
    %1600 = vmatpush.msra.mxu0 %v189
    %1601 = vmatpush.msra.mxu0 %v186
    %1602 = vmatpush.msra.mxu0 %v183
    %1603 = vmatpush.msra.mxu0 %v180
    %1604 = vmatpush.msra.mxu0 %v177
    %1605 = vmatmul.f32.gmra.mxu0 %v1547
    %v1606 = vpop.f32.mrf.mxu0
    %v1607 = vadd.f32 0.0, %v1606
    %1608 = vdwg.mxu0
    %v1609 = vadd.f32 %v1567, %v384
    %v1610 = vadd.f32 %v1587, %v384
    %1612 = vrot.lane.b32.xlu0 %v1587, 32
    %v1613 = vpop.permute.xlu0 %1612
    %v1615 = vadd.f32 %v1609, %v1613
    %v1616 = vadd.f32 %v1610, %v1613
    %v1617 = vxor.u32 %v1615, 2147483648
    %v1618 = vxor.u32 %v1616, 2147483648
    %v1619 = vmul.f32 %v1617, 1.442695
    %v1620 = vpow.pop %v1619
    %v1621 = vmul.f32 %v1618, 1.442695
    %v1622 = vpow.pop %v1621
    %v1623 = vadd.f32 %v1620, 1.0
    %v1624 = vadd.f32 %v1622, 1.0
    %v1625 = vrcp.pop %v1623
    %v1626 = vmul.f32 %v1623, %v1625
    %v1627 = vsub.f32 1.0, %v1626
    %v1628 = vmul.f32 %v1625, %v1627
    %v1629 = vadd.f32 %v1625, %v1628
    %vm1630 = vweird.f32 %v1623
    %vm1631 = vweird.f32 %v1625
    %vm1632 = vmor %vm1630, %vm1631
    %v1633 = vsel %vm1632, %v1625, %v1629
    %v1634 = vand.u32 2147483647, %v1623
    %vm1635 = vcmp.eq.f32.partialorder %v1634, 8.507059e+37
    %v1636 = vand.u32 %v1623, 2147483648
    %v1637 = vor.u32 1.1754944e-38, %v1636
    %v1638 = vsel %vm1635, %v1637, %v1633
    %v1639 = vmul.f32 1.0, %v1638
    %v1640 = vrcp.pop %v1624
    %v1641 = vmul.f32 %v1624, %v1640
    %v1642 = vsub.f32 1.0, %v1641
    %v1643 = vmul.f32 %v1640, %v1642
    %v1644 = vadd.f32 %v1640, %v1643
    %vm1645 = vweird.f32 %v1624
    %vm1646 = vweird.f32 %v1640
    %vm1647 = vmor %vm1645, %vm1646
    %v1648 = vsel %vm1647, %v1640, %v1644
    %v1649 = vand.u32 2147483647, %v1624
    %vm1650 = vcmp.eq.f32.partialorder %v1649, 8.507059e+37
    %v1651 = vand.u32 %v1624, 2147483648
    %v1652 = vor.u32 1.1754944e-38, %v1651
    %v1653 = vsel %vm1650, %v1652, %v1648
    %v1654 = vmul.f32 1.0, %v1653
    %v1655 = vadd.f32 %v1607, %v173
    %1657 = vrot.lane.b32.xlu0 %v1655, 96
    %v1658 = vpop.permute.xlu0 %1657
    %v1660 = vmul.f32 %v1639, %v1658
    %1662 = vrot.lane.b32.xlu0 %v1660, 64
    %v1663 = vpop.permute.xlu0 %1662
    %v1665 = vadd.f32 %v1610, %v1663
    %v1666 = vtanh.pop %v1665
    %v1667 = vsub.f32 %v1540, %v1666
    %1669 = vrot.lane.b32.xlu0 %v1667, 96
    %v1670 = vpop.permute.xlu0 %1669
    %v1672 = vmul.f32 %v1654, %v1670
    %1674 = vrot.lane.b32.xlu0 %v1672, 32
    %v1675 = vpop.permute.xlu0 %1674
    %v1677 = vadd.f32 %v1666, %v1675
    %v1678 = vld [vmem:[%s8] sm:$0x1]
    %v1679 = vld [vmem:[%s10] sm:$0x1]
    %v1681 = vperm.slane %v1679, 0
    %v1682 = vld [vmem:[%s9] sm:$0x1]
    %v1684 = vperm.slane %v1682, 0
    %v1685 = vld [vmem:[%s11] sm:$0x1]
    %v1687 = vperm.slane %v1685, 0
    %v1689 = vld [vmem:[%s12] sm:$0x1]
    %v1691 = vperm.slane %v1689, 0
    %v1692 = vld [vmem:[#allocation5] sm:$0xff]
    %v1693 = vld [vmem:[#allocation5 + $0x8] sm:$0xff]
    %v1694 = vld [vmem:[#allocation5 + $0x10] sm:$0xff]
    %v1695 = vld [vmem:[#allocation5 + $0x18] sm:$0xff]
    %v1696 = vld [vmem:[#allocation5 + $0x20] sm:$0xff]
    %v1697 = vld [vmem:[#allocation5 + $0x28] sm:$0xff]
    %v1698 = vld [vmem:[#allocation5 + $0x30] sm:$0xff]
    %v1699 = vld [vmem:[#allocation5 + $0x38] sm:$0xff]
    %v1700 = vld [vmem:[#allocation5 + $0x40] sm:$0xff]
    %v1701 = vld [vmem:[#allocation5 + $0x48] sm:$0xff]
    %v1702 = vld [vmem:[#allocation5 + $0x50] sm:$0xff]
    %v1703 = vld [vmem:[#allocation5 + $0x58] sm:$0xff]
    %v1704 = vld [vmem:[#allocation5 + $0x60] sm:$0xff]
    %v1705 = vld [vmem:[#allocation5 + $0x68] sm:$0xff]
    %v1706 = vld [vmem:[#allocation5 + $0x70] sm:$0xff]
    %v1707 = vld [vmem:[#allocation5 + $0x78] sm:$0xff]
    %v1708 = vld [vmem:[#allocation5 + $0x80] sm:$0xff]
    %v1709 = vld [vmem:[#allocation5 + $0x88] sm:$0xff]
    %v1710 = vld [vmem:[#allocation5 + $0x90] sm:$0xff]
    %v1711 = vld [vmem:[#allocation5 + $0x98] sm:$0xff]
    %v1712 = vld [vmem:[#allocation5 + $0xa0] sm:$0xff]
    %v1713 = vld [vmem:[#allocation5 + $0xa8] sm:$0xff]
    %v1714 = vld [vmem:[#allocation5 + $0xb0] sm:$0xff]
    %v1715 = vld [vmem:[#allocation5 + $0xb8] sm:$0xff]
    %v1716 = vsel %vm274, %v1543, %v1677
    %v1718 = vsel %vm199, %v1716, 0
    %1720 = vmatpush.msra.mxu0 0.0
    %1721 = vmatpush.msra.mxu0 0.0
    %1722 = vmatpush.msra.mxu0 0.0
    %1723 = vmatpush.msra.mxu0 0.0
    %1724 = vmatpush.msra.mxu0 0.0
    %1725 = vmatpush.msra.mxu0 0.0
    %1726 = vmatpush.msra.mxu0 0.0
    %1727 = vmatpush.msra.mxu0 0.0
    %1728 = vmatpush.msra.mxu0 %v1713
    %1729 = vmatpush.msra.mxu0 %v1710
    %1730 = vmatpush.msra.mxu0 %v1707
    %1731 = vmatpush.msra.mxu0 %v1704
    %1732 = vmatpush.msra.mxu0 %v1701
    %1733 = vmatpush.msra.mxu0 %v1698
    %1734 = vmatpush.msra.mxu0 %v1695
    %1735 = vmatpush.msra.mxu0 %v1692
    %1736 = vmatmul.f32.gmra.mxu0 %v1718
    %v1737 = vpop.f32.mrf.mxu0
    %v1738 = vadd.f32 0.0, %v1737
    %1739 = vdwg.mxu0
    %v1741 = vperm.slane %v1678, 0
    %v1743 = vadd.f32 %v1741, %v1738
    %v1744 = vxor.u32 %v1743, 2147483648
    %v1745 = vmul.f32 %v1744, 1.442695
    %v1746 = vpow.pop %v1745
    %v1747 = vadd.f32 %v1746, 1.0
    %v1748 = vrcp.pop %v1747
    %v1749 = vmul.f32 %v1747, %v1748
    %v1750 = vsub.f32 1.0, %v1749
    %v1751 = vmul.f32 %v1748, %v1750
    %v1752 = vadd.f32 %v1748, %v1751
    %vm1753 = vweird.f32 %v1747
    %vm1754 = vweird.f32 %v1748
    %vm1755 = vmor %vm1753, %vm1754
    %v1756 = vsel %vm1755, %v1748, %v1752
    %v1757 = vand.u32 2147483647, %v1747
    %vm1758 = vcmp.eq.f32.partialorder %v1757, 8.507059e+37
    %v1759 = vand.u32 %v1747, 2147483648
    %v1760 = vor.u32 1.1754944e-38, %v1759
    %v1761 = vsel %vm1758, %v1760, %v1756
    %v1762 = vmul.f32 1.0, %v1761
    %1763 = vrot.lane.b32.xlu0 %v1684, 64
    %v1764 = vpop.permute.xlu0 %1763
    %v1766 = vadd.f32 %v1738, %v1764
    %1768 = vrot.lane.b32.xlu0 %v1766, 64
    %v1769 = vpop.permute.xlu0 %1768
    %v1771 = vmul.f32 %v1762, %v1769
    %1773 = vrot.lane.b32.xlu0 %v1771, 64
    %v1774 = vpop.permute.xlu0 %1773
    %v1776 = vadd.f32 %v1741, %v1774
    %v1777 = vtanh.pop %v1776
    %v1778 = vsub.f32 %v1471, %v1777
    %1780 = vrot.lane.b32.xlu0 %v1778, 96
    %v1781 = vpop.permute.xlu0 %1780
    %v1783 = vmul.f32 %v1762, %v1781
    %1785 = vrot.lane.b32.xlu0 %v1783, 32
    %v1786 = vpop.permute.xlu0 %1785
    %v1788 = vadd.f32 %v1777, %v1786
    %1790 = vrot.lane.b32.xlu0 %v1788, 64
    %v1791 = vpop.permute.xlu0 %1790
    %v1793 = vsel %vm274, %v1791, %v1677
    %v1795 = vsel %vm199, %v1793, 0
    %1797 = vmatpush.msra.mxu0 0.0
    %1798 = vmatpush.msra.mxu0 0.0
    %1799 = vmatpush.msra.mxu0 0.0
    %1800 = vmatpush.msra.mxu0 0.0
    %1801 = vmatpush.msra.mxu0 0.0
    %1802 = vmatpush.msra.mxu0 0.0
    %1803 = vmatpush.msra.mxu0 0.0
    %1804 = vmatpush.msra.mxu0 0.0
    %1805 = vmatpush.msra.mxu0 %v1713
    %1806 = vmatpush.msra.mxu0 %v1710
    %1807 = vmatpush.msra.mxu0 %v1707
    %1808 = vmatpush.msra.mxu0 %v1704
    %1809 = vmatpush.msra.mxu0 %v1701
    %1810 = vmatpush.msra.mxu0 %v1698
    %1811 = vmatpush.msra.mxu0 %v1695
    %1812 = vmatpush.msra.mxu0 %v1692
    %1813 = vmatmul.f32.gmra.mxu0 %v1795
    %v1814 = vpop.f32.mrf.mxu0
    %v1815 = vadd.f32 0.0, %v1814
    %1816 = vdwg.mxu0
    %1817 = vmatpush.msra.mxu0 0.0
    %1818 = vmatpush.msra.mxu0 0.0
    %1819 = vmatpush.msra.mxu0 0.0
    %1820 = vmatpush.msra.mxu0 0.0
    %1821 = vmatpush.msra.mxu0 0.0
    %1822 = vmatpush.msra.mxu0 0.0
    %1823 = vmatpush.msra.mxu0 0.0
    %1824 = vmatpush.msra.mxu0 0.0
    %1825 = vmatpush.msra.mxu0 %v1714
    %1826 = vmatpush.msra.mxu0 %v1711
    %1827 = vmatpush.msra.mxu0 %v1708
    %1828 = vmatpush.msra.mxu0 %v1705
    %1829 = vmatpush.msra.mxu0 %v1702
    %1830 = vmatpush.msra.mxu0 %v1699
    %1831 = vmatpush.msra.mxu0 %v1696
    %1832 = vmatpush.msra.mxu0 %v1693
    %1833 = vmatmul.f32.gmra.mxu0 %v1795
    %v1834 = vpop.f32.mrf.mxu0
    %v1835 = vadd.f32 0.0, %v1834
    %1836 = vdwg.mxu0
    %1837 = vmatpush.msra.mxu0 0.0
    %1838 = vmatpush.msra.mxu0 0.0
    %1839 = vmatpush.msra.mxu0 0.0
    %1840 = vmatpush.msra.mxu0 0.0
    %1841 = vmatpush.msra.mxu0 0.0
    %1842 = vmatpush.msra.mxu0 0.0
    %1843 = vmatpush.msra.mxu0 0.0
    %1844 = vmatpush.msra.mxu0 0.0
    %1845 = vmatpush.msra.mxu0 %v1715
    %1846 = vmatpush.msra.mxu0 %v1712
    %1847 = vmatpush.msra.mxu0 %v1709
    %1848 = vmatpush.msra.mxu0 %v1706
    %1849 = vmatpush.msra.mxu0 %v1703
    %1850 = vmatpush.msra.mxu0 %v1700
    %1851 = vmatpush.msra.mxu0 %v1697
    %1852 = vmatpush.msra.mxu0 %v1694
    %1853 = vmatmul.f32.gmra.mxu0 %v1795
    %v1854 = vpop.f32.mrf.mxu0
    %v1855 = vadd.f32 0.0, %v1854
    %1856 = vdwg.mxu0
    %v1857 = vadd.f32 %v1741, %v1815
    %v1858 = vxor.u32 %v1857, 2147483648
    %v1859 = vmul.f32 %v1858, 1.442695
    %v1860 = vpow.pop %v1859
    %v1861 = vadd.f32 %v1860, 1.0
    %v1862 = vrcp.pop %v1861
    %v1863 = vmul.f32 %v1861, %v1862
    %v1864 = vsub.f32 1.0, %v1863
    %v1865 = vmul.f32 %v1862, %v1864
    %v1866 = vadd.f32 %v1862, %v1865
    %vm1867 = vweird.f32 %v1861
    %vm1868 = vweird.f32 %v1862
    %vm1869 = vmor %vm1867, %vm1868
    %v1870 = vsel %vm1869, %v1862, %v1866
    %v1871 = vand.u32 2147483647, %v1861
    %vm1872 = vcmp.eq.f32.partialorder %v1871, 8.507059e+37
    %v1873 = vand.u32 %v1861, 2147483648
    %v1874 = vor.u32 1.1754944e-38, %v1873
    %v1875 = vsel %vm1872, %v1874, %v1870
    %v1876 = vmul.f32 1.0, %v1875
    %v1877 = vadd.f32 %v1815, %v1764
    %1879 = vrot.lane.b32.xlu0 %v1877, 64
    %v1880 = vpop.permute.xlu0 %1879
    %v1882 = vmul.f32 %v1876, %v1880
    %1884 = vrot.lane.b32.xlu0 %v1882, 64
    %v1885 = vpop.permute.xlu0 %1884
    %v1887 = vadd.f32 %v1741, %v1885
    %v1888 = vtanh.pop %v1887
    %v1889 = vsub.f32 %v1788, %v1888
    %1891 = vrot.lane.b32.xlu0 %v1889, 96
    %v1892 = vpop.permute.xlu0 %1891
    %v1894 = vmul.f32 %v1876, %v1892
    %1896 = vrot.lane.b32.xlu0 %v1894, 32
    %v1897 = vpop.permute.xlu0 %1896
    %v1899 = vadd.f32 %v1888, %v1897
    %1900 = vrot.lane.b32.xlu0 %v1681, 96
    %v1901 = vpop.permute.xlu0 %1900
    %v1903 = vadd.f32 %v1815, %v1901
    %v1904 = vadd.f32 %v1835, %v1901
    %1906 = vrot.lane.b32.xlu0 %v1835, 32
    %v1907 = vpop.permute.xlu0 %1906
    %v1909 = vadd.f32 %v1903, %v1907
    %v1910 = vadd.f32 %v1904, %v1907
    %v1911 = vxor.u32 %v1909, 2147483648
    %v1912 = vxor.u32 %v1910, 2147483648
    %v1913 = vmul.f32 %v1911, 1.442695
    %v1914 = vpow.pop %v1913
    %v1915 = vmul.f32 %v1912, 1.442695
    %v1916 = vpow.pop %v1915
    %v1917 = vadd.f32 %v1914, 1.0
    %v1918 = vadd.f32 %v1916, 1.0
    %v1919 = vrcp.pop %v1917
    %v1920 = vmul.f32 %v1917, %v1919
    %v1921 = vsub.f32 1.0, %v1920
    %v1922 = vmul.f32 %v1919, %v1921
    %v1923 = vadd.f32 %v1919, %v1922
    %vm1924 = vweird.f32 %v1917
    %vm1925 = vweird.f32 %v1919
    %vm1926 = vmor %vm1924, %vm1925
    %v1927 = vsel %vm1926, %v1919, %v1923
    %v1928 = vand.u32 2147483647, %v1917
    %vm1929 = vcmp.eq.f32.partialorder %v1928, 8.507059e+37
    %v1930 = vand.u32 %v1917, 2147483648
    %v1931 = vor.u32 1.1754944e-38, %v1930
    %v1932 = vsel %vm1929, %v1931, %v1927
    %v1933 = vmul.f32 1.0, %v1932
    %v1934 = vrcp.pop %v1918
    %v1935 = vmul.f32 %v1918, %v1934
    %v1936 = vsub.f32 1.0, %v1935
    %v1937 = vmul.f32 %v1934, %v1936
    %v1938 = vadd.f32 %v1934, %v1937
    %vm1939 = vweird.f32 %v1918
    %vm1940 = vweird.f32 %v1934
    %vm1941 = vmor %vm1939, %vm1940
    %v1942 = vsel %vm1941, %v1934, %v1938
    %v1943 = vand.u32 2147483647, %v1918
    %vm1944 = vcmp.eq.f32.partialorder %v1943, 8.507059e+37
    %v1945 = vand.u32 %v1918, 2147483648
    %v1946 = vor.u32 1.1754944e-38, %v1945
    %v1947 = vsel %vm1944, %v1946, %v1942
    %v1948 = vmul.f32 1.0, %v1947
    %v1949 = vadd.f32 %v1855, %v1687
    %1951 = vrot.lane.b32.xlu0 %v1949, 96
    %v1952 = vpop.permute.xlu0 %1951
    %v1954 = vmul.f32 %v1933, %v1952
    %1956 = vrot.lane.b32.xlu0 %v1954, 64
    %v1957 = vpop.permute.xlu0 %1956
    %v1959 = vadd.f32 %v1904, %v1957
    %v1960 = vtanh.pop %v1959
    %v1961 = vsub.f32 %v1677, %v1960
    %1963 = vrot.lane.b32.xlu0 %v1961, 96
    %v1964 = vpop.permute.xlu0 %1963
    %v1966 = vmul.f32 %v1948, %v1964
    %1968 = vrot.lane.b32.xlu0 %v1966, 32
    %v1969 = vpop.permute.xlu0 %1968
    %v1971 = vadd.f32 %v1960, %v1969
    %1973 = vrot.lane.b32.xlu0 %v1899, 64
    %v1974 = vpop.permute.xlu0 %1973
    %v1976 = vsel %vm274, %v1974, %v1971
    %v1978 = vsel %vm199, %v1976, 0
    %1980 = vmatpush.msra.mxu0 0.0
    %1981 = vmatpush.msra.mxu0 0.0
    %1982 = vmatpush.msra.mxu0 0.0
    %1983 = vmatpush.msra.mxu0 0.0
    %1984 = vmatpush.msra.mxu0 0.0
    %1985 = vmatpush.msra.mxu0 0.0
    %1986 = vmatpush.msra.mxu0 0.0
    %1987 = vmatpush.msra.mxu0 0.0
    %1988 = vmatpush.msra.mxu0 %v1713
    %1989 = vmatpush.msra.mxu0 %v1710
    %1990 = vmatpush.msra.mxu0 %v1707
    %1991 = vmatpush.msra.mxu0 %v1704
    %1992 = vmatpush.msra.mxu0 %v1701
    %1993 = vmatpush.msra.mxu0 %v1698
    %1994 = vmatpush.msra.mxu0 %v1695
    %1995 = vmatpush.msra.mxu0 %v1692
    %1996 = vmatmul.f32.gmra.mxu0 %v1978
    %v1997 = vpop.f32.mrf.mxu0
    %v1998 = vadd.f32 0.0, %v1997
    %1999 = vdwg.mxu0
    %2000 = vmatpush.msra.mxu0 0.0
    %2001 = vmatpush.msra.mxu0 0.0
    %2002 = vmatpush.msra.mxu0 0.0
    %2003 = vmatpush.msra.mxu0 0.0
    %2004 = vmatpush.msra.mxu0 0.0
    %2005 = vmatpush.msra.mxu0 0.0
    %2006 = vmatpush.msra.mxu0 0.0
    %2007 = vmatpush.msra.mxu0 0.0
    %2008 = vmatpush.msra.mxu0 %v1714
    %2009 = vmatpush.msra.mxu0 %v1711
    %2010 = vmatpush.msra.mxu0 %v1708
    %2011 = vmatpush.msra.mxu0 %v1705
    %2012 = vmatpush.msra.mxu0 %v1702
    %2013 = vmatpush.msra.mxu0 %v1699
    %2014 = vmatpush.msra.mxu0 %v1696
    %2015 = vmatpush.msra.mxu0 %v1693
    %2016 = vmatmul.f32.gmra.mxu0 %v1978
    %v2017 = vpop.f32.mrf.mxu0
    %v2018 = vadd.f32 0.0, %v2017
    %2019 = vdwg.mxu0
    %2020 = vmatpush.msra.mxu0 0.0
    %2021 = vmatpush.msra.mxu0 0.0
    %2022 = vmatpush.msra.mxu0 0.0
    %2023 = vmatpush.msra.mxu0 0.0
    %2024 = vmatpush.msra.mxu0 0.0
    %2025 = vmatpush.msra.mxu0 0.0
    %2026 = vmatpush.msra.mxu0 0.0
    %2027 = vmatpush.msra.mxu0 0.0
    %2028 = vmatpush.msra.mxu0 %v1715
    %2029 = vmatpush.msra.mxu0 %v1712
    %2030 = vmatpush.msra.mxu0 %v1709
    %2031 = vmatpush.msra.mxu0 %v1706
    %2032 = vmatpush.msra.mxu0 %v1703
    %2033 = vmatpush.msra.mxu0 %v1700
    %2034 = vmatpush.msra.mxu0 %v1697
    %2035 = vmatpush.msra.mxu0 %v1694
    %2036 = vmatmul.f32.gmra.mxu0 %v1978
    %v2037 = vpop.f32.mrf.mxu0
    %v2038 = vadd.f32 0.0, %v2037
    %2039 = vdwg.mxu0
    %2040 = vrot.lane.b32.xlu0 %v1691, 32
    %v2041 = vpop.permute.xlu0 %2040
    %v2043 = vadd.f32 %v2038, %v2041
    %2045 = vrot.lane.b32.xlu0 %v2043, 96
    %v2046 = vpop.permute.xlu0 %2045
    %vm2048 = vcmask 31744
    %2049 = vst.msk [vmem:[%s13] sm:$0xff] %vm2048, %v2046
    %v2050 = vadd.f32 %v1741, %v1998
    %v2051 = vxor.u32 %v2050, 2147483648
    %v2052 = vmul.f32 %v2051, 1.442695
    %v2053 = vpow.pop %v2052
    %v2054 = vadd.f32 %v2053, 1.0
    %v2055 = vrcp.pop %v2054
    %v2056 = vmul.f32 %v2054, %v2055
    %v2057 = vsub.f32 1.0, %v2056
    %v2058 = vmul.f32 %v2055, %v2057
    %v2059 = vadd.f32 %v2055, %v2058
    %vm2060 = vweird.f32 %v2054
    %vm2061 = vweird.f32 %v2055
    %vm2062 = vmor %vm2060, %vm2061
    %v2063 = vsel %vm2062, %v2055, %v2059
    %v2064 = vand.u32 2147483647, %v2054
    %vm2065 = vcmp.eq.f32.partialorder %v2064, 8.507059e+37
    %v2066 = vand.u32 %v2054, 2147483648
    %v2067 = vor.u32 1.1754944e-38, %v2066
    %v2068 = vsel %vm2065, %v2067, %v2063
    %v2069 = vmul.f32 1.0, %v2068
    %v2070 = vadd.f32 %v1998, %v1764
    %2072 = vrot.lane.b32.xlu0 %v2070, 64
    %v2073 = vpop.permute.xlu0 %2072
    %v2075 = vmul.f32 %v2069, %v2073
    %2077 = vrot.lane.b32.xlu0 %v2075, 64
    %v2078 = vpop.permute.xlu0 %2077
    %v2080 = vadd.f32 %v1741, %v2078
    %v2081 = vtanh.pop %v2080
    %v2082 = vsub.f32 %v1899, %v2081
    %2084 = vrot.lane.b32.xlu0 %v2082, 96
    %v2085 = vpop.permute.xlu0 %2084
    %v2087 = vmul.f32 %v2069, %v2085
    %2089 = vrot.lane.b32.xlu0 %v2087, 32
    %v2090 = vpop.permute.xlu0 %2089
    %v2092 = vadd.f32 %v2081, %v2090
    %v2093 = vadd.f32 %v1998, %v1901
    %v2094 = vadd.f32 %v2018, %v1901
    %2096 = vrot.lane.b32.xlu0 %v2018, 32
    %v2097 = vpop.permute.xlu0 %2096
    %v2099 = vadd.f32 %v2093, %v2097
    %v2100 = vadd.f32 %v2094, %v2097
    %v2101 = vxor.u32 %v2099, 2147483648
    %v2102 = vxor.u32 %v2100, 2147483648
    %v2103 = vmul.f32 %v2101, 1.442695
    %v2104 = vpow.pop %v2103
    %v2105 = vmul.f32 %v2102, 1.442695
    %v2106 = vpow.pop %v2105
    %v2107 = vadd.f32 %v2104, 1.0
    %v2108 = vadd.f32 %v2106, 1.0
    %v2109 = vrcp.pop %v2107
    %v2110 = vmul.f32 %v2107, %v2109
    %v2111 = vsub.f32 1.0, %v2110
    %v2112 = vmul.f32 %v2109, %v2111
    %v2113 = vadd.f32 %v2109, %v2112
    %vm2114 = vweird.f32 %v2107
    %vm2115 = vweird.f32 %v2109
    %vm2116 = vmor %vm2114, %vm2115
    %v2117 = vsel %vm2116, %v2109, %v2113
    %v2118 = vand.u32 2147483647, %v2107
    %vm2119 = vcmp.eq.f32.partialorder %v2118, 8.507059e+37
    %v2120 = vand.u32 %v2107, 2147483648
    %v2121 = vor.u32 1.1754944e-38, %v2120
    %v2122 = vsel %vm2119, %v2121, %v2117
    %v2123 = vmul.f32 1.0, %v2122
    %v2124 = vrcp.pop %v2108
    %v2125 = vmul.f32 %v2108, %v2124
    %v2126 = vsub.f32 1.0, %v2125
    %v2127 = vmul.f32 %v2124, %v2126
    %v2128 = vadd.f32 %v2124, %v2127
    %vm2129 = vweird.f32 %v2108
    %vm2130 = vweird.f32 %v2124
    %vm2131 = vmor %vm2129, %vm2130
    %v2132 = vsel %vm2131, %v2124, %v2128
    %v2133 = vand.u32 2147483647, %v2108
    %vm2134 = vcmp.eq.f32.partialorder %v2133, 8.507059e+37
    %v2135 = vand.u32 %v2108, 2147483648
    %v2136 = vor.u32 1.1754944e-38, %v2135
    %v2137 = vsel %vm2134, %v2136, %v2132
    %v2138 = vmul.f32 1.0, %v2137
    %v2139 = vadd.f32 %v2038, %v1687
    %2141 = vrot.lane.b32.xlu0 %v2139, 96
    %v2142 = vpop.permute.xlu0 %2141
    %v2144 = vmul.f32 %v2123, %v2142
    %2146 = vrot.lane.b32.xlu0 %v2144, 64
    %v2147 = vpop.permute.xlu0 %2146
    %v2149 = vadd.f32 %v2094, %v2147
    %v2150 = vtanh.pop %v2149
    %v2151 = vsub.f32 %v1971, %v2150
    %2153 = vrot.lane.b32.xlu0 %v2151, 96
    %v2154 = vpop.permute.xlu0 %2153
    %v2156 = vmul.f32 %v2138, %v2154
    %2158 = vrot.lane.b32.xlu0 %v2156, 32
    %v2159 = vpop.permute.xlu0 %2158
    %v2161 = vadd.f32 %v2150, %v2159
    %2163 = vrot.lane.b32.xlu0 %v2092, 64
    %v2164 = vpop.permute.xlu0 %2163
    %v2166 = vsel %vm274, %v2164, %v2161
    %v2168 = vsel %vm199, %v2166, 0
    %2170 = vmatpush.msra.mxu0 0.0
    %2171 = vmatpush.msra.mxu0 0.0
    %2172 = vmatpush.msra.mxu0 0.0
    %2173 = vmatpush.msra.mxu0 0.0
    %2174 = vmatpush.msra.mxu0 0.0
    %2175 = vmatpush.msra.mxu0 0.0
    %2176 = vmatpush.msra.mxu0 0.0
    %2177 = vmatpush.msra.mxu0 0.0
    %2178 = vmatpush.msra.mxu0 %v1713
    %2179 = vmatpush.msra.mxu0 %v1710
    %2180 = vmatpush.msra.mxu0 %v1707
    %2181 = vmatpush.msra.mxu0 %v1704
    %2182 = vmatpush.msra.mxu0 %v1701
    %2183 = vmatpush.msra.mxu0 %v1698
    %2184 = vmatpush.msra.mxu0 %v1695
    %2185 = vmatpush.msra.mxu0 %v1692
    %2186 = vmatmul.f32.gmra.mxu0 %v2168
    %v2187 = vpop.f32.mrf.mxu0
    %v2188 = vadd.f32 0.0, %v2187
    %2189 = vdwg.mxu0
    %2190 = vmatpush.msra.mxu0 0.0
    %2191 = vmatpush.msra.mxu0 0.0
    %2192 = vmatpush.msra.mxu0 0.0
    %2193 = vmatpush.msra.mxu0 0.0
    %2194 = vmatpush.msra.mxu0 0.0
    %2195 = vmatpush.msra.mxu0 0.0
    %2196 = vmatpush.msra.mxu0 0.0
    %2197 = vmatpush.msra.mxu0 0.0
    %2198 = vmatpush.msra.mxu0 %v1714
    %2199 = vmatpush.msra.mxu0 %v1711
    %2200 = vmatpush.msra.mxu0 %v1708
    %2201 = vmatpush.msra.mxu0 %v1705
    %2202 = vmatpush.msra.mxu0 %v1702
    %2203 = vmatpush.msra.mxu0 %v1699
    %2204 = vmatpush.msra.mxu0 %v1696
    %2205 = vmatpush.msra.mxu0 %v1693
    %2206 = vmatmul.f32.gmra.mxu0 %v2168
    %v2207 = vpop.f32.mrf.mxu0
    %v2208 = vadd.f32 0.0, %v2207
    %2209 = vdwg.mxu0
    %2210 = vmatpush.msra.mxu0 0.0
    %2211 = vmatpush.msra.mxu0 0.0
    %2212 = vmatpush.msra.mxu0 0.0
    %2213 = vmatpush.msra.mxu0 0.0
    %2214 = vmatpush.msra.mxu0 0.0
    %2215 = vmatpush.msra.mxu0 0.0
    %2216 = vmatpush.msra.mxu0 0.0
    %2217 = vmatpush.msra.mxu0 0.0
    %2218 = vmatpush.msra.mxu0 %v1715
    %2219 = vmatpush.msra.mxu0 %v1712
    %2220 = vmatpush.msra.mxu0 %v1709
    %2221 = vmatpush.msra.mxu0 %v1706
    %2222 = vmatpush.msra.mxu0 %v1703
    %2223 = vmatpush.msra.mxu0 %v1700
    %2224 = vmatpush.msra.mxu0 %v1697
    %2225 = vmatpush.msra.mxu0 %v1694
    %2226 = vmatmul.f32.gmra.mxu0 %v2168
    %v2227 = vpop.f32.mrf.mxu0
    %v2228 = vadd.f32 0.0, %v2227
    %2229 = vdwg.mxu0
    %v2230 = vadd.f32 %v2228, %v2041
    %2232 = vrot.lane.b32.xlu0 %v2230, 96
    %v2233 = vpop.permute.xlu0 %2232
    %2235 = vst.msk [vmem:[%s13 + $0x8] sm:$0xff] %vm2048, %v2233
    %v2236 = vadd.f32 %v1741, %v2188
    %v2237 = vxor.u32 %v2236, 2147483648
    %v2238 = vmul.f32 %v2237, 1.442695
    %v2239 = vpow.pop %v2238
    %v2240 = vadd.f32 %v2239, 1.0
    %v2241 = vrcp.pop %v2240
    %v2242 = vmul.f32 %v2240, %v2241
    %v2243 = vsub.f32 1.0, %v2242
    %v2244 = vmul.f32 %v2241, %v2243
    %v2245 = vadd.f32 %v2241, %v2244
    %vm2246 = vweird.f32 %v2240
    %vm2247 = vweird.f32 %v2241
    %vm2248 = vmor %vm2246, %vm2247
    %v2249 = vsel %vm2248, %v2241, %v2245
    %v2250 = vand.u32 2147483647, %v2240
    %vm2251 = vcmp.eq.f32.partialorder %v2250, 8.507059e+37
    %v2252 = vand.u32 %v2240, 2147483648
    %v2253 = vor.u32 1.1754944e-38, %v2252
    %v2254 = vsel %vm2251, %v2253, %v2249
    %v2255 = vmul.f32 1.0, %v2254
    %v2256 = vadd.f32 %v2188, %v1764
    %2258 = vrot.lane.b32.xlu0 %v2256, 64
    %v2259 = vpop.permute.xlu0 %2258
    %v2261 = vmul.f32 %v2255, %v2259
    %2263 = vrot.lane.b32.xlu0 %v2261, 64
    %v2264 = vpop.permute.xlu0 %2263
    %v2266 = vadd.f32 %v1741, %v2264
    %v2267 = vtanh.pop %v2266
    %v2268 = vsub.f32 %v2092, %v2267
    %2270 = vrot.lane.b32.xlu0 %v2268, 96
    %v2271 = vpop.permute.xlu0 %2270
    %v2273 = vmul.f32 %v2255, %v2271
    %2275 = vrot.lane.b32.xlu0 %v2273, 32
    %v2276 = vpop.permute.xlu0 %2275
    %v2278 = vadd.f32 %v2267, %v2276
    %v2279 = vadd.f32 %v2188, %v1901
    %v2280 = vadd.f32 %v2208, %v1901
    %2282 = vrot.lane.b32.xlu0 %v2208, 32
    %v2283 = vpop.permute.xlu0 %2282
    %v2285 = vadd.f32 %v2279, %v2283
    %v2286 = vadd.f32 %v2280, %v2283
    %v2287 = vxor.u32 %v2285, 2147483648
    %v2288 = vxor.u32 %v2286, 2147483648
    %v2289 = vmul.f32 %v2287, 1.442695
    %v2290 = vpow.pop %v2289
    %v2291 = vmul.f32 %v2288, 1.442695
    %v2292 = vpow.pop %v2291
    %v2293 = vadd.f32 %v2290, 1.0
    %v2294 = vadd.f32 %v2292, 1.0
    %v2295 = vrcp.pop %v2293
    %v2296 = vmul.f32 %v2293, %v2295
    %v2297 = vsub.f32 1.0, %v2296
    %v2298 = vmul.f32 %v2295, %v2297
    %v2299 = vadd.f32 %v2295, %v2298
    %vm2300 = vweird.f32 %v2293
    %vm2301 = vweird.f32 %v2295
    %vm2302 = vmor %vm2300, %vm2301
    %v2303 = vsel %vm2302, %v2295, %v2299
    %v2304 = vand.u32 2147483647, %v2293
    %vm2305 = vcmp.eq.f32.partialorder %v2304, 8.507059e+37
    %v2306 = vand.u32 %v2293, 2147483648
    %v2307 = vor.u32 1.1754944e-38, %v2306
    %v2308 = vsel %vm2305, %v2307, %v2303
    %v2309 = vmul.f32 1.0, %v2308
    %v2310 = vrcp.pop %v2294
    %v2311 = vmul.f32 %v2294, %v2310
    %v2312 = vsub.f32 1.0, %v2311
    %v2313 = vmul.f32 %v2310, %v2312
    %v2314 = vadd.f32 %v2310, %v2313
    %vm2315 = vweird.f32 %v2294
    %vm2316 = vweird.f32 %v2310
    %vm2317 = vmor %vm2315, %vm2316
    %v2318 = vsel %vm2317, %v2310, %v2314
    %v2319 = vand.u32 2147483647, %v2294
    %vm2320 = vcmp.eq.f32.partialorder %v2319, 8.507059e+37
    %v2321 = vand.u32 %v2294, 2147483648
    %v2322 = vor.u32 1.1754944e-38, %v2321
    %v2323 = vsel %vm2320, %v2322, %v2318
    %v2324 = vmul.f32 1.0, %v2323
    %v2325 = vadd.f32 %v2228, %v1687
    %2327 = vrot.lane.b32.xlu0 %v2325, 96
    %v2328 = vpop.permute.xlu0 %2327
    %v2330 = vmul.f32 %v2309, %v2328
    %2332 = vrot.lane.b32.xlu0 %v2330, 64
    %v2333 = vpop.permute.xlu0 %2332
    %v2335 = vadd.f32 %v2280, %v2333
    %v2336 = vtanh.pop %v2335
    %v2337 = vsub.f32 %v2161, %v2336
    %2339 = vrot.lane.b32.xlu0 %v2337, 96
    %v2340 = vpop.permute.xlu0 %2339
    %v2342 = vmul.f32 %v2324, %v2340
    %2344 = vrot.lane.b32.xlu0 %v2342, 32
    %v2345 = vpop.permute.xlu0 %2344
    %v2347 = vadd.f32 %v2336, %v2345
    %2349 = vrot.lane.b32.xlu0 %v2278, 64
    %v2350 = vpop.permute.xlu0 %2349
    %v2352 = vsel %vm274, %v2350, %v2347
    %v2354 = vsel %vm199, %v2352, 0
    %2356 = vmatpush.msra.mxu0 0.0
    %2357 = vmatpush.msra.mxu0 0.0
    %2358 = vmatpush.msra.mxu0 0.0
    %2359 = vmatpush.msra.mxu0 0.0
    %2360 = vmatpush.msra.mxu0 0.0
    %2361 = vmatpush.msra.mxu0 0.0
    %2362 = vmatpush.msra.mxu0 0.0
    %2363 = vmatpush.msra.mxu0 0.0
    %2364 = vmatpush.msra.mxu0 %v1713
    %2365 = vmatpush.msra.mxu0 %v1710
    %2366 = vmatpush.msra.mxu0 %v1707
    %2367 = vmatpush.msra.mxu0 %v1704
    %2368 = vmatpush.msra.mxu0 %v1701
    %2369 = vmatpush.msra.mxu0 %v1698
    %2370 = vmatpush.msra.mxu0 %v1695
    %2371 = vmatpush.msra.mxu0 %v1692
    %2372 = vmatmul.f32.gmra.mxu0 %v2354
    %v2373 = vpop.f32.mrf.mxu0
    %v2374 = vadd.f32 0.0, %v2373
    %2375 = vdwg.mxu0
    %2376 = vmatpush.msra.mxu0 0.0
    %2377 = vmatpush.msra.mxu0 0.0
    %2378 = vmatpush.msra.mxu0 0.0
    %2379 = vmatpush.msra.mxu0 0.0
    %2380 = vmatpush.msra.mxu0 0.0
    %2381 = vmatpush.msra.mxu0 0.0
    %2382 = vmatpush.msra.mxu0 0.0
    %2383 = vmatpush.msra.mxu0 0.0
    %2384 = vmatpush.msra.mxu0 %v1714
    %2385 = vmatpush.msra.mxu0 %v1711
    %2386 = vmatpush.msra.mxu0 %v1708
    %2387 = vmatpush.msra.mxu0 %v1705
    %2388 = vmatpush.msra.mxu0 %v1702
    %2389 = vmatpush.msra.mxu0 %v1699
    %2390 = vmatpush.msra.mxu0 %v1696
    %2391 = vmatpush.msra.mxu0 %v1693
    %2392 = vmatmul.f32.gmra.mxu0 %v2354
    %v2393 = vpop.f32.mrf.mxu0
    %v2394 = vadd.f32 0.0, %v2393
    %2395 = vdwg.mxu0
    %2396 = vmatpush.msra.mxu0 0.0
    %2397 = vmatpush.msra.mxu0 0.0
    %2398 = vmatpush.msra.mxu0 0.0
    %2399 = vmatpush.msra.mxu0 0.0
    %2400 = vmatpush.msra.mxu0 0.0
    %2401 = vmatpush.msra.mxu0 0.0
    %2402 = vmatpush.msra.mxu0 0.0
    %2403 = vmatpush.msra.mxu0 0.0
    %2404 = vmatpush.msra.mxu0 %v1715
    %2405 = vmatpush.msra.mxu0 %v1712
    %2406 = vmatpush.msra.mxu0 %v1709
    %2407 = vmatpush.msra.mxu0 %v1706
    %2408 = vmatpush.msra.mxu0 %v1703
    %2409 = vmatpush.msra.mxu0 %v1700
    %2410 = vmatpush.msra.mxu0 %v1697
    %2411 = vmatpush.msra.mxu0 %v1694
    %2412 = vmatmul.f32.gmra.mxu0 %v2354
    %v2413 = vpop.f32.mrf.mxu0
    %v2414 = vadd.f32 0.0, %v2413
    %2415 = vdwg.mxu0
    %v2416 = vadd.f32 %v2414, %v2041
    %2418 = vrot.lane.b32.xlu0 %v2416, 96
    %v2419 = vpop.permute.xlu0 %2418
    %2421 = vst.msk [vmem:[%s13 + $0x10] sm:$0xff] %vm2048, %v2419
    %v2422 = vadd.f32 %v1741, %v2374
    %v2423 = vxor.u32 %v2422, 2147483648
    %v2424 = vmul.f32 %v2423, 1.442695
    %v2425 = vpow.pop %v2424
    %v2426 = vadd.f32 %v2425, 1.0
    %v2427 = vrcp.pop %v2426
    %v2428 = vmul.f32 %v2426, %v2427
    %v2429 = vsub.f32 1.0, %v2428
    %v2430 = vmul.f32 %v2427, %v2429
    %v2431 = vadd.f32 %v2427, %v2430
    %vm2432 = vweird.f32 %v2426
    %vm2433 = vweird.f32 %v2427
    %vm2434 = vmor %vm2432, %vm2433
    %v2435 = vsel %vm2434, %v2427, %v2431
    %v2436 = vand.u32 2147483647, %v2426
    %vm2437 = vcmp.eq.f32.partialorder %v2436, 8.507059e+37
    %v2438 = vand.u32 %v2426, 2147483648
    %v2439 = vor.u32 1.1754944e-38, %v2438
    %v2440 = vsel %vm2437, %v2439, %v2435
    %v2441 = vmul.f32 1.0, %v2440
    %v2442 = vadd.f32 %v2374, %v1764
    %2444 = vrot.lane.b32.xlu0 %v2442, 64
    %v2445 = vpop.permute.xlu0 %2444
    %v2447 = vmul.f32 %v2441, %v2445
    %2449 = vrot.lane.b32.xlu0 %v2447, 64
    %v2450 = vpop.permute.xlu0 %2449
    %v2452 = vadd.f32 %v1741, %v2450
    %v2453 = vtanh.pop %v2452
    %v2454 = vsub.f32 %v2278, %v2453
    %2456 = vrot.lane.b32.xlu0 %v2454, 96
    %v2457 = vpop.permute.xlu0 %2456
    %v2459 = vmul.f32 %v2441, %v2457
    %2461 = vrot.lane.b32.xlu0 %v2459, 32
    %v2462 = vpop.permute.xlu0 %2461
    %v2464 = vadd.f32 %v2453, %v2462
    %v2465 = vadd.f32 %v2374, %v1901
    %v2466 = vadd.f32 %v2394, %v1901
    %2468 = vrot.lane.b32.xlu0 %v2394, 32
    %v2469 = vpop.permute.xlu0 %2468
    %v2471 = vadd.f32 %v2465, %v2469
    %v2472 = vadd.f32 %v2466, %v2469
    %v2473 = vxor.u32 %v2471, 2147483648
    %v2474 = vxor.u32 %v2472, 2147483648
    %v2475 = vmul.f32 %v2473, 1.442695
    %v2476 = vpow.pop %v2475
    %v2477 = vmul.f32 %v2474, 1.442695
    %v2478 = vpow.pop %v2477
    %v2479 = vadd.f32 %v2476, 1.0
    %v2480 = vadd.f32 %v2478, 1.0
    %v2481 = vrcp.pop %v2479
    %v2482 = vmul.f32 %v2479, %v2481
    %v2483 = vsub.f32 1.0, %v2482
    %v2484 = vmul.f32 %v2481, %v2483
    %v2485 = vadd.f32 %v2481, %v2484
    %vm2486 = vweird.f32 %v2479
    %vm2487 = vweird.f32 %v2481
    %vm2488 = vmor %vm2486, %vm2487
    %v2489 = vsel %vm2488, %v2481, %v2485
    %v2490 = vand.u32 2147483647, %v2479
    %vm2491 = vcmp.eq.f32.partialorder %v2490, 8.507059e+37
    %v2492 = vand.u32 %v2479, 2147483648
    %v2493 = vor.u32 1.1754944e-38, %v2492
    %v2494 = vsel %vm2491, %v2493, %v2489
    %v2495 = vmul.f32 1.0, %v2494
    %v2496 = vrcp.pop %v2480
    %v2497 = vmul.f32 %v2480, %v2496
    %v2498 = vsub.f32 1.0, %v2497
    %v2499 = vmul.f32 %v2496, %v2498
    %v2500 = vadd.f32 %v2496, %v2499
    %vm2501 = vweird.f32 %v2480
    %vm2502 = vweird.f32 %v2496
    %vm2503 = vmor %vm2501, %vm2502
    %v2504 = vsel %vm2503, %v2496, %v2500
    %v2505 = vand.u32 2147483647, %v2480
    %vm2506 = vcmp.eq.f32.partialorder %v2505, 8.507059e+37
    %v2507 = vand.u32 %v2480, 2147483648
    %v2508 = vor.u32 1.1754944e-38, %v2507
    %v2509 = vsel %vm2506, %v2508, %v2504
    %v2510 = vmul.f32 1.0, %v2509
    %v2511 = vadd.f32 %v2414, %v1687
    %2513 = vrot.lane.b32.xlu0 %v2511, 96
    %v2514 = vpop.permute.xlu0 %2513
    %v2516 = vmul.f32 %v2495, %v2514
    %2518 = vrot.lane.b32.xlu0 %v2516, 64
    %v2519 = vpop.permute.xlu0 %2518
    %v2521 = vadd.f32 %v2466, %v2519
    %v2522 = vtanh.pop %v2521
    %v2523 = vsub.f32 %v2347, %v2522
    %2525 = vrot.lane.b32.xlu0 %v2523, 96
    %v2526 = vpop.permute.xlu0 %2525
    %v2528 = vmul.f32 %v2510, %v2526
    %2530 = vrot.lane.b32.xlu0 %v2528, 32
    %v2531 = vpop.permute.xlu0 %2530
    %v2533 = vadd.f32 %v2522, %v2531
    %2535 = vrot.lane.b32.xlu0 %v2464, 64
    %v2536 = vpop.permute.xlu0 %2535
    %v2538 = vsel %vm274, %v2536, %v2533
    %v2540 = vsel %vm199, %v2538, 0
    %2542 = vmatpush.msra.mxu0 0.0
    %2543 = vmatpush.msra.mxu0 0.0
    %2544 = vmatpush.msra.mxu0 0.0
    %2545 = vmatpush.msra.mxu0 0.0
    %2546 = vmatpush.msra.mxu0 0.0
    %2547 = vmatpush.msra.mxu0 0.0
    %2548 = vmatpush.msra.mxu0 0.0
    %2549 = vmatpush.msra.mxu0 0.0
    %2550 = vmatpush.msra.mxu0 %v1713
    %2551 = vmatpush.msra.mxu0 %v1710
    %2552 = vmatpush.msra.mxu0 %v1707
    %2553 = vmatpush.msra.mxu0 %v1704
    %2554 = vmatpush.msra.mxu0 %v1701
    %2555 = vmatpush.msra.mxu0 %v1698
    %2556 = vmatpush.msra.mxu0 %v1695
    %2557 = vmatpush.msra.mxu0 %v1692
    %2558 = vmatmul.f32.gmra.mxu0 %v2540
    %v2559 = vpop.f32.mrf.mxu0
    %v2560 = vadd.f32 0.0, %v2559
    %2561 = vdwg.mxu0
    %2562 = vmatpush.msra.mxu0 0.0
    %2563 = vmatpush.msra.mxu0 0.0
    %2564 = vmatpush.msra.mxu0 0.0
    %2565 = vmatpush.msra.mxu0 0.0
    %2566 = vmatpush.msra.mxu0 0.0
    %2567 = vmatpush.msra.mxu0 0.0
    %2568 = vmatpush.msra.mxu0 0.0
    %2569 = vmatpush.msra.mxu0 0.0
    %2570 = vmatpush.msra.mxu0 %v1714
    %2571 = vmatpush.msra.mxu0 %v1711
    %2572 = vmatpush.msra.mxu0 %v1708
    %2573 = vmatpush.msra.mxu0 %v1705
    %2574 = vmatpush.msra.mxu0 %v1702
    %2575 = vmatpush.msra.mxu0 %v1699
    %2576 = vmatpush.msra.mxu0 %v1696
    %2577 = vmatpush.msra.mxu0 %v1693
    %2578 = vmatmul.f32.gmra.mxu0 %v2540
    %v2579 = vpop.f32.mrf.mxu0
    %v2580 = vadd.f32 0.0, %v2579
    %2581 = vdwg.mxu0
    %2582 = vmatpush.msra.mxu0 0.0
    %2583 = vmatpush.msra.mxu0 0.0
    %2584 = vmatpush.msra.mxu0 0.0
    %2585 = vmatpush.msra.mxu0 0.0
    %2586 = vmatpush.msra.mxu0 0.0
    %2587 = vmatpush.msra.mxu0 0.0
    %2588 = vmatpush.msra.mxu0 0.0
    %2589 = vmatpush.msra.mxu0 0.0
    %2590 = vmatpush.msra.mxu0 %v1715
    %2591 = vmatpush.msra.mxu0 %v1712
    %2592 = vmatpush.msra.mxu0 %v1709
    %2593 = vmatpush.msra.mxu0 %v1706
    %2594 = vmatpush.msra.mxu0 %v1703
    %2595 = vmatpush.msra.mxu0 %v1700
    %2596 = vmatpush.msra.mxu0 %v1697
    %2597 = vmatpush.msra.mxu0 %v1694
    %2598 = vmatmul.f32.gmra.mxu0 %v2540
    %v2599 = vpop.f32.mrf.mxu0
    %v2600 = vadd.f32 0.0, %v2599
    %2601 = vdwg.mxu0
    %v2602 = vadd.f32 %v2600, %v2041
    %2604 = vrot.lane.b32.xlu0 %v2602, 96
    %v2605 = vpop.permute.xlu0 %2604
    %2607 = vst.msk [vmem:[%s13 + $0x18] sm:$0xff] %vm2048, %v2605
    %v2608 = vadd.f32 %v1741, %v2560
    %v2609 = vxor.u32 %v2608, 2147483648
    %v2610 = vmul.f32 %v2609, 1.442695
    %v2611 = vpow.pop %v2610
    %v2612 = vadd.f32 %v2611, 1.0
    %v2613 = vrcp.pop %v2612
    %v2614 = vmul.f32 %v2612, %v2613
    %v2615 = vsub.f32 1.0, %v2614
    %v2616 = vmul.f32 %v2613, %v2615
    %v2617 = vadd.f32 %v2613, %v2616
    %vm2618 = vweird.f32 %v2612
    %vm2619 = vweird.f32 %v2613
    %vm2620 = vmor %vm2618, %vm2619
    %v2621 = vsel %vm2620, %v2613, %v2617
    %v2622 = vand.u32 2147483647, %v2612
    %vm2623 = vcmp.eq.f32.partialorder %v2622, 8.507059e+37
    %v2624 = vand.u32 %v2612, 2147483648
    %v2625 = vor.u32 1.1754944e-38, %v2624
    %v2626 = vsel %vm2623, %v2625, %v2621
    %v2627 = vmul.f32 1.0, %v2626
    %v2628 = vadd.f32 %v2560, %v1764
    %2630 = vrot.lane.b32.xlu0 %v2628, 64
    %v2631 = vpop.permute.xlu0 %2630
    %v2633 = vmul.f32 %v2627, %v2631
    %2635 = vrot.lane.b32.xlu0 %v2633, 64
    %v2636 = vpop.permute.xlu0 %2635
    %v2638 = vadd.f32 %v1741, %v2636
    %v2639 = vtanh.pop %v2638
    %v2640 = vsub.f32 %v2464, %v2639
    %2642 = vrot.lane.b32.xlu0 %v2640, 96
    %v2643 = vpop.permute.xlu0 %2642
    %v2645 = vmul.f32 %v2627, %v2643
    %2647 = vrot.lane.b32.xlu0 %v2645, 32
    %v2648 = vpop.permute.xlu0 %2647
    %v2650 = vadd.f32 %v2639, %v2648
    %v2651 = vadd.f32 %v2560, %v1901
    %v2652 = vadd.f32 %v2580, %v1901
    %2654 = vrot.lane.b32.xlu0 %v2580, 32
    %v2655 = vpop.permute.xlu0 %2654
    %v2657 = vadd.f32 %v2651, %v2655
    %v2658 = vadd.f32 %v2652, %v2655
    %v2659 = vxor.u32 %v2657, 2147483648
    %v2660 = vxor.u32 %v2658, 2147483648
    %v2661 = vmul.f32 %v2659, 1.442695
    %v2662 = vpow.pop %v2661
    %v2663 = vmul.f32 %v2660, 1.442695
    %v2664 = vpow.pop %v2663
    %v2665 = vadd.f32 %v2662, 1.0
    %v2666 = vadd.f32 %v2664, 1.0
    %v2667 = vrcp.pop %v2665
    %v2668 = vmul.f32 %v2665, %v2667
    %v2669 = vsub.f32 1.0, %v2668
    %v2670 = vmul.f32 %v2667, %v2669
    %v2671 = vadd.f32 %v2667, %v2670
    %vm2672 = vweird.f32 %v2665
    %vm2673 = vweird.f32 %v2667
    %vm2674 = vmor %vm2672, %vm2673
    %v2675 = vsel %vm2674, %v2667, %v2671
    %v2676 = vand.u32 2147483647, %v2665
    %vm2677 = vcmp.eq.f32.partialorder %v2676, 8.507059e+37
    %v2678 = vand.u32 %v2665, 2147483648
    %v2679 = vor.u32 1.1754944e-38, %v2678
    %v2680 = vsel %vm2677, %v2679, %v2675
    %v2681 = vmul.f32 1.0, %v2680
    %v2682 = vrcp.pop %v2666
    %v2683 = vmul.f32 %v2666, %v2682
    %v2684 = vsub.f32 1.0, %v2683
    %v2685 = vmul.f32 %v2682, %v2684
    %v2686 = vadd.f32 %v2682, %v2685
    %vm2687 = vweird.f32 %v2666
    %vm2688 = vweird.f32 %v2682
    %vm2689 = vmor %vm2687, %vm2688
    %v2690 = vsel %vm2689, %v2682, %v2686
    %v2691 = vand.u32 2147483647, %v2666
    %vm2692 = vcmp.eq.f32.partialorder %v2691, 8.507059e+37
    %v2693 = vand.u32 %v2666, 2147483648
    %v2694 = vor.u32 1.1754944e-38, %v2693
    %v2695 = vsel %vm2692, %v2694, %v2690
    %v2696 = vmul.f32 1.0, %v2695
    %v2697 = vadd.f32 %v2600, %v1687
    %2699 = vrot.lane.b32.xlu0 %v2697, 96
    %v2700 = vpop.permute.xlu0 %2699
    %v2702 = vmul.f32 %v2681, %v2700
    %2704 = vrot.lane.b32.xlu0 %v2702, 64
    %v2705 = vpop.permute.xlu0 %2704
    %v2707 = vadd.f32 %v2652, %v2705
    %v2708 = vtanh.pop %v2707
    %v2709 = vsub.f32 %v2533, %v2708
    %2711 = vrot.lane.b32.xlu0 %v2709, 96
    %v2712 = vpop.permute.xlu0 %2711
    %v2714 = vmul.f32 %v2696, %v2712
    %2716 = vrot.lane.b32.xlu0 %v2714, 32
    %v2717 = vpop.permute.xlu0 %2716
    %v2719 = vadd.f32 %v2708, %v2717
    %2721 = vrot.lane.b32.xlu0 %v2650, 64
    %v2722 = vpop.permute.xlu0 %2721
    %v2724 = vsel %vm274, %v2722, %v2719
    %v2726 = vsel %vm199, %v2724, 0
    %2728 = vmatpush.msra.mxu0 0.0
    %2729 = vmatpush.msra.mxu0 0.0
    %2730 = vmatpush.msra.mxu0 0.0
    %2731 = vmatpush.msra.mxu0 0.0
    %2732 = vmatpush.msra.mxu0 0.0
    %2733 = vmatpush.msra.mxu0 0.0
    %2734 = vmatpush.msra.mxu0 0.0
    %2735 = vmatpush.msra.mxu0 0.0
    %2736 = vmatpush.msra.mxu0 %v1713
    %2737 = vmatpush.msra.mxu0 %v1710
    %2738 = vmatpush.msra.mxu0 %v1707
    %2739 = vmatpush.msra.mxu0 %v1704
    %2740 = vmatpush.msra.mxu0 %v1701
    %2741 = vmatpush.msra.mxu0 %v1698
    %2742 = vmatpush.msra.mxu0 %v1695
    %2743 = vmatpush.msra.mxu0 %v1692
    %2744 = vmatmul.f32.gmra.mxu0 %v2726
    %v2745 = vpop.f32.mrf.mxu0
    %v2746 = vadd.f32 0.0, %v2745
    %2747 = vdwg.mxu0
    %2748 = vmatpush.msra.mxu0 0.0
    %2749 = vmatpush.msra.mxu0 0.0
    %2750 = vmatpush.msra.mxu0 0.0
    %2751 = vmatpush.msra.mxu0 0.0
    %2752 = vmatpush.msra.mxu0 0.0
    %2753 = vmatpush.msra.mxu0 0.0
    %2754 = vmatpush.msra.mxu0 0.0
    %2755 = vmatpush.msra.mxu0 0.0
    %2756 = vmatpush.msra.mxu0 %v1714
    %2757 = vmatpush.msra.mxu0 %v1711
    %2758 = vmatpush.msra.mxu0 %v1708
    %2759 = vmatpush.msra.mxu0 %v1705
    %2760 = vmatpush.msra.mxu0 %v1702
    %2761 = vmatpush.msra.mxu0 %v1699
    %2762 = vmatpush.msra.mxu0 %v1696
    %2763 = vmatpush.msra.mxu0 %v1693
    %2764 = vmatmul.f32.gmra.mxu0 %v2726
    %v2765 = vpop.f32.mrf.mxu0
    %v2766 = vadd.f32 0.0, %v2765
    %2767 = vdwg.mxu0
    %2768 = vmatpush.msra.mxu0 0.0
    %2769 = vmatpush.msra.mxu0 0.0
    %2770 = vmatpush.msra.mxu0 0.0
    %2771 = vmatpush.msra.mxu0 0.0
    %2772 = vmatpush.msra.mxu0 0.0
    %2773 = vmatpush.msra.mxu0 0.0
    %2774 = vmatpush.msra.mxu0 0.0
    %2775 = vmatpush.msra.mxu0 0.0
    %2776 = vmatpush.msra.mxu0 %v1715
    %2777 = vmatpush.msra.mxu0 %v1712
    %2778 = vmatpush.msra.mxu0 %v1709
    %2779 = vmatpush.msra.mxu0 %v1706
    %2780 = vmatpush.msra.mxu0 %v1703
    %2781 = vmatpush.msra.mxu0 %v1700
    %2782 = vmatpush.msra.mxu0 %v1697
    %2783 = vmatpush.msra.mxu0 %v1694
    %2784 = vmatmul.f32.gmra.mxu0 %v2726
    %v2785 = vpop.f32.mrf.mxu0
    %v2786 = vadd.f32 0.0, %v2785
    %2787 = vdwg.mxu0
    %v2788 = vadd.f32 %v2786, %v2041
    %2790 = vrot.lane.b32.xlu0 %v2788, 96
    %v2791 = vpop.permute.xlu0 %2790
    %2793 = vst.msk [vmem:[%s13 + $0x20] sm:$0xff] %vm2048, %v2791
    %v2794 = vadd.f32 %v1741, %v2746
    %v2795 = vxor.u32 %v2794, 2147483648
    %v2796 = vmul.f32 %v2795, 1.442695
    %v2797 = vpow.pop %v2796
    %v2798 = vadd.f32 %v2797, 1.0
    %v2799 = vrcp.pop %v2798
    %v2800 = vmul.f32 %v2798, %v2799
    %v2801 = vsub.f32 1.0, %v2800
    %v2802 = vmul.f32 %v2799, %v2801
    %v2803 = vadd.f32 %v2799, %v2802
    %vm2804 = vweird.f32 %v2798
    %vm2805 = vweird.f32 %v2799
    %vm2806 = vmor %vm2804, %vm2805
    %v2807 = vsel %vm2806, %v2799, %v2803
    %v2808 = vand.u32 2147483647, %v2798
    %vm2809 = vcmp.eq.f32.partialorder %v2808, 8.507059e+37
    %v2810 = vand.u32 %v2798, 2147483648
    %v2811 = vor.u32 1.1754944e-38, %v2810
    %v2812 = vsel %vm2809, %v2811, %v2807
    %v2813 = vmul.f32 1.0, %v2812
    %v2814 = vadd.f32 %v2746, %v1764
    %2816 = vrot.lane.b32.xlu0 %v2814, 64
    %v2817 = vpop.permute.xlu0 %2816
    %v2819 = vmul.f32 %v2813, %v2817
    %2821 = vrot.lane.b32.xlu0 %v2819, 64
    %v2822 = vpop.permute.xlu0 %2821
    %v2824 = vadd.f32 %v1741, %v2822
    %v2825 = vtanh.pop %v2824
    %v2826 = vsub.f32 %v2650, %v2825
    %2828 = vrot.lane.b32.xlu0 %v2826, 96
    %v2829 = vpop.permute.xlu0 %2828
    %v2831 = vmul.f32 %v2813, %v2829
    %2833 = vrot.lane.b32.xlu0 %v2831, 32
    %v2834 = vpop.permute.xlu0 %2833
    %v2836 = vadd.f32 %v2825, %v2834
    %v2837 = vadd.f32 %v2746, %v1901
    %v2838 = vadd.f32 %v2766, %v1901
    %2840 = vrot.lane.b32.xlu0 %v2766, 32
    %v2841 = vpop.permute.xlu0 %2840
    %v2843 = vadd.f32 %v2837, %v2841
    %v2844 = vadd.f32 %v2838, %v2841
    %v2845 = vxor.u32 %v2843, 2147483648
    %v2846 = vxor.u32 %v2844, 2147483648
    %v2847 = vmul.f32 %v2845, 1.442695
    %v2848 = vpow.pop %v2847
    %v2849 = vmul.f32 %v2846, 1.442695
    %v2850 = vpow.pop %v2849
    %v2851 = vadd.f32 %v2848, 1.0
    %v2852 = vadd.f32 %v2850, 1.0
    %v2853 = vrcp.pop %v2851
    %v2854 = vmul.f32 %v2851, %v2853
    %v2855 = vsub.f32 1.0, %v2854
    %v2856 = vmul.f32 %v2853, %v2855
    %v2857 = vadd.f32 %v2853, %v2856
    %vm2858 = vweird.f32 %v2851
    %vm2859 = vweird.f32 %v2853
    %vm2860 = vmor %vm2858, %vm2859
    %v2861 = vsel %vm2860, %v2853, %v2857
    %v2862 = vand.u32 2147483647, %v2851
    %vm2863 = vcmp.eq.f32.partialorder %v2862, 8.507059e+37
    %v2864 = vand.u32 %v2851, 2147483648
    %v2865 = vor.u32 1.1754944e-38, %v2864
    %v2866 = vsel %vm2863, %v2865, %v2861
    %v2867 = vmul.f32 1.0, %v2866
    %v2868 = vrcp.pop %v2852
    %v2869 = vmul.f32 %v2852, %v2868
    %v2870 = vsub.f32 1.0, %v2869
    %v2871 = vmul.f32 %v2868, %v2870
    %v2872 = vadd.f32 %v2868, %v2871
    %vm2873 = vweird.f32 %v2852
    %vm2874 = vweird.f32 %v2868
    %vm2875 = vmor %vm2873, %vm2874
    %v2876 = vsel %vm2875, %v2868, %v2872
    %v2877 = vand.u32 2147483647, %v2852
    %vm2878 = vcmp.eq.f32.partialorder %v2877, 8.507059e+37
    %v2879 = vand.u32 %v2852, 2147483648
    %v2880 = vor.u32 1.1754944e-38, %v2879
    %v2881 = vsel %vm2878, %v2880, %v2876
    %v2882 = vmul.f32 1.0, %v2881
    %v2883 = vadd.f32 %v2786, %v1687
    %2885 = vrot.lane.b32.xlu0 %v2883, 96
    %v2886 = vpop.permute.xlu0 %2885
    %v2888 = vmul.f32 %v2867, %v2886
    %2890 = vrot.lane.b32.xlu0 %v2888, 64
    %v2891 = vpop.permute.xlu0 %2890
    %v2893 = vadd.f32 %v2838, %v2891
    %v2894 = vtanh.pop %v2893
    %v2895 = vsub.f32 %v2719, %v2894
    %2897 = vrot.lane.b32.xlu0 %v2895, 96
    %v2898 = vpop.permute.xlu0 %2897
    %v2900 = vmul.f32 %v2882, %v2898
    %2902 = vrot.lane.b32.xlu0 %v2900, 32
    %v2903 = vpop.permute.xlu0 %2902
    %v2905 = vadd.f32 %v2894, %v2903
    %2907 = vrot.lane.b32.xlu0 %v2836, 64
    %v2908 = vpop.permute.xlu0 %2907
    %v2910 = vsel %vm274, %v2908, %v2905
    %v2912 = vsel %vm199, %v2910, 0
    %2914 = vmatpush.msra.mxu0 0.0
    %2915 = vmatpush.msra.mxu0 0.0
    %2916 = vmatpush.msra.mxu0 0.0
    %2917 = vmatpush.msra.mxu0 0.0
    %2918 = vmatpush.msra.mxu0 0.0
    %2919 = vmatpush.msra.mxu0 0.0
    %2920 = vmatpush.msra.mxu0 0.0
    %2921 = vmatpush.msra.mxu0 0.0
    %2922 = vmatpush.msra.mxu0 %v1713
    %2923 = vmatpush.msra.mxu0 %v1710
    %2924 = vmatpush.msra.mxu0 %v1707
    %2925 = vmatpush.msra.mxu0 %v1704
    %2926 = vmatpush.msra.mxu0 %v1701
    %2927 = vmatpush.msra.mxu0 %v1698
    %2928 = vmatpush.msra.mxu0 %v1695
    %2929 = vmatpush.msra.mxu0 %v1692
    %2930 = vmatmul.f32.gmra.mxu0 %v2912
    %v2931 = vpop.f32.mrf.mxu0
    %v2932 = vadd.f32 0.0, %v2931
    %2933 = vdwg.mxu0
    %2934 = vmatpush.msra.mxu0 0.0
    %2935 = vmatpush.msra.mxu0 0.0
    %2936 = vmatpush.msra.mxu0 0.0
    %2937 = vmatpush.msra.mxu0 0.0
    %2938 = vmatpush.msra.mxu0 0.0
    %2939 = vmatpush.msra.mxu0 0.0
    %2940 = vmatpush.msra.mxu0 0.0
    %2941 = vmatpush.msra.mxu0 0.0
    %2942 = vmatpush.msra.mxu0 %v1714
    %2943 = vmatpush.msra.mxu0 %v1711
    %2944 = vmatpush.msra.mxu0 %v1708
    %2945 = vmatpush.msra.mxu0 %v1705
    %2946 = vmatpush.msra.mxu0 %v1702
    %2947 = vmatpush.msra.mxu0 %v1699
    %2948 = vmatpush.msra.mxu0 %v1696
    %2949 = vmatpush.msra.mxu0 %v1693
    %2950 = vmatmul.f32.gmra.mxu0 %v2912
    %v2951 = vpop.f32.mrf.mxu0
    %v2952 = vadd.f32 0.0, %v2951
    %2953 = vdwg.mxu0
    %2954 = vmatpush.msra.mxu0 0.0
    %2955 = vmatpush.msra.mxu0 0.0
    %2956 = vmatpush.msra.mxu0 0.0
    %2957 = vmatpush.msra.mxu0 0.0
    %2958 = vmatpush.msra.mxu0 0.0
    %2959 = vmatpush.msra.mxu0 0.0
    %2960 = vmatpush.msra.mxu0 0.0
    %2961 = vmatpush.msra.mxu0 0.0
    %2962 = vmatpush.msra.mxu0 %v1715
    %2963 = vmatpush.msra.mxu0 %v1712
    %2964 = vmatpush.msra.mxu0 %v1709
    %2965 = vmatpush.msra.mxu0 %v1706
    %2966 = vmatpush.msra.mxu0 %v1703
    %2967 = vmatpush.msra.mxu0 %v1700
    %2968 = vmatpush.msra.mxu0 %v1697
    %2969 = vmatpush.msra.mxu0 %v1694
    %2970 = vmatmul.f32.gmra.mxu0 %v2912
    %v2971 = vpop.f32.mrf.mxu0
    %v2972 = vadd.f32 0.0, %v2971
    %2973 = vdwg.mxu0
    %v2974 = vadd.f32 %v2972, %v2041
    %2976 = vrot.lane.b32.xlu0 %v2974, 96
    %v2977 = vpop.permute.xlu0 %2976
    %2979 = vst.msk [vmem:[%s13 + $0x28] sm:$0xff] %vm2048, %v2977
    %v2980 = vadd.f32 %v1741, %v2932
    %v2981 = vxor.u32 %v2980, 2147483648
    %v2982 = vmul.f32 %v2981, 1.442695
    %v2983 = vpow.pop %v2982
    %v2984 = vadd.f32 %v2983, 1.0
    %v2985 = vrcp.pop %v2984
    %v2986 = vmul.f32 %v2984, %v2985
    %v2987 = vsub.f32 1.0, %v2986
    %v2988 = vmul.f32 %v2985, %v2987
    %v2989 = vadd.f32 %v2985, %v2988
    %vm2990 = vweird.f32 %v2984
    %vm2991 = vweird.f32 %v2985
    %vm2992 = vmor %vm2990, %vm2991
    %v2993 = vsel %vm2992, %v2985, %v2989
    %v2994 = vand.u32 2147483647, %v2984
    %vm2995 = vcmp.eq.f32.partialorder %v2994, 8.507059e+37
    %v2996 = vand.u32 %v2984, 2147483648
    %v2997 = vor.u32 1.1754944e-38, %v2996
    %v2998 = vsel %vm2995, %v2997, %v2993
    %v2999 = vmul.f32 1.0, %v2998
    %v3000 = vadd.f32 %v2932, %v1764
    %3002 = vrot.lane.b32.xlu0 %v3000, 64
    %v3003 = vpop.permute.xlu0 %3002
    %v3005 = vmul.f32 %v2999, %v3003
    %3007 = vrot.lane.b32.xlu0 %v3005, 64
    %v3008 = vpop.permute.xlu0 %3007
    %v3010 = vadd.f32 %v1741, %v3008
    %v3011 = vtanh.pop %v3010
    %v3012 = vsub.f32 %v2836, %v3011
    %3014 = vrot.lane.b32.xlu0 %v3012, 96
    %v3015 = vpop.permute.xlu0 %3014
    %v3017 = vmul.f32 %v2999, %v3015
    %3019 = vrot.lane.b32.xlu0 %v3017, 32
    %v3020 = vpop.permute.xlu0 %3019
    %v3022 = vadd.f32 %v3011, %v3020
    %v3023 = vadd.f32 %v2932, %v1901
    %v3024 = vadd.f32 %v2952, %v1901
    %3026 = vrot.lane.b32.xlu0 %v2952, 32
    %v3027 = vpop.permute.xlu0 %3026
    %v3029 = vadd.f32 %v3023, %v3027
    %v3030 = vadd.f32 %v3024, %v3027
    %v3031 = vxor.u32 %v3029, 2147483648
    %v3032 = vxor.u32 %v3030, 2147483648
    %v3033 = vmul.f32 %v3031, 1.442695
    %v3034 = vpow.pop %v3033
    %v3035 = vmul.f32 %v3032, 1.442695
    %v3036 = vpow.pop %v3035
    %v3037 = vadd.f32 %v3034, 1.0
    %v3038 = vadd.f32 %v3036, 1.0
    %v3039 = vrcp.pop %v3037
    %v3040 = vmul.f32 %v3037, %v3039
    %v3041 = vsub.f32 1.0, %v3040
    %v3042 = vmul.f32 %v3039, %v3041
    %v3043 = vadd.f32 %v3039, %v3042
    %vm3044 = vweird.f32 %v3037
    %vm3045 = vweird.f32 %v3039
    %vm3046 = vmor %vm3044, %vm3045
    %v3047 = vsel %vm3046, %v3039, %v3043
    %v3048 = vand.u32 2147483647, %v3037
    %vm3049 = vcmp.eq.f32.partialorder %v3048, 8.507059e+37
    %v3050 = vand.u32 %v3037, 2147483648
    %v3051 = vor.u32 1.1754944e-38, %v3050
    %v3052 = vsel %vm3049, %v3051, %v3047
    %v3053 = vmul.f32 1.0, %v3052
    %v3054 = vrcp.pop %v3038
    %v3055 = vmul.f32 %v3038, %v3054
    %v3056 = vsub.f32 1.0, %v3055
    %v3057 = vmul.f32 %v3054, %v3056
    %v3058 = vadd.f32 %v3054, %v3057
    %vm3059 = vweird.f32 %v3038
    %vm3060 = vweird.f32 %v3054
    %vm3061 = vmor %vm3059, %vm3060
    %v3062 = vsel %vm3061, %v3054, %v3058
    %v3063 = vand.u32 2147483647, %v3038
    %vm3064 = vcmp.eq.f32.partialorder %v3063, 8.507059e+37
    %v3065 = vand.u32 %v3038, 2147483648
    %v3066 = vor.u32 1.1754944e-38, %v3065
    %v3067 = vsel %vm3064, %v3066, %v3062
    %v3068 = vmul.f32 1.0, %v3067
    %v3069 = vadd.f32 %v2972, %v1687
    %3071 = vrot.lane.b32.xlu0 %v3069, 96
    %v3072 = vpop.permute.xlu0 %3071
    %v3074 = vmul.f32 %v3053, %v3072
    %3076 = vrot.lane.b32.xlu0 %v3074, 64
    %v3077 = vpop.permute.xlu0 %3076
    %v3079 = vadd.f32 %v3024, %v3077
    %v3080 = vtanh.pop %v3079
    %v3081 = vsub.f32 %v2905, %v3080
    %3083 = vrot.lane.b32.xlu0 %v3081, 96
    %v3084 = vpop.permute.xlu0 %3083
    %v3086 = vmul.f32 %v3068, %v3084
    %3088 = vrot.lane.b32.xlu0 %v3086, 32
    %v3089 = vpop.permute.xlu0 %3088
    %v3091 = vadd.f32 %v3080, %v3089
    %3093 = vrot.lane.b32.xlu0 %v3022, 64
    %v3094 = vpop.permute.xlu0 %3093
    %v3096 = vsel %vm274, %v3094, %v3091
    %v3098 = vsel %vm199, %v3096, 0
    %3100 = vmatpush.msra.mxu0 0.0
    %3101 = vmatpush.msra.mxu0 0.0
    %3102 = vmatpush.msra.mxu0 0.0
    %3103 = vmatpush.msra.mxu0 0.0
    %3104 = vmatpush.msra.mxu0 0.0
    %3105 = vmatpush.msra.mxu0 0.0
    %3106 = vmatpush.msra.mxu0 0.0
    %3107 = vmatpush.msra.mxu0 0.0
    %3108 = vmatpush.msra.mxu0 %v1713
    %3109 = vmatpush.msra.mxu0 %v1710
    %3110 = vmatpush.msra.mxu0 %v1707
    %3111 = vmatpush.msra.mxu0 %v1704
    %3112 = vmatpush.msra.mxu0 %v1701
    %3113 = vmatpush.msra.mxu0 %v1698
    %3114 = vmatpush.msra.mxu0 %v1695
    %3115 = vmatpush.msra.mxu0 %v1692
    %3116 = vmatmul.f32.gmra.mxu0 %v3098
    %v3117 = vpop.f32.mrf.mxu0
    %v3118 = vadd.f32 0.0, %v3117
    %3119 = vdwg.mxu0
    %3120 = vmatpush.msra.mxu0 0.0
    %3121 = vmatpush.msra.mxu0 0.0
    %3122 = vmatpush.msra.mxu0 0.0
    %3123 = vmatpush.msra.mxu0 0.0
    %3124 = vmatpush.msra.mxu0 0.0
    %3125 = vmatpush.msra.mxu0 0.0
    %3126 = vmatpush.msra.mxu0 0.0
    %3127 = vmatpush.msra.mxu0 0.0
    %3128 = vmatpush.msra.mxu0 %v1714
    %3129 = vmatpush.msra.mxu0 %v1711
    %3130 = vmatpush.msra.mxu0 %v1708
    %3131 = vmatpush.msra.mxu0 %v1705
    %3132 = vmatpush.msra.mxu0 %v1702
    %3133 = vmatpush.msra.mxu0 %v1699
    %3134 = vmatpush.msra.mxu0 %v1696
    %3135 = vmatpush.msra.mxu0 %v1693
    %3136 = vmatmul.f32.gmra.mxu0 %v3098
    %v3137 = vpop.f32.mrf.mxu0
    %v3138 = vadd.f32 0.0, %v3137
    %3139 = vdwg.mxu0
    %3140 = vmatpush.msra.mxu0 0.0
    %3141 = vmatpush.msra.mxu0 0.0
    %3142 = vmatpush.msra.mxu0 0.0
    %3143 = vmatpush.msra.mxu0 0.0
    %3144 = vmatpush.msra.mxu0 0.0
    %3145 = vmatpush.msra.mxu0 0.0
    %3146 = vmatpush.msra.mxu0 0.0
    %3147 = vmatpush.msra.mxu0 0.0
    %3148 = vmatpush.msra.mxu0 %v1715
    %3149 = vmatpush.msra.mxu0 %v1712
    %3150 = vmatpush.msra.mxu0 %v1709
    %3151 = vmatpush.msra.mxu0 %v1706
    %3152 = vmatpush.msra.mxu0 %v1703
    %3153 = vmatpush.msra.mxu0 %v1700
    %3154 = vmatpush.msra.mxu0 %v1697
    %3155 = vmatpush.msra.mxu0 %v1694
    %3156 = vmatmul.f32.gmra.mxu0 %v3098
    %v3157 = vpop.f32.mrf.mxu0
    %v3158 = vadd.f32 0.0, %v3157
    %3159 = vdwg.mxu0
    %v3160 = vadd.f32 %v3158, %v2041
    %3162 = vrot.lane.b32.xlu0 %v3160, 96
    %v3163 = vpop.permute.xlu0 %3162
    %3165 = vst.msk [vmem:[%s13 + $0x30] sm:$0xff] %vm2048, %v3163
    %v3166 = vadd.f32 %v1741, %v3118
    %v3167 = vxor.u32 %v3166, 2147483648
    %v3168 = vmul.f32 %v3167, 1.442695
    %v3169 = vpow.pop %v3168
    %v3170 = vadd.f32 %v3169, 1.0
    %v3171 = vrcp.pop %v3170
    %v3172 = vmul.f32 %v3170, %v3171
    %v3173 = vsub.f32 1.0, %v3172
    %v3174 = vmul.f32 %v3171, %v3173
    %v3175 = vadd.f32 %v3171, %v3174
    %vm3176 = vweird.f32 %v3170
    %vm3177 = vweird.f32 %v3171
    %vm3178 = vmor %vm3176, %vm3177
    %v3179 = vsel %vm3178, %v3171, %v3175
    %v3180 = vand.u32 2147483647, %v3170
    %vm3181 = vcmp.eq.f32.partialorder %v3180, 8.507059e+37
    %v3182 = vand.u32 %v3170, 2147483648
    %v3183 = vor.u32 1.1754944e-38, %v3182
    %v3184 = vsel %vm3181, %v3183, %v3179
    %v3185 = vmul.f32 1.0, %v3184
    %v3186 = vadd.f32 %v3118, %v1764
    %3188 = vrot.lane.b32.xlu0 %v3186, 64
    %v3189 = vpop.permute.xlu0 %3188
    %v3191 = vmul.f32 %v3185, %v3189
    %3193 = vrot.lane.b32.xlu0 %v3191, 64
    %v3194 = vpop.permute.xlu0 %3193
    %v3196 = vadd.f32 %v1741, %v3194
    %v3197 = vtanh.pop %v3196
    %v3198 = vsub.f32 %v3022, %v3197
    %3200 = vrot.lane.b32.xlu0 %v3198, 96
    %v3201 = vpop.permute.xlu0 %3200
    %v3203 = vmul.f32 %v3185, %v3201
    %3205 = vrot.lane.b32.xlu0 %v3203, 32
    %v3206 = vpop.permute.xlu0 %3205
    %v3208 = vadd.f32 %v3197, %v3206
    %v3209 = vadd.f32 %v3118, %v1901
    %v3210 = vadd.f32 %v3138, %v1901
    %3212 = vrot.lane.b32.xlu0 %v3138, 32
    %v3213 = vpop.permute.xlu0 %3212
    %v3215 = vadd.f32 %v3209, %v3213
    %v3216 = vadd.f32 %v3210, %v3213
    %v3217 = vxor.u32 %v3215, 2147483648
    %v3218 = vxor.u32 %v3216, 2147483648
    %v3219 = vmul.f32 %v3217, 1.442695
    %v3220 = vpow.pop %v3219
    %v3221 = vmul.f32 %v3218, 1.442695
    %v3222 = vpow.pop %v3221
    %v3223 = vadd.f32 %v3220, 1.0
    %v3224 = vadd.f32 %v3222, 1.0
    %v3225 = vrcp.pop %v3223
    %v3226 = vmul.f32 %v3223, %v3225
    %v3227 = vsub.f32 1.0, %v3226
    %v3228 = vmul.f32 %v3225, %v3227
    %v3229 = vadd.f32 %v3225, %v3228
    %vm3230 = vweird.f32 %v3223
    %vm3231 = vweird.f32 %v3225
    %vm3232 = vmor %vm3230, %vm3231
    %v3233 = vsel %vm3232, %v3225, %v3229
    %v3234 = vand.u32 2147483647, %v3223
    %vm3235 = vcmp.eq.f32.partialorder %v3234, 8.507059e+37
    %v3236 = vand.u32 %v3223, 2147483648
    %v3237 = vor.u32 1.1754944e-38, %v3236
    %v3238 = vsel %vm3235, %v3237, %v3233
    %v3239 = vmul.f32 1.0, %v3238
    %v3240 = vrcp.pop %v3224
    %v3241 = vmul.f32 %v3224, %v3240
    %v3242 = vsub.f32 1.0, %v3241
    %v3243 = vmul.f32 %v3240, %v3242
    %v3244 = vadd.f32 %v3240, %v3243
    %vm3245 = vweird.f32 %v3224
    %vm3246 = vweird.f32 %v3240
    %vm3247 = vmor %vm3245, %vm3246
    %v3248 = vsel %vm3247, %v3240, %v3244
    %v3249 = vand.u32 2147483647, %v3224
    %vm3250 = vcmp.eq.f32.partialorder %v3249, 8.507059e+37
    %v3251 = vand.u32 %v3224, 2147483648
    %v3252 = vor.u32 1.1754944e-38, %v3251
    %v3253 = vsel %vm3250, %v3252, %v3248
    %v3254 = vmul.f32 1.0, %v3253
    %v3255 = vadd.f32 %v3158, %v1687
    %3257 = vrot.lane.b32.xlu0 %v3255, 96
    %v3258 = vpop.permute.xlu0 %3257
    %v3260 = vmul.f32 %v3239, %v3258
    %3262 = vrot.lane.b32.xlu0 %v3260, 64
    %v3263 = vpop.permute.xlu0 %3262
    %v3265 = vadd.f32 %v3210, %v3263
    %v3266 = vtanh.pop %v3265
    %v3267 = vsub.f32 %v3091, %v3266
    %3269 = vrot.lane.b32.xlu0 %v3267, 96
    %v3270 = vpop.permute.xlu0 %3269
    %v3272 = vmul.f32 %v3254, %v3270
    %3274 = vrot.lane.b32.xlu0 %v3272, 32
    %v3275 = vpop.permute.xlu0 %3274
    %v3277 = vadd.f32 %v3266, %v3275
    %3279 = vrot.lane.b32.xlu0 %v3208, 64
    %v3280 = vpop.permute.xlu0 %3279
    %v3282 = vsel %vm274, %v3280, %v3277
    %v3284 = vsel %vm199, %v3282, 0
    %3286 = vmatpush.msra.mxu0 0.0
    %3287 = vmatpush.msra.mxu0 0.0
    %3288 = vmatpush.msra.mxu0 0.0
    %3289 = vmatpush.msra.mxu0 0.0
    %3290 = vmatpush.msra.mxu0 0.0
    %3291 = vmatpush.msra.mxu0 0.0
    %3292 = vmatpush.msra.mxu0 0.0
    %3293 = vmatpush.msra.mxu0 0.0
    %3294 = vmatpush.msra.mxu0 %v1713
    %3295 = vmatpush.msra.mxu0 %v1710
    %3296 = vmatpush.msra.mxu0 %v1707
    %3297 = vmatpush.msra.mxu0 %v1704
    %3298 = vmatpush.msra.mxu0 %v1701
    %3299 = vmatpush.msra.mxu0 %v1698
    %3300 = vmatpush.msra.mxu0 %v1695
    %3301 = vmatpush.msra.mxu0 %v1692
    %3302 = vmatmul.f32.gmra.mxu0 %v3284
    %v3303 = vpop.f32.mrf.mxu0
    %v3304 = vadd.f32 0.0, %v3303
    %3305 = vdwg.mxu0
    %3306 = vmatpush.msra.mxu0 0.0
    %3307 = vmatpush.msra.mxu0 0.0
    %3308 = vmatpush.msra.mxu0 0.0
    %3309 = vmatpush.msra.mxu0 0.0
    %3310 = vmatpush.msra.mxu0 0.0
    %3311 = vmatpush.msra.mxu0 0.0
    %3312 = vmatpush.msra.mxu0 0.0
    %3313 = vmatpush.msra.mxu0 0.0
    %3314 = vmatpush.msra.mxu0 %v1714
    %3315 = vmatpush.msra.mxu0 %v1711
    %3316 = vmatpush.msra.mxu0 %v1708
    %3317 = vmatpush.msra.mxu0 %v1705
    %3318 = vmatpush.msra.mxu0 %v1702
    %3319 = vmatpush.msra.mxu0 %v1699
    %3320 = vmatpush.msra.mxu0 %v1696
    %3321 = vmatpush.msra.mxu0 %v1693
    %3322 = vmatmul.f32.gmra.mxu0 %v3284
    %v3323 = vpop.f32.mrf.mxu0
    %v3324 = vadd.f32 0.0, %v3323
    %3325 = vdwg.mxu0
    %3326 = vmatpush.msra.mxu0 0.0
    %3327 = vmatpush.msra.mxu0 0.0
    %3328 = vmatpush.msra.mxu0 0.0
    %3329 = vmatpush.msra.mxu0 0.0
    %3330 = vmatpush.msra.mxu0 0.0
    %3331 = vmatpush.msra.mxu0 0.0
    %3332 = vmatpush.msra.mxu0 0.0
    %3333 = vmatpush.msra.mxu0 0.0
    %3334 = vmatpush.msra.mxu0 %v1715
    %3335 = vmatpush.msra.mxu0 %v1712
    %3336 = vmatpush.msra.mxu0 %v1709
    %3337 = vmatpush.msra.mxu0 %v1706
    %3338 = vmatpush.msra.mxu0 %v1703
    %3339 = vmatpush.msra.mxu0 %v1700
    %3340 = vmatpush.msra.mxu0 %v1697
    %3341 = vmatpush.msra.mxu0 %v1694
    %3342 = vmatmul.f32.gmra.mxu0 %v3284
    %v3343 = vpop.f32.mrf.mxu0
    %v3344 = vadd.f32 0.0, %v3343
    %3345 = vdwg.mxu0
    %v3346 = vadd.f32 %v3344, %v2041
    %3348 = vrot.lane.b32.xlu0 %v3346, 96
    %v3349 = vpop.permute.xlu0 %3348
    %3351 = vst.msk [vmem:[%s13 + $0x38] sm:$0xff] %vm2048, %v3349
    %v3352 = vadd.f32 %v1741, %v3304
    %v3353 = vxor.u32 %v3352, 2147483648
    %v3354 = vmul.f32 %v3353, 1.442695
    %v3355 = vpow.pop %v3354
    %v3356 = vadd.f32 %v3355, 1.0
    %v3357 = vrcp.pop %v3356
    %v3358 = vmul.f32 %v3356, %v3357
    %v3359 = vsub.f32 1.0, %v3358
    %v3360 = vmul.f32 %v3357, %v3359
    %v3361 = vadd.f32 %v3357, %v3360
    %vm3362 = vweird.f32 %v3356
    %vm3363 = vweird.f32 %v3357
    %vm3364 = vmor %vm3362, %vm3363
    %v3365 = vsel %vm3364, %v3357, %v3361
    %v3366 = vand.u32 2147483647, %v3356
    %vm3367 = vcmp.eq.f32.partialorder %v3366, 8.507059e+37
    %v3368 = vand.u32 %v3356, 2147483648
    %v3369 = vor.u32 1.1754944e-38, %v3368
    %v3370 = vsel %vm3367, %v3369, %v3365
    %v3371 = vmul.f32 1.0, %v3370
    %v3372 = vadd.f32 %v3304, %v1764
    %3374 = vrot.lane.b32.xlu0 %v3372, 64
    %v3375 = vpop.permute.xlu0 %3374
    %v3377 = vmul.f32 %v3371, %v3375
    %3379 = vrot.lane.b32.xlu0 %v3377, 64
    %v3380 = vpop.permute.xlu0 %3379
    %v3382 = vadd.f32 %v1741, %v3380
    %v3383 = vtanh.pop %v3382
    %v3384 = vsub.f32 %v3208, %v3383
    %3386 = vrot.lane.b32.xlu0 %v3384, 96
    %v3387 = vpop.permute.xlu0 %3386
    %v3389 = vmul.f32 %v3371, %v3387
    %3391 = vrot.lane.b32.xlu0 %v3389, 32
    %v3392 = vpop.permute.xlu0 %3391
    %v3394 = vadd.f32 %v3383, %v3392
    %v3395 = vadd.f32 %v3304, %v1901
    %v3396 = vadd.f32 %v3324, %v1901
    %3398 = vrot.lane.b32.xlu0 %v3324, 32
    %v3399 = vpop.permute.xlu0 %3398
    %v3401 = vadd.f32 %v3395, %v3399
    %v3402 = vadd.f32 %v3396, %v3399
    %v3403 = vxor.u32 %v3401, 2147483648
    %v3404 = vxor.u32 %v3402, 2147483648
    %v3405 = vmul.f32 %v3403, 1.442695
    %v3406 = vpow.pop %v3405
    %v3407 = vmul.f32 %v3404, 1.442695
    %v3408 = vpow.pop %v3407
    %v3409 = vadd.f32 %v3406, 1.0
    %v3410 = vadd.f32 %v3408, 1.0
    %v3411 = vrcp.pop %v3409
    %v3412 = vmul.f32 %v3409, %v3411
    %v3413 = vsub.f32 1.0, %v3412
    %v3414 = vmul.f32 %v3411, %v3413
    %v3415 = vadd.f32 %v3411, %v3414
    %vm3416 = vweird.f32 %v3409
    %vm3417 = vweird.f32 %v3411
    %vm3418 = vmor %vm3416, %vm3417
    %v3419 = vsel %vm3418, %v3411, %v3415
    %v3420 = vand.u32 2147483647, %v3409
    %vm3421 = vcmp.eq.f32.partialorder %v3420, 8.507059e+37
    %v3422 = vand.u32 %v3409, 2147483648
    %v3423 = vor.u32 1.1754944e-38, %v3422
    %v3424 = vsel %vm3421, %v3423, %v3419
    %v3425 = vmul.f32 1.0, %v3424
    %v3426 = vrcp.pop %v3410
    %v3427 = vmul.f32 %v3410, %v3426
    %v3428 = vsub.f32 1.0, %v3427
    %v3429 = vmul.f32 %v3426, %v3428
    %v3430 = vadd.f32 %v3426, %v3429
    %vm3431 = vweird.f32 %v3410
    %vm3432 = vweird.f32 %v3426
    %vm3433 = vmor %vm3431, %vm3432
    %v3434 = vsel %vm3433, %v3426, %v3430
    %v3435 = vand.u32 2147483647, %v3410
    %vm3436 = vcmp.eq.f32.partialorder %v3435, 8.507059e+37
    %v3437 = vand.u32 %v3410, 2147483648
    %v3438 = vor.u32 1.1754944e-38, %v3437
    %v3439 = vsel %vm3436, %v3438, %v3434
    %v3440 = vmul.f32 1.0, %v3439
    %v3441 = vadd.f32 %v3344, %v1687
    %3443 = vrot.lane.b32.xlu0 %v3441, 96
    %v3444 = vpop.permute.xlu0 %3443
    %v3446 = vmul.f32 %v3425, %v3444
    %3448 = vrot.lane.b32.xlu0 %v3446, 64
    %v3449 = vpop.permute.xlu0 %3448
    %v3451 = vadd.f32 %v3396, %v3449
    %v3452 = vtanh.pop %v3451
    %v3453 = vsub.f32 %v3277, %v3452
    %3455 = vrot.lane.b32.xlu0 %v3453, 96
    %v3456 = vpop.permute.xlu0 %3455
    %v3458 = vmul.f32 %v3440, %v3456
    %3460 = vrot.lane.b32.xlu0 %v3458, 32
    %v3461 = vpop.permute.xlu0 %3460
    %v3463 = vadd.f32 %v3452, %v3461
    %3465 = vrot.lane.b32.xlu0 %v3394, 64
    %v3466 = vpop.permute.xlu0 %3465
    %v3468 = vsel %vm274, %v3466, %v3463
    %v3470 = vsel %vm199, %v3468, 0
    %3472 = vmatpush.msra.mxu0 0.0
    %3473 = vmatpush.msra.mxu0 0.0
    %3474 = vmatpush.msra.mxu0 0.0
    %3475 = vmatpush.msra.mxu0 0.0
    %3476 = vmatpush.msra.mxu0 0.0
    %3477 = vmatpush.msra.mxu0 0.0
    %3478 = vmatpush.msra.mxu0 0.0
    %3479 = vmatpush.msra.mxu0 0.0
    %3480 = vmatpush.msra.mxu0 %v1713
    %3481 = vmatpush.msra.mxu0 %v1710
    %3482 = vmatpush.msra.mxu0 %v1707
    %3483 = vmatpush.msra.mxu0 %v1704
    %3484 = vmatpush.msra.mxu0 %v1701
    %3485 = vmatpush.msra.mxu0 %v1698
    %3486 = vmatpush.msra.mxu0 %v1695
    %3487 = vmatpush.msra.mxu0 %v1692
    %3488 = vmatmul.f32.gmra.mxu0 %v3470
    %v3489 = vpop.f32.mrf.mxu0
    %v3490 = vadd.f32 0.0, %v3489
    %3491 = vdwg.mxu0
    %3492 = vmatpush.msra.mxu0 0.0
    %3493 = vmatpush.msra.mxu0 0.0
    %3494 = vmatpush.msra.mxu0 0.0
    %3495 = vmatpush.msra.mxu0 0.0
    %3496 = vmatpush.msra.mxu0 0.0
    %3497 = vmatpush.msra.mxu0 0.0
    %3498 = vmatpush.msra.mxu0 0.0
    %3499 = vmatpush.msra.mxu0 0.0
    %3500 = vmatpush.msra.mxu0 %v1714
    %3501 = vmatpush.msra.mxu0 %v1711
    %3502 = vmatpush.msra.mxu0 %v1708
    %3503 = vmatpush.msra.mxu0 %v1705
    %3504 = vmatpush.msra.mxu0 %v1702
    %3505 = vmatpush.msra.mxu0 %v1699
    %3506 = vmatpush.msra.mxu0 %v1696
    %3507 = vmatpush.msra.mxu0 %v1693
    %3508 = vmatmul.f32.gmra.mxu0 %v3470
    %v3509 = vpop.f32.mrf.mxu0
    %v3510 = vadd.f32 0.0, %v3509
    %3511 = vdwg.mxu0
    %3512 = vmatpush.msra.mxu0 0.0
    %3513 = vmatpush.msra.mxu0 0.0
    %3514 = vmatpush.msra.mxu0 0.0
    %3515 = vmatpush.msra.mxu0 0.0
    %3516 = vmatpush.msra.mxu0 0.0
    %3517 = vmatpush.msra.mxu0 0.0
    %3518 = vmatpush.msra.mxu0 0.0
    %3519 = vmatpush.msra.mxu0 0.0
    %3520 = vmatpush.msra.mxu0 %v1715
    %3521 = vmatpush.msra.mxu0 %v1712
    %3522 = vmatpush.msra.mxu0 %v1709
    %3523 = vmatpush.msra.mxu0 %v1706
    %3524 = vmatpush.msra.mxu0 %v1703
    %3525 = vmatpush.msra.mxu0 %v1700
    %3526 = vmatpush.msra.mxu0 %v1697
    %3527 = vmatpush.msra.mxu0 %v1694
    %3528 = vmatmul.f32.gmra.mxu0 %v3470
    %v3529 = vpop.f32.mrf.mxu0
    %v3530 = vadd.f32 0.0, %v3529
    %3531 = vdwg.mxu0
    %v3532 = vadd.f32 %v3530, %v2041
    %3534 = vrot.lane.b32.xlu0 %v3532, 96
    %v3535 = vpop.permute.xlu0 %3534
    %3537 = vst.msk [vmem:[%s13 + $0x40] sm:$0xff] %vm2048, %v3535
    %v3538 = vadd.f32 %v3490, %v1901
    %v3539 = vadd.f32 %v3510, %v1901
    %3541 = vrot.lane.b32.xlu0 %v3510, 32
    %v3542 = vpop.permute.xlu0 %3541
    %v3544 = vadd.f32 %v3538, %v3542
    %v3545 = vadd.f32 %v3539, %v3542
    %v3546 = vxor.u32 %v3544, 2147483648
    %v3547 = vxor.u32 %v3545, 2147483648
    %v3548 = vmul.f32 %v3546, 1.442695
    %v3549 = vpow.pop %v3548
    %v3550 = vmul.f32 %v3547, 1.442695
    %v3551 = vpow.pop %v3550
    %v3552 = vadd.f32 %v3549, 1.0
    %v3553 = vadd.f32 %v3551, 1.0
    %v3554 = vrcp.pop %v3552
    %v3555 = vmul.f32 %v3552, %v3554
    %v3556 = vsub.f32 1.0, %v3555
    %v3557 = vmul.f32 %v3554, %v3556
    %v3558 = vadd.f32 %v3554, %v3557
    %vm3559 = vweird.f32 %v3552
    %vm3560 = vweird.f32 %v3554
    %vm3561 = vmor %vm3559, %vm3560
    %v3562 = vsel %vm3561, %v3554, %v3558
    %v3563 = vand.u32 2147483647, %v3552
    %vm3564 = vcmp.eq.f32.partialorder %v3563, 8.507059e+37
    %v3565 = vand.u32 %v3552, 2147483648
    %v3566 = vor.u32 1.1754944e-38, %v3565
    %v3567 = vsel %vm3564, %v3566, %v3562
    %v3568 = vmul.f32 1.0, %v3567
    %v3569 = vrcp.pop %v3553
    %v3570 = vmul.f32 %v3553, %v3569
    %v3571 = vsub.f32 1.0, %v3570
    %v3572 = vmul.f32 %v3569, %v3571
    %v3573 = vadd.f32 %v3569, %v3572
    %vm3574 = vweird.f32 %v3553
    %vm3575 = vweird.f32 %v3569
    %vm3576 = vmor %vm3574, %vm3575
    %v3577 = vsel %vm3576, %v3569, %v3573
    %v3578 = vand.u32 2147483647, %v3553
    %vm3579 = vcmp.eq.f32.partialorder %v3578, 8.507059e+37
    %v3580 = vand.u32 %v3553, 2147483648
    %v3581 = vor.u32 1.1754944e-38, %v3580
    %v3582 = vsel %vm3579, %v3581, %v3577
    %v3583 = vmul.f32 1.0, %v3582
    %v3584 = vadd.f32 %v3530, %v1687
    %3586 = vrot.lane.b32.xlu0 %v3584, 96
    %v3587 = vpop.permute.xlu0 %3586
    %v3589 = vmul.f32 %v3568, %v3587
    %3591 = vrot.lane.b32.xlu0 %v3589, 64
    %v3592 = vpop.permute.xlu0 %3591
    %v3594 = vadd.f32 %v3539, %v3592
    %v3595 = vtanh.pop %v3594
    %v3596 = vsub.f32 %v3463, %v3595
    %3598 = vrot.lane.b32.xlu0 %v3596, 96
    %v3599 = vpop.permute.xlu0 %3598
    %v3601 = vmul.f32 %v3583, %v3599
    %3603 = vrot.lane.b32.xlu0 %v3601, 32
    %v3604 = vpop.permute.xlu0 %3603
    %v3606 = vadd.f32 %v3595, %v3604
    %v3607 = vsel %vm274, %v3466, %v3606
    %v3609 = vsel %vm199, %v3607, 0
    %3611 = vmatpush.msra.mxu0 0.0
    %3612 = vmatpush.msra.mxu0 0.0
    %3613 = vmatpush.msra.mxu0 0.0
    %3614 = vmatpush.msra.mxu0 0.0
    %3615 = vmatpush.msra.mxu0 0.0
    %3616 = vmatpush.msra.mxu0 0.0
    %3617 = vmatpush.msra.mxu0 0.0
    %3618 = vmatpush.msra.mxu0 0.0
    %3619 = vmatpush.msra.mxu0 %v1715
    %3620 = vmatpush.msra.mxu0 %v1712
    %3621 = vmatpush.msra.mxu0 %v1709
    %3622 = vmatpush.msra.mxu0 %v1706
    %3623 = vmatpush.msra.mxu0 %v1703
    %3624 = vmatpush.msra.mxu0 %v1700
    %3625 = vmatpush.msra.mxu0 %v1697
    %3626 = vmatpush.msra.mxu0 %v1694
    %3627 = vmatmul.f32.gmra.mxu0 %v3609
    %v3628 = vpop.f32.mrf.mxu0
    %v3629 = vadd.f32 0.0, %v3628
    %3630 = vdwg.mxu0
    %v3631 = vadd.f32 %v3629, %v2041
    %3633 = vrot.lane.b32.xlu0 %v3631, 96
    %v3634 = vpop.permute.xlu0 %3633
    %3636 = vst.msk [vmem:[%s13 + $0x48] sm:$0xff] %vm2048, %v3634
    // Predicated region
    $region62: #{tpu_custom_call.1} parent=1 // pred_check
      _
    $region63: #{tpu_custom_call.1} parent=1 // pred_check_branch
      %3638 = sbr.rel (0) target = $region65
    $region64: #{tpu_custom_call.1} parent=1 // pred_region
      _
    $region65: #{tpu_custom_call.1} parent=1 // pred_fallthru
      _
    // Predicated region
    $region66: #{tpu_custom_call.1} parent=1 // pred_check
      _
    $region67: #{tpu_custom_call.1} parent=1 // pred_check_branch
      %3640 = sbr.rel (0) target = $region69
    $region68: #{tpu_custom_call.1} parent=1 // pred_region
      _
    $region69: #{tpu_custom_call.1} parent=1 // pred_fallthru
      _
    %3641 = vsyncpa [#allocation4], 1
    %3642 = vsyncpa [#allocation6], 1

</llo_original>
